<compile_context>
chip_gen: v7x
topology: tpu7x:2x2x1
jax: 0.10.0
libtpu: 0.0.40
codegen_flags: <defaults>
</compile_context>

<pallas_src>
import collections
import functools
import math

import jax
import jax.numpy as jnp
from jax.experimental import pallas as pl
from jax.experimental.pallas import tpu as pltpu


LayerMeta = collections.namedtuple(
    "LayerMeta", ["K", "pad", "cin", "cout", "cin_pad", "cout_pad", "relu"])


def _round_up(n, m):
    return ((n + m - 1) // m) * m


def _choose_bt(B, L, target_rows=256):
    """Batch elements per grid step.

    Aggregates rows so each layer's matmul M-dim approaches one MXU pass
    (256 lanes on v6e/v7x, 128 on v5e) when L is small, while keeping at
    least 2 grid steps when B >= 2 so a 'parallel' batch axis can cover both
    TensorCores on v7x.
    """
    divisors = [d for d in range(1, B + 1) if B % d == 0]
    ok = [d for d in divisors if d * L <= max(target_rows, L)] or [1]
    multi = [d for d in ok if B // d >= 2]
    return max(multi) if multi else max(ok)
    # TODO(synk): for B == 1 on v7x, split L across a leading parallel grid
    # axis (with recomputed halos) so the second TensorCore is not idle.


def _fused_cnn_kernel(*refs, metas, L, P, Bt):
    """Whole conv stack for Bt batch elements.

    refs layout: x_ref, (w0, b0, w1, b1, ...), o_ref, act_ref
      x_ref  : (Bt, L, Cin0_pad)  input block, channels-last, matmul dtype
      w_i    : (K_i, Cin_pad_i, Cout_pad_i)  per-tap, channel-padded slabs
      b_i    : (1, Cout_pad_i) f32
      o_ref  : (Bt, L, Cout_last_pad)
      act_ref: (P + Bt*(L+P), C_max) scratch in the matmul dtype.
               Batch slab b occupies rows [P + b*(L+P), P + b*(L+P) + L);
               the P-row gaps before each slab and after the last slab are a
               zero halo implementing 'same' padding (never written by any
               layer; relies on zero padded weight rows/cols + zero padded
               bias, asserted at construction time).
    """
    n = len(metas)
    x_ref = refs[0]
    w_refs = refs[1:1 + 2 * n:2]
    b_refs = refs[2:2 + 2 * n:2]
    o_ref = refs[1 + 2 * n]
    act_ref = refs[2 + 2 * n]

    C_max = act_ref.shape[1]
    stride = L + P
    offs = [P + b * stride for b in range(Bt)]      # static slab offsets
    M = Bt * L + (Bt - 1) * P                       # contiguous superset of slabs

    # --- zero only the halo blocks (cheap; safe under any core partitioning).
    halo = jnp.zeros((P, C_max), act_ref.dtype)
    for b in range(Bt):
        act_ref[offs[b] - P:offs[b], :] = halo
    act_ref[offs[-1] + L:offs[-1] + L + P, :] = halo

    # --- load the input slabs (already channel-padded & cast by the wrapper).
    cin0 = metas[0].cin_pad
    for b in range(Bt):
        act_ref[offs[b]:offs[b] + L, :cin0] = x_ref[b]

    # --- fused conv stack: K accumulate-matmuls per layer, f32 accumulator.
    # acc[j] is the conv output at scratch row P + j; rows falling in the
    # inter-slab gaps are garbage and are simply never written back.
    for i, m in enumerate(metas):
        acc = None
        for k in range(m.K):
            s = P - m.pad + k                       # static slice offset
            part = jnp.dot(act_ref[s:s + M, :m.cin_pad], w_refs[i][k],
                           preferred_element_type=jnp.float32)
            acc = part if acc is None else acc + part
        acc = acc + b_refs[i][...]                  # (1, Cout_pad) f32 broadcast
        if m.relu:
            acc = jnp.maximum(acc, 0.0)             # f32 VPU epilogue
        # TODO(synk): dropout is identity (eval/inference mode).

        if i == n - 1:
            for b in range(Bt):
                r = offs[b] - P
                o_ref[b] = acc[r:r + L].astype(o_ref.dtype)
        else:
            for b in range(Bt):
                r = offs[b] - P
                act_ref[offs[b]:offs[b] + L, :m.cout_pad] = (
                    acc[r:r + L].astype(act_ref.dtype))


def fused_cnn_forward(x, metas, weights, biases, *, matmul_dtype=jnp.bfloat16):
    """x: (B, L, Cin0) f32.  Returns (B, L, Cout_last_pad) channels-last, f32."""
    B, L, Cin0 = x.shape
    out_dtype = x.dtype
    m0 = metas[0]
    if Cin0 != m0.cin_pad:                          # one cheap pad of the input
        x = jnp.pad(x, ((0, 0), (0, 0), (0, m0.cin_pad - Cin0)))
    x = x.astype(matmul_dtype)                      # halves input DMA on bf16 path

    max_pad = max(m.pad for m in metas)
    P = _round_up(max(max_pad, 1), 16)              # sublane/bf16-packing aligned halo
    Bt = _choose_bt(B, L)
    steps = B // Bt
    stride = L + P
    rows_total = P + Bt * stride
    M = Bt * L + (Bt - 1) * P
    C_max = max(m.cin_pad for m in metas)
    cout_last_pad = metas[-1].cout_pad

    kernel = functools.partial(_fused_cnn_kernel, metas=tuple(metas),
                               L=L, P=P, Bt=Bt)

    w_casts = [w.astype(matmul_dtype) for w in weights]
    args = [x]
    for w_c, bias in zip(w_casts, biases):
        args += [w_c, bias]

    # --- cost estimate + explicit VMEM budget (v7x has only 64 MiB physical).
    flops = 0
    bytes_acc = x.size * x.dtype.itemsize
    itb = jnp.dtype(matmul_dtype).itemsize
    vmem_est = rows_total * C_max * itb                          # activation scratch
    vmem_est += 2 * Bt * L * m0.cin_pad * itb                    # dbl-buffered x block
    vmem_est += 2 * Bt * L * cout_last_pad * jnp.dtype(out_dtype).itemsize
    for m, w_c, bias in zip(metas, w_casts, biases):
        flops += 2 * B * L * m.K * m.cin_pad * m.cout_pad
        bytes_acc += w_c.size * w_c.dtype.itemsize + bias.size * bias.dtype.itemsize
        vmem_est += w_c.size * w_c.dtype.itemsize + bias.size * bias.dtype.itemsize
        vmem_est += M * m.cout_pad * 4                           # live f32 accumulator
    bytes_acc += B * L * cout_last_pad * jnp.dtype(out_dtype).itemsize
    vmem_limit = int(max(32 << 20, min(vmem_est + (16 << 20), 110 << 20)))

    def _build(single_buffer_consts):
        def const_spec(shape):
            idx = lambda g, nd=len(shape): (0,) * nd
            if single_buffer_consts:
                try:
                    # Weights/biases never change across grid steps: no point
                    # double-buffering them in VMEM.
                    return pl.BlockSpec(shape, idx, pipeline_mode=pl.Buffered(1))
                except TypeError:
                    pass
            return pl.BlockSpec(shape, idx)

        in_specs = [pl.BlockSpec((Bt, L, m0.cin_pad), lambda g: (g, 0, 0))]
        for w_c, bias in zip(w_casts, biases):
            in_specs += [const_spec(w_c.shape), const_spec(bias.shape)]

        return pl.pallas_call(
            kernel,
            out_shape=jax.ShapeDtypeStruct((B, L, cout_last_pad), out_dtype),
            grid_spec=pltpu.PrefetchScalarGridSpec(
                num_scalar_prefetch=0,
                grid=(steps,),
                in_specs=in_specs,
                out_specs=pl.BlockSpec((Bt, L, cout_last_pad),
                                       lambda g: (g, 0, 0)),
                scratch_shapes=[pltpu.VMEM((rows_total, C_max), matmul_dtype)],
            ),
            compiler_params=pltpu.CompilerParams(
                dimension_semantics=("parallel",),
                vmem_limit_bytes=vmem_limit),
            cost_estimate=pl.CostEstimate(
                flops=flops, transcendentals=0, bytes_accessed=bytes_acc),
        )

    try:
        return _build(True)(*args)
    except Exception:
        # Fallback: default (double) buffering if Buffered(1) is rejected by
        # this jax version; identical semantics, only more weight VMEM.
        return _build(False)(*args)


class ResidueTokenCNNPallas:
    """JAX/Pallas re-implementation of ResidueTokenCNN.forward (eval mode)."""

    def __init__(self, d_emb, hidden, vocab_size, kernel_sizes=(5,),
                 dropout=0.1, bio2token=False, key=None):
        assert len(kernel_sizes) == len(hidden)
        for k in kernel_sizes:
            if k % 2 != 1:
                raise ValueError(
                    f"kernel_size={k}: only odd kernel sizes give 'same' length "
                    "with padding=(K-1)//2")
        self.n_atoms_per_residue = 4 if bio2token else 1
        self.vocab_size = vocab_size
        key = jax.random.PRNGKey(0) if key is None else key

        def init_conv(k_init, cin, cout, k):
            kw, kb = jax.random.split(k_init)
            bound = 1.0 / math.sqrt(cin * k)        # torch-style uniform init
            w_t = jax.random.uniform(kw, (cout, cin, k), jnp.float32, -bound, bound)
            b = jax.random.uniform(kb, (cout,), jnp.float32, -bound, bound)
            return jnp.transpose(w_t, (2, 1, 0)), b  # (K, Cin, Cout)

        # (cin, cout, K, relu) for conv_in, hidden layers, conv_out
        cfgs = [(d_emb, hidden[0], kernel_sizes[0], True)]
        for i in range(len(hidden) - 1):
            cfgs.append((hidden[i], hidden[i + 1], kernel_sizes[i + 1], True))
        cfgs.append((hidden[-1], vocab_size * self.n_atoms_per_residue, 1, False))

        keys = jax.random.split(key, len(cfgs))
        self.layers_raw = []     # (w (K,Cin,Cout), b (Cout,), relu) — reference
        self.metas = []
        self.weights = []        # padded per-tap slabs: (K, Cin_pad, Cout_pad) f32
        self.biases = []         # padded: (1, Cout_pad) f32
        for (cin, cout, k, relu), kk in zip(cfgs, keys):
            w, b = init_conv(kk, cin, cout, k)
            self.layers_raw.append((w, b, relu))
            cin_pad = _round_up(cin, 128)
            cout_pad = _round_up(cout, 128)
            self.metas.append(LayerMeta(K=k, pad=(k - 1) // 2, cin=cin, cout=cout,
                                        cin_pad=cin_pad, cout_pad=cout_pad,
                                        relu=relu))
            # INVARIANT (kernel relies on it): padded weight rows/cols and
            # padded bias entries are exactly zero.
            w_pad = jnp.zeros((k, cin_pad, cout_pad), jnp.float32)
            w_pad = w_pad.at[:, :cin, :cout].set(w)
            self.weights.append(w_pad)
            b_pad = jnp.zeros((1, cout_pad), jnp.float32)
            b_pad = b_pad.at[0, :cout].set(b)
            self.biases.append(b_pad)

    def __call__(self, x, matmul_dtype=jnp.bfloat16):
        """x: (B, L, d_emb)  ->  (B, n_atoms_per_residue * L, vocab_size)."""
        B, L, _ = x.shape
        out_pad = fused_cnn_forward(x, self.metas, self.weights, self.biases,
                                    matmul_dtype=matmul_dtype)
        V, A = self.vocab_size, self.n_atoms_per_residue
        h = out_pad[..., :V * A]            # drop channel padding
        # Reproduce torch's view(B, V, A*L).permute(0, 2, 1):
        #   out[b, a*L + l, v] = h_cl[b, l, v*A + a]
        h = h.reshape(B, L, V, A)
        h = jnp.transpose(h, (0, 3, 1, 2))  # (B, A, L, V)
        return h.reshape(B, A * L, V)


def _reference_forward(model, x):
    """Pure-JAX reference (lax.conv on the unpadded f32 weights)."""
    h = jnp.transpose(x, (0, 2, 1))          # (B, C, L)
    for (w, b, relu) in model.layers_raw:
        K, Cin, Cout = w.shape
        w_ncw = jnp.transpose(w, (2, 1, 0))  # (Cout, Cin, K)
        pad = (K - 1) // 2
        h = jax.lax.conv_general_dilated(
            h, w_ncw, window_strides=(1,), padding=[(pad, pad)],
            dimension_numbers=("NCH", "OIH", "NCH"),
            precision=jax.lax.Precision.HIGHEST)
        h = h + b[None, :, None]
        if relu:
            h = jnp.maximum(h, 0.0)
    B, _, L = h.shape
    V, A = model.vocab_size, model.n_atoms_per_residue
    h = h.reshape(B, V, A * L)
    return jnp.transpose(h, (0, 2, 1))


if __name__ == "__main__":
    # Small shapes consistent with the module: x is (batch, seq_len, d_emb).
    B, L, D = 4, 16, 32
    hidden = [32, 32]
    kernel_sizes = [5, 3]
    vocab_size = 16

    key = jax.random.PRNGKey(0)
    k_x, k_p, k_x2, k_p2 = jax.random.split(key, 4)
    x = jax.random.normal(k_x, (B, L, D), jnp.float32)

    model = ResidueTokenCNNPallas(
        d_emb=D, hidden=hidden, vocab_size=vocab_size,
        kernel_sizes=kernel_sizes, dropout=0.1, bio2token=False, key=k_p)

    ref = jax.block_until_ready(_reference_forward(model, x))

    # Exact path: f32 MXU matmuls + f32 scratch, tight tolerance.
    out_f32 = jax.block_until_ready(model(x, matmul_dtype=jnp.float32))
    assert out_f32.shape == (B, L, vocab_size), out_f32.shape
    assert jnp.allclose(out_f32, ref, atol=1e-3, rtol=1e-3), \
        float(jnp.abs(out_f32 - ref).max())

    # Fast path: bf16 MXU inputs + bf16 scratch, f32 accumulation.
    out_bf16 = jax.block_until_ready(model(x, matmul_dtype=jnp.bfloat16))
    assert out_bf16.shape == (B, L, vocab_size), out_bf16.shape
    assert jnp.allclose(out_bf16, ref, atol=5e-2, rtol=5e-2), \
        float(jnp.abs(out_bf16 - ref).max())

    # bio2token path (4 atoms per residue): checks the channel->(atom,pos)
    # output permutation and the Bt=1 / multi-grid-step halo logic.
    model_b2t = ResidueTokenCNNPallas(
        d_emb=D, hidden=hidden, vocab_size=vocab_size,
        kernel_sizes=kernel_sizes, dropout=0.1, bio2token=True, key=k_p2)
    x2 = jax.random.normal(k_x2, (2, L, D), jnp.float32)
    ref2 = jax.block_until_ready(_reference_forward(model_b2t, x2))
    out2 = jax.block_until_ready(model_b2t(x2, matmul_dtype=jnp.float32))
    assert out2.shape == (2, 4 * L, vocab_size), out2.shape
    assert jnp.allclose(out2, ref2, atol=1e-3, rtol=1e-3), \
        float(jnp.abs(out2 - ref2).max())

    print("KERNEL_OK")
</pallas_src>

<mosaic_0001>
module attributes {stable_mosaic.version = 11 : i64} {
  func.func @_fused_cnn_kernel(%arg0: i32, %arg1: memref<2x16x128xf32, #tpu.memory_space<vmem>>, %arg2: memref<5x128x128xf32, #tpu.memory_space<vmem>>, %arg3: memref<1x128xf32, #tpu.memory_space<vmem>>, %arg4: memref<3x128x128xf32, #tpu.memory_space<vmem>>, %arg5: memref<1x128xf32, #tpu.memory_space<vmem>>, %arg6: memref<1x128x128xf32, #tpu.memory_space<vmem>>, %arg7: memref<1x128xf32, #tpu.memory_space<vmem>>, %arg8: memref<2x16x128xf32, #tpu.memory_space<vmem>>, %arg9: memref<80x128xf32, #tpu.memory_space<vmem>>) attributes {dimension_semantics = [#tpu.dimension_semantics<parallel>], iteration_bounds = array<i64: 2>, scalar_prefetch = 0 : i64, scratch_operands = 1 : i64, tpu.core_type = #tpu.core_type<tc>, window_params = [{transform_indices = @transform_0, window_bounds = array<i64: 2, 16, 128>}, {pipeline_mode = #tpu.pipeline_mode<synchronous>, transform_indices = @transform_1, window_bounds = array<i64: 5, 128, 128>}, {pipeline_mode = #tpu.pipeline_mode<synchronous>, transform_indices = @transform_2, window_bounds = array<i64: 1, 128>}, {pipeline_mode = #tpu.pipeline_mode<synchronous>, transform_indices = @transform_3, window_bounds = array<i64: 3, 128, 128>}, {pipeline_mode = #tpu.pipeline_mode<synchronous>, transform_indices = @transform_4, window_bounds = array<i64: 1, 128>}, {pipeline_mode = #tpu.pipeline_mode<synchronous>, transform_indices = @transform_5, window_bounds = array<i64: 1, 128, 128>}, {pipeline_mode = #tpu.pipeline_mode<synchronous>, transform_indices = @transform_6, window_bounds = array<i64: 1, 128>}, {transform_indices = @transform_7, window_bounds = array<i64: 2, 16, 128>}]} {
    %cst = arith.constant 0.000000e+00 : f32
    %0 = vector.broadcast %cst : f32 to vector<16x128xf32>
    %c0 = arith.constant 0 : index
    %c0_0 = arith.constant 0 : index
    %1 = vector.load %arg9[%c0, %c0_0] : memref<80x128xf32, #tpu.memory_space<vmem>>, vector<16x128xf32>
    tpu.vector_store %arg9[%c0, %c0_0], %0 {strides = array<i32>} : memref<80x128xf32, #tpu.memory_space<vmem>>, vector<16x128xf32>,
    %c32 = arith.constant 32 : index
    %c0_1 = arith.constant 0 : index
    %2 = vector.load %arg9[%c32, %c0_1] : memref<80x128xf32, #tpu.memory_space<vmem>>, vector<16x128xf32>
    tpu.vector_store %arg9[%c32, %c0_1], %0 {strides = array<i32>} : memref<80x128xf32, #tpu.memory_space<vmem>>, vector<16x128xf32>,
    %c64 = arith.constant 64 : index
    %c0_2 = arith.constant 0 : index
    %3 = vector.load %arg9[%c64, %c0_2] : memref<80x128xf32, #tpu.memory_space<vmem>>, vector<16x128xf32>
    tpu.vector_store %arg9[%c64, %c0_2], %0 {strides = array<i32>} : memref<80x128xf32, #tpu.memory_space<vmem>>, vector<16x128xf32>,
    %c0_3 = arith.constant 0 : index
    %c0_4 = arith.constant 0 : index
    %c0_5 = arith.constant 0 : index
    %4 = vector.load %arg1[%c0_3, %c0_4, %c0_5] : memref<2x16x128xf32, #tpu.memory_space<vmem>>, vector<1x16x128xf32>
    %5 = vector.shape_cast %4 : vector<1x16x128xf32> to vector<16x128xf32>
    %c16 = arith.constant 16 : index
    %c0_6 = arith.constant 0 : index
    %6 = vector.load %arg9[%c16, %c0_6] : memref<80x128xf32, #tpu.memory_space<vmem>>, vector<16x128xf32>
    tpu.vector_store %arg9[%c16, %c0_6], %5 {strides = array<i32>} : memref<80x128xf32, #tpu.memory_space<vmem>>, vector<16x128xf32>,
    %c1 = arith.constant 1 : index
    %c0_7 = arith.constant 0 : index
    %c0_8 = arith.constant 0 : index
    %7 = vector.load %arg1[%c1, %c0_7, %c0_8] : memref<2x16x128xf32, #tpu.memory_space<vmem>>, vector<1x16x128xf32>
    %8 = vector.shape_cast %7 : vector<1x16x128xf32> to vector<16x128xf32>
    %c48 = arith.constant 48 : index
    %c0_9 = arith.constant 0 : index
    %9 = vector.load %arg9[%c48, %c0_9] : memref<80x128xf32, #tpu.memory_space<vmem>>, vector<16x128xf32>
    tpu.vector_store %arg9[%c48, %c0_9], %8 {strides = array<i32>} : memref<80x128xf32, #tpu.memory_space<vmem>>, vector<16x128xf32>,
    %c14 = arith.constant 14 : index
    %c0_10 = arith.constant 0 : index
    %10 = vector.load %arg9[%c14, %c0_10] : memref<80x128xf32, #tpu.memory_space<vmem>>, vector<48x128xf32>
    %c0_11 = arith.constant 0 : index
    %c0_12 = arith.constant 0 : index
    %c0_13 = arith.constant 0 : index
    %11 = vector.load %arg2[%c0_11, %c0_12, %c0_13] : memref<5x128x128xf32, #tpu.memory_space<vmem>>, vector<1x128x128xf32>
    %12 = vector.shape_cast %11 : vector<1x128x128xf32> to vector<128x128xf32>
    %cst_14 = arith.constant dense<0.000000e+00> : vector<48x128xf32>
    %13 = tpu.matmul %10, %12, %cst_14 {dimension_numbers = #tpu.dot_dimension_numbers<[1], [0], [0], [1], [0, 0, 1, 1], [], []>} : vector<48x128xf32>, vector<128x128xf32>, vector<48x128xf32> -> vector<48x128xf32>
    %c15 = arith.constant 15 : index
    %c0_15 = arith.constant 0 : index
    %14 = vector.load %arg9[%c15, %c0_15] : memref<80x128xf32, #tpu.memory_space<vmem>>, vector<48x128xf32>
    %c1_16 = arith.constant 1 : index
    %c0_17 = arith.constant 0 : index
    %c0_18 = arith.constant 0 : index
    %15 = vector.load %arg2[%c1_16, %c0_17, %c0_18] : memref<5x128x128xf32, #tpu.memory_space<vmem>>, vector<1x128x128xf32>
    %16 = vector.shape_cast %15 : vector<1x128x128xf32> to vector<128x128xf32>
    %cst_19 = arith.constant dense<0.000000e+00> : vector<48x128xf32>
    %17 = tpu.matmul %14, %16, %cst_19 {dimension_numbers = #tpu.dot_dimension_numbers<[1], [0], [0], [1], [0, 0, 1, 1], [], []>} : vector<48x128xf32>, vector<128x128xf32>, vector<48x128xf32> -> vector<48x128xf32>
    %18 = arith.addf %13, %17 : vector<48x128xf32>
    %c16_20 = arith.constant 16 : index
    %c0_21 = arith.constant 0 : index
    %19 = vector.load %arg9[%c16_20, %c0_21] : memref<80x128xf32, #tpu.memory_space<vmem>>, vector<48x128xf32>
    %c2 = arith.constant 2 : index
    %c0_22 = arith.constant 0 : index
    %c0_23 = arith.constant 0 : index
    %20 = vector.load %arg2[%c2, %c0_22, %c0_23] : memref<5x128x128xf32, #tpu.memory_space<vmem>>, vector<1x128x128xf32>
    %21 = vector.shape_cast %20 : vector<1x128x128xf32> to vector<128x128xf32>
    %cst_24 = arith.constant dense<0.000000e+00> : vector<48x128xf32>
    %22 = tpu.matmul %19, %21, %cst_24 {dimension_numbers = #tpu.dot_dimension_numbers<[1], [0], [0], [1], [0, 0, 1, 1], [], []>} : vector<48x128xf32>, vector<128x128xf32>, vector<48x128xf32> -> vector<48x128xf32>
    %23 = arith.addf %18, %22 : vector<48x128xf32>
    %c17 = arith.constant 17 : index
    %c0_25 = arith.constant 0 : index
    %24 = vector.load %arg9[%c17, %c0_25] : memref<80x128xf32, #tpu.memory_space<vmem>>, vector<48x128xf32>
    %c3 = arith.constant 3 : index
    %c0_26 = arith.constant 0 : index
    %c0_27 = arith.constant 0 : index
    %25 = vector.load %arg2[%c3, %c0_26, %c0_27] : memref<5x128x128xf32, #tpu.memory_space<vmem>>, vector<1x128x128xf32>
    %26 = vector.shape_cast %25 : vector<1x128x128xf32> to vector<128x128xf32>
    %cst_28 = arith.constant dense<0.000000e+00> : vector<48x128xf32>
    %27 = tpu.matmul %24, %26, %cst_28 {dimension_numbers = #tpu.dot_dimension_numbers<[1], [0], [0], [1], [0, 0, 1, 1], [], []>} : vector<48x128xf32>, vector<128x128xf32>, vector<48x128xf32> -> vector<48x128xf32>
    %28 = arith.addf %23, %27 : vector<48x128xf32>
    %c18 = arith.constant 18 : index
    %c0_29 = arith.constant 0 : index
    %29 = vector.load %arg9[%c18, %c0_29] : memref<80x128xf32, #tpu.memory_space<vmem>>, vector<48x128xf32>
    %c4 = arith.constant 4 : index
    %c0_30 = arith.constant 0 : index
    %c0_31 = arith.constant 0 : index
    %30 = vector.load %arg2[%c4, %c0_30, %c0_31] : memref<5x128x128xf32, #tpu.memory_space<vmem>>, vector<1x128x128xf32>
    %31 = vector.shape_cast %30 : vector<1x128x128xf32> to vector<128x128xf32>
    %cst_32 = arith.constant dense<0.000000e+00> : vector<48x128xf32>
    %32 = tpu.matmul %29, %31, %cst_32 {dimension_numbers = #tpu.dot_dimension_numbers<[1], [0], [0], [1], [0, 0, 1, 1], [], []>} : vector<48x128xf32>, vector<128x128xf32>, vector<48x128xf32> -> vector<48x128xf32>
    %33 = arith.addf %28, %32 : vector<48x128xf32>
    %c0_33 = arith.constant 0 : index
    %c0_34 = arith.constant 0 : index
    %34 = vector.load %arg3[%c0_33, %c0_34] : memref<1x128xf32, #tpu.memory_space<vmem>>, vector<1x128xf32>
    %35 = vector.broadcast %34 : vector<1x128xf32> to vector<48x128xf32>
    %36 = arith.addf %33, %35 : vector<48x128xf32>
    %cst_35 = arith.constant 0.000000e+00 : f32
    %37 = vector.broadcast %cst_35 : f32 to vector<48x128xf32>
    %38 = arith.maximumf %36, %37 : vector<48x128xf32>
    %39 = vector.extract_strided_slice %38 {offsets = [0, 0], sizes = [16, 128], strides = [1, 1]} : vector<48x128xf32> to vector<16x128xf32>
    %c16_36 = arith.constant 16 : index
    %c0_37 = arith.constant 0 : index
    %40 = vector.load %arg9[%c16_36, %c0_37] : memref<80x128xf32, #tpu.memory_space<vmem>>, vector<16x128xf32>
    tpu.vector_store %arg9[%c16_36, %c0_37], %39 {strides = array<i32>} : memref<80x128xf32, #tpu.memory_space<vmem>>, vector<16x128xf32>,
    %41 = vector.extract_strided_slice %38 {offsets = [32, 0], sizes = [16, 128], strides = [1, 1]} : vector<48x128xf32> to vector<16x128xf32>
    %c48_38 = arith.constant 48 : index
    %c0_39 = arith.constant 0 : index
    %42 = vector.load %arg9[%c48_38, %c0_39] : memref<80x128xf32, #tpu.memory_space<vmem>>, vector<16x128xf32>
    tpu.vector_store %arg9[%c48_38, %c0_39], %41 {strides = array<i32>} : memref<80x128xf32, #tpu.memory_space<vmem>>, vector<16x128xf32>,
    %c15_40 = arith.constant 15 : index
    %c0_41 = arith.constant 0 : index
    %43 = vector.load %arg9[%c15_40, %c0_41] : memref<80x128xf32, #tpu.memory_space<vmem>>, vector<48x128xf32>
    %c0_42 = arith.constant 0 : index
    %c0_43 = arith.constant 0 : index
    %c0_44 = arith.constant 0 : index
    %44 = vector.load %arg4[%c0_42, %c0_43, %c0_44] : memref<3x128x128xf32, #tpu.memory_space<vmem>>, vector<1x128x128xf32>
    %45 = vector.shape_cast %44 : vector<1x128x128xf32> to vector<128x128xf32>
    %cst_45 = arith.constant dense<0.000000e+00> : vector<48x128xf32>
    %46 = tpu.matmul %43, %45, %cst_45 {dimension_numbers = #tpu.dot_dimension_numbers<[1], [0], [0], [1], [0, 0, 1, 1], [], []>} : vector<48x128xf32>, vector<128x128xf32>, vector<48x128xf32> -> vector<48x128xf32>
    %c16_46 = arith.constant 16 : index
    %c0_47 = arith.constant 0 : index
    %47 = vector.load %arg9[%c16_46, %c0_47] : memref<80x128xf32, #tpu.memory_space<vmem>>, vector<48x128xf32>
    %c1_48 = arith.constant 1 : index
    %c0_49 = arith.constant 0 : index
    %c0_50 = arith.constant 0 : index
    %48 = vector.load %arg4[%c1_48, %c0_49, %c0_50] : memref<3x128x128xf32, #tpu.memory_space<vmem>>, vector<1x128x128xf32>
    %49 = vector.shape_cast %48 : vector<1x128x128xf32> to vector<128x128xf32>
    %cst_51 = arith.constant dense<0.000000e+00> : vector<48x128xf32>
    %50 = tpu.matmul %47, %49, %cst_51 {dimension_numbers = #tpu.dot_dimension_numbers<[1], [0], [0], [1], [0, 0, 1, 1], [], []>} : vector<48x128xf32>, vector<128x128xf32>, vector<48x128xf32> -> vector<48x128xf32>
    %51 = arith.addf %46, %50 : vector<48x128xf32>
    %c17_52 = arith.constant 17 : index
    %c0_53 = arith.constant 0 : index
    %52 = vector.load %arg9[%c17_52, %c0_53] : memref<80x128xf32, #tpu.memory_space<vmem>>, vector<48x128xf32>
    %c2_54 = arith.constant 2 : index
    %c0_55 = arith.constant 0 : index
    %c0_56 = arith.constant 0 : index
    %53 = vector.load %arg4[%c2_54, %c0_55, %c0_56] : memref<3x128x128xf32, #tpu.memory_space<vmem>>, vector<1x128x128xf32>
    %54 = vector.shape_cast %53 : vector<1x128x128xf32> to vector<128x128xf32>
    %cst_57 = arith.constant dense<0.000000e+00> : vector<48x128xf32>
    %55 = tpu.matmul %52, %54, %cst_57 {dimension_numbers = #tpu.dot_dimension_numbers<[1], [0], [0], [1], [0, 0, 1, 1], [], []>} : vector<48x128xf32>, vector<128x128xf32>, vector<48x128xf32> -> vector<48x128xf32>
    %56 = arith.addf %51, %55 : vector<48x128xf32>
    %c0_58 = arith.constant 0 : index
    %c0_59 = arith.constant 0 : index
    %57 = vector.load %arg5[%c0_58, %c0_59] : memref<1x128xf32, #tpu.memory_space<vmem>>, vector<1x128xf32>
    %58 = vector.broadcast %57 : vector<1x128xf32> to vector<48x128xf32>
    %59 = arith.addf %56, %58 : vector<48x128xf32>
    %cst_60 = arith.constant 0.000000e+00 : f32
    %60 = vector.broadcast %cst_60 : f32 to vector<48x128xf32>
    %61 = arith.maximumf %59, %60 : vector<48x128xf32>
    %62 = vector.extract_strided_slice %61 {offsets = [0, 0], sizes = [16, 128], strides = [1, 1]} : vector<48x128xf32> to vector<16x128xf32>
    %c16_61 = arith.constant 16 : index
    %c0_62 = arith.constant 0 : index
    %63 = vector.load %arg9[%c16_61, %c0_62] : memref<80x128xf32, #tpu.memory_space<vmem>>, vector<16x128xf32>
    tpu.vector_store %arg9[%c16_61, %c0_62], %62 {strides = array<i32>} : memref<80x128xf32, #tpu.memory_space<vmem>>, vector<16x128xf32>,
    %64 = vector.extract_strided_slice %61 {offsets = [32, 0], sizes = [16, 128], strides = [1, 1]} : vector<48x128xf32> to vector<16x128xf32>
    %c48_63 = arith.constant 48 : index
    %c0_64 = arith.constant 0 : index
    %65 = vector.load %arg9[%c48_63, %c0_64] : memref<80x128xf32, #tpu.memory_space<vmem>>, vector<16x128xf32>
    tpu.vector_store %arg9[%c48_63, %c0_64], %64 {strides = array<i32>} : memref<80x128xf32, #tpu.memory_space<vmem>>, vector<16x128xf32>,
    %c16_65 = arith.constant 16 : index
    %c0_66 = arith.constant 0 : index
    %66 = vector.load %arg9[%c16_65, %c0_66] : memref<80x128xf32, #tpu.memory_space<vmem>>, vector<48x128xf32>
    %c0_67 = arith.constant 0 : index
    %c0_68 = arith.constant 0 : index
    %c0_69 = arith.constant 0 : index
    %67 = vector.load %arg6[%c0_67, %c0_68, %c0_69] : memref<1x128x128xf32, #tpu.memory_space<vmem>>, vector<1x128x128xf32>
    %68 = vector.shape_cast %67 : vector<1x128x128xf32> to vector<128x128xf32>
    %cst_70 = arith.constant dense<0.000000e+00> : vector<48x128xf32>
    %69 = tpu.matmul %66, %68, %cst_70 {dimension_numbers = #tpu.dot_dimension_numbers<[1], [0], [0], [1], [0, 0, 1, 1], [], []>} : vector<48x128xf32>, vector<128x128xf32>, vector<48x128xf32> -> vector<48x128xf32>
    %c0_71 = arith.constant 0 : index
    %c0_72 = arith.constant 0 : index
    %70 = vector.load %arg7[%c0_71, %c0_72] : memref<1x128xf32, #tpu.memory_space<vmem>>, vector<1x128xf32>
    %71 = vector.broadcast %70 : vector<1x128xf32> to vector<48x128xf32>
    %72 = arith.addf %69, %71 : vector<48x128xf32>
    %73 = vector.extract_strided_slice %72 {offsets = [0, 0], sizes = [16, 128], strides = [1, 1]} : vector<48x128xf32> to vector<16x128xf32>
    %c0_73 = arith.constant 0 : index
    %c0_74 = arith.constant 0 : index
    %c0_75 = arith.constant 0 : index
    %74 = vector.load %arg8[%c0_73, %c0_74, %c0_75] : memref<2x16x128xf32, #tpu.memory_space<vmem>>, vector<1x16x128xf32>
    %75 = vector.shape_cast %74 : vector<1x16x128xf32> to vector<16x128xf32>
    %76 = vector.shape_cast %73 : vector<16x128xf32> to vector<1x16x128xf32>
    tpu.vector_store %arg8[%c0_73, %c0_74, %c0_75], %76 {strides = array<i32>} : memref<2x16x128xf32, #tpu.memory_space<vmem>>, vector<1x16x128xf32>,
    %77 = vector.extract_strided_slice %72 {offsets = [32, 0], sizes = [16, 128], strides = [1, 1]} : vector<48x128xf32> to vector<16x128xf32>
    %c1_76 = arith.constant 1 : index
    %c0_77 = arith.constant 0 : index
    %c0_78 = arith.constant 0 : index
    %78 = vector.load %arg8[%c1_76, %c0_77, %c0_78] : memref<2x16x128xf32, #tpu.memory_space<vmem>>, vector<1x16x128xf32>
    %79 = vector.shape_cast %78 : vector<1x16x128xf32> to vector<16x128xf32>
    %80 = vector.shape_cast %77 : vector<16x128xf32> to vector<1x16x128xf32>
    tpu.vector_store %arg8[%c1_76, %c0_77, %c0_78], %80 {strides = array<i32>} : memref<2x16x128xf32, #tpu.memory_space<vmem>>, vector<1x16x128xf32>,
    return
  }
  func.func @transform_0(%arg0: i32) -> (i32, i32, i32) {
    %c0_i32 = arith.constant 0 : i32
    %c0_i32_0 = arith.constant 0 : i32
    %c0_i32_1 = arith.constant 0 : i32
    return %arg0, %c0_i32, %c0_i32_0 : i32, i32, i32
  }
  func.func @transform_1(%arg0: i32) -> (i32, i32, i32) {
    %c0_i32 = arith.constant 0 : i32
    %c0_i32_0 = arith.constant 0 : i32
    %c0_i32_1 = arith.constant 0 : i32
    %c0_i32_2 = arith.constant 0 : i32
    return %c0_i32, %c0_i32_0, %c0_i32_1 : i32, i32, i32
  }
  func.func @transform_2(%arg0: i32) -> (i32, i32) {
    %c0_i32 = arith.constant 0 : i32
    %c0_i32_0 = arith.constant 0 : i32
    %c0_i32_1 = arith.constant 0 : i32
    return %c0_i32, %c0_i32_0 : i32, i32
  }
  func.func @transform_3(%arg0: i32) -> (i32, i32, i32) {
    %c0_i32 = arith.constant 0 : i32
    %c0_i32_0 = arith.constant 0 : i32
    %c0_i32_1 = arith.constant 0 : i32
    %c0_i32_2 = arith.constant 0 : i32
    return %c0_i32, %c0_i32_0, %c0_i32_1 : i32, i32, i32
  }
  func.func @transform_4(%arg0: i32) -> (i32, i32) {
    %c0_i32 = arith.constant 0 : i32
    %c0_i32_0 = arith.constant 0 : i32
    %c0_i32_1 = arith.constant 0 : i32
    return %c0_i32, %c0_i32_0 : i32, i32
  }
  func.func @transform_5(%arg0: i32) -> (i32, i32, i32) {
    %c0_i32 = arith.constant 0 : i32
    %c0_i32_0 = arith.constant 0 : i32
    %c0_i32_1 = arith.constant 0 : i32
    %c0_i32_2 = arith.constant 0 : i32
    return %c0_i32, %c0_i32_0, %c0_i32_1 : i32, i32, i32
  }
  func.func @transform_6(%arg0: i32) -> (i32, i32) {
    %c0_i32 = arith.constant 0 : i32
    %c0_i32_0 = arith.constant 0 : i32
    %c0_i32_1 = arith.constant 0 : i32
    return %c0_i32, %c0_i32_0 : i32, i32
  }
  func.func @transform_7(%arg0: i32) -> (i32, i32, i32) {
    %c0_i32 = arith.constant 0 : i32
    %c0_i32_0 = arith.constant 0 : i32
    %c0_i32_1 = arith.constant 0 : i32
    return %arg0, %c0_i32, %c0_i32_0 : i32, i32, i32
  }
}

module attributes {stable_mosaic.version = 11 : i64} {
  func.func @_fused_cnn_kernel(%arg0: i32, %arg1: memref<2x16x128xf32, #tpu.memory_space<vmem>>, %arg2: memref<5x128x128xf32, #tpu.memory_space<vmem>>, %arg3: memref<1x128xf32, #tpu.memory_space<vmem>>, %arg4: memref<3x128x128xf32, #tpu.memory_space<vmem>>, %arg5: memref<1x128xf32, #tpu.memory_space<vmem>>, %arg6: memref<1x128x128xf32, #tpu.memory_space<vmem>>, %arg7: memref<1x128xf32, #tpu.memory_space<vmem>>, %arg8: memref<2x16x128xf32, #tpu.memory_space<vmem>>, %arg9: memref<80x128xf32, #tpu.memory_space<vmem>>) attributes {dimension_semantics = [#tpu.dimension_semantics<parallel>], iteration_bounds = array<i64: 2>, scalar_prefetch = 0 : i64, scratch_operands = 1 : i64, tpu.core_type = #tpu.core_type<tc>, window_params = [{transform_indices = @transform_0, window_bounds = array<i64: 2, 16, 128>}, {pipeline_mode = #tpu.pipeline_mode<synchronous>, transform_indices = @transform_1, window_bounds = array<i64: 5, 128, 128>}, {pipeline_mode = #tpu.pipeline_mode<synchronous>, transform_indices = @transform_2, window_bounds = array<i64: 1, 128>}, {pipeline_mode = #tpu.pipeline_mode<synchronous>, transform_indices = @transform_3, window_bounds = array<i64: 3, 128, 128>}, {pipeline_mode = #tpu.pipeline_mode<synchronous>, transform_indices = @transform_4, window_bounds = array<i64: 1, 128>}, {pipeline_mode = #tpu.pipeline_mode<synchronous>, transform_indices = @transform_5, window_bounds = array<i64: 1, 128, 128>}, {pipeline_mode = #tpu.pipeline_mode<synchronous>, transform_indices = @transform_6, window_bounds = array<i64: 1, 128>}, {transform_indices = @transform_7, window_bounds = array<i64: 2, 16, 128>}]} {
    %cst = arith.constant 0.000000e+00 : f32
    %0 = vector.broadcast %cst : f32 to vector<16x128xf32>
    %c0 = arith.constant 0 : index
    %c0_0 = arith.constant 0 : index
    %1 = vector.load %arg9[%c0, %c0_0] : memref<80x128xf32, #tpu.memory_space<vmem>>, vector<16x128xf32>
    tpu.vector_store %arg9[%c0, %c0_0], %0 {strides = array<i32>} : memref<80x128xf32, #tpu.memory_space<vmem>>, vector<16x128xf32>,
    %c32 = arith.constant 32 : index
    %c0_1 = arith.constant 0 : index
    %2 = vector.load %arg9[%c32, %c0_1] : memref<80x128xf32, #tpu.memory_space<vmem>>, vector<16x128xf32>
    tpu.vector_store %arg9[%c32, %c0_1], %0 {strides = array<i32>} : memref<80x128xf32, #tpu.memory_space<vmem>>, vector<16x128xf32>,
    %c64 = arith.constant 64 : index
    %c0_2 = arith.constant 0 : index
    %3 = vector.load %arg9[%c64, %c0_2] : memref<80x128xf32, #tpu.memory_space<vmem>>, vector<16x128xf32>
    tpu.vector_store %arg9[%c64, %c0_2], %0 {strides = array<i32>} : memref<80x128xf32, #tpu.memory_space<vmem>>, vector<16x128xf32>,
    %c0_3 = arith.constant 0 : index
    %c0_4 = arith.constant 0 : index
    %c0_5 = arith.constant 0 : index
    %4 = vector.load %arg1[%c0_3, %c0_4, %c0_5] : memref<2x16x128xf32, #tpu.memory_space<vmem>>, vector<1x16x128xf32>
    %5 = vector.shape_cast %4 : vector<1x16x128xf32> to vector<16x128xf32>
    %c16 = arith.constant 16 : index
    %c0_6 = arith.constant 0 : index
    %6 = vector.load %arg9[%c16, %c0_6] : memref<80x128xf32, #tpu.memory_space<vmem>>, vector<16x128xf32>
    tpu.vector_store %arg9[%c16, %c0_6], %5 {strides = array<i32>} : memref<80x128xf32, #tpu.memory_space<vmem>>, vector<16x128xf32>,
    %c1 = arith.constant 1 : index
    %c0_7 = arith.constant 0 : index
    %c0_8 = arith.constant 0 : index
    %7 = vector.load %arg1[%c1, %c0_7, %c0_8] : memref<2x16x128xf32, #tpu.memory_space<vmem>>, vector<1x16x128xf32>
    %8 = vector.shape_cast %7 : vector<1x16x128xf32> to vector<16x128xf32>
    %c48 = arith.constant 48 : index
    %c0_9 = arith.constant 0 : index
    %9 = vector.load %arg9[%c48, %c0_9] : memref<80x128xf32, #tpu.memory_space<vmem>>, vector<16x128xf32>
    tpu.vector_store %arg9[%c48, %c0_9], %8 {strides = array<i32>} : memref<80x128xf32, #tpu.memory_space<vmem>>, vector<16x128xf32>,
    %c14 = arith.constant 14 : index
    %c0_10 = arith.constant 0 : index
    %10 = vector.load %arg9[%c14, %c0_10] : memref<80x128xf32, #tpu.memory_space<vmem>>, vector<48x128xf32>
    %c0_11 = arith.constant 0 : index
    %c0_12 = arith.constant 0 : index
    %c0_13 = arith.constant 0 : index
    %11 = vector.load %arg2[%c0_11, %c0_12, %c0_13] : memref<5x128x128xf32, #tpu.memory_space<vmem>>, vector<1x128x128xf32>
    %12 = vector.shape_cast %11 : vector<1x128x128xf32> to vector<128x128xf32>
    %cst_14 = arith.constant dense<0.000000e+00> : vector<48x128xf32>
    %13 = tpu.matmul %10, %12, %cst_14 {dimension_numbers = #tpu.dot_dimension_numbers<[1], [0], [0], [1], [0, 0, 1, 1], [], []>} : vector<48x128xf32>, vector<128x128xf32>, vector<48x128xf32> -> vector<48x128xf32>
    %c15 = arith.constant 15 : index
    %c0_15 = arith.constant 0 : index
    %14 = vector.load %arg9[%c15, %c0_15] : memref<80x128xf32, #tpu.memory_space<vmem>>, vector<48x128xf32>
    %c1_16 = arith.constant 1 : index
    %c0_17 = arith.constant 0 : index
    %c0_18 = arith.constant 0 : index
    %15 = vector.load %arg2[%c1_16, %c0_17, %c0_18] : memref<5x128x128xf32, #tpu.memory_space<vmem>>, vector<1x128x128xf32>
    %16 = vector.shape_cast %15 : vector<1x128x128xf32> to vector<128x128xf32>
    %cst_19 = arith.constant dense<0.000000e+00> : vector<48x128xf32>
    %17 = tpu.matmul %14, %16, %cst_19 {dimension_numbers = #tpu.dot_dimension_numbers<[1], [0], [0], [1], [0, 0, 1, 1], [], []>} : vector<48x128xf32>, vector<128x128xf32>, vector<48x128xf32> -> vector<48x128xf32>
    %18 = arith.addf %13, %17 : vector<48x128xf32>
    %c16_20 = arith.constant 16 : index
    %c0_21 = arith.constant 0 : index
    %19 = vector.load %arg9[%c16_20, %c0_21] : memref<80x128xf32, #tpu.memory_space<vmem>>, vector<48x128xf32>
    %c2 = arith.constant 2 : index
    %c0_22 = arith.constant 0 : index
    %c0_23 = arith.constant 0 : index
    %20 = vector.load %arg2[%c2, %c0_22, %c0_23] : memref<5x128x128xf32, #tpu.memory_space<vmem>>, vector<1x128x128xf32>
    %21 = vector.shape_cast %20 : vector<1x128x128xf32> to vector<128x128xf32>
    %cst_24 = arith.constant dense<0.000000e+00> : vector<48x128xf32>
    %22 = tpu.matmul %19, %21, %cst_24 {dimension_numbers = #tpu.dot_dimension_numbers<[1], [0], [0], [1], [0, 0, 1, 1], [], []>} : vector<48x128xf32>, vector<128x128xf32>, vector<48x128xf32> -> vector<48x128xf32>
    %23 = arith.addf %18, %22 : vector<48x128xf32>
    %c17 = arith.constant 17 : index
    %c0_25 = arith.constant 0 : index
    %24 = vector.load %arg9[%c17, %c0_25] : memref<80x128xf32, #tpu.memory_space<vmem>>, vector<48x128xf32>
    %c3 = arith.constant 3 : index
    %c0_26 = arith.constant 0 : index
    %c0_27 = arith.constant 0 : index
    %25 = vector.load %arg2[%c3, %c0_26, %c0_27] : memref<5x128x128xf32, #tpu.memory_space<vmem>>, vector<1x128x128xf32>
    %26 = vector.shape_cast %25 : vector<1x128x128xf32> to vector<128x128xf32>
    %cst_28 = arith.constant dense<0.000000e+00> : vector<48x128xf32>
    %27 = tpu.matmul %24, %26, %cst_28 {dimension_numbers = #tpu.dot_dimension_numbers<[1], [0], [0], [1], [0, 0, 1, 1], [], []>} : vector<48x128xf32>, vector<128x128xf32>, vector<48x128xf32> -> vector<48x128xf32>
    %28 = arith.addf %23, %27 : vector<48x128xf32>
    %c18 = arith.constant 18 : index
    %c0_29 = arith.constant 0 : index
    %29 = vector.load %arg9[%c18, %c0_29] : memref<80x128xf32, #tpu.memory_space<vmem>>, vector<48x128xf32>
    %c4 = arith.constant 4 : index
    %c0_30 = arith.constant 0 : index
    %c0_31 = arith.constant 0 : index
    %30 = vector.load %arg2[%c4, %c0_30, %c0_31] : memref<5x128x128xf32, #tpu.memory_space<vmem>>, vector<1x128x128xf32>
    %31 = vector.shape_cast %30 : vector<1x128x128xf32> to vector<128x128xf32>
    %cst_32 = arith.constant dense<0.000000e+00> : vector<48x128xf32>
    %32 = tpu.matmul %29, %31, %cst_32 {dimension_numbers = #tpu.dot_dimension_numbers<[1], [0], [0], [1], [0, 0, 1, 1], [], []>} : vector<48x128xf32>, vector<128x128xf32>, vector<48x128xf32> -> vector<48x128xf32>
    %33 = arith.addf %28, %32 : vector<48x128xf32>
    %c0_33 = arith.constant 0 : index
    %c0_34 = arith.constant 0 : index
    %34 = vector.load %arg3[%c0_33, %c0_34] : memref<1x128xf32, #tpu.memory_space<vmem>>, vector<1x128xf32>
    %35 = vector.broadcast %34 : vector<1x128xf32> to vector<48x128xf32>
    %36 = arith.addf %33, %35 : vector<48x128xf32>
    %cst_35 = arith.constant 0.000000e+00 : f32
    %37 = vector.broadcast %cst_35 : f32 to vector<48x128xf32>
    %38 = arith.maximumf %36, %37 : vector<48x128xf32>
    %39 = vector.extract_strided_slice %38 {offsets = [0, 0], sizes = [16, 128], strides = [1, 1]} : vector<48x128xf32> to vector<16x128xf32>
    %c16_36 = arith.constant 16 : index
    %c0_37 = arith.constant 0 : index
    %40 = vector.load %arg9[%c16_36, %c0_37] : memref<80x128xf32, #tpu.memory_space<vmem>>, vector<16x128xf32>
    tpu.vector_store %arg9[%c16_36, %c0_37], %39 {strides = array<i32>} : memref<80x128xf32, #tpu.memory_space<vmem>>, vector<16x128xf32>,
    %41 = vector.extract_strided_slice %38 {offsets = [32, 0], sizes = [16, 128], strides = [1, 1]} : vector<48x128xf32> to vector<16x128xf32>
    %c48_38 = arith.constant 48 : index
    %c0_39 = arith.constant 0 : index
    %42 = vector.load %arg9[%c48_38, %c0_39] : memref<80x128xf32, #tpu.memory_space<vmem>>, vector<16x128xf32>
    tpu.vector_store %arg9[%c48_38, %c0_39], %41 {strides = array<i32>} : memref<80x128xf32, #tpu.memory_space<vmem>>, vector<16x128xf32>,
    %c15_40 = arith.constant 15 : index
    %c0_41 = arith.constant 0 : index
    %43 = vector.load %arg9[%c15_40, %c0_41] : memref<80x128xf32, #tpu.memory_space<vmem>>, vector<48x128xf32>
    %c0_42 = arith.constant 0 : index
    %c0_43 = arith.constant 0 : index
    %c0_44 = arith.constant 0 : index
    %44 = vector.load %arg4[%c0_42, %c0_43, %c0_44] : memref<3x128x128xf32, #tpu.memory_space<vmem>>, vector<1x128x128xf32>
    %45 = vector.shape_cast %44 : vector<1x128x128xf32> to vector<128x128xf32>
    %cst_45 = arith.constant dense<0.000000e+00> : vector<48x128xf32>
    %46 = tpu.matmul %43, %45, %cst_45 {dimension_numbers = #tpu.dot_dimension_numbers<[1], [0], [0], [1], [0, 0, 1, 1], [], []>} : vector<48x128xf32>, vector<128x128xf32>, vector<48x128xf32> -> vector<48x128xf32>
    %c16_46 = arith.constant 16 : index
    %c0_47 = arith.constant 0 : index
    %47 = vector.load %arg9[%c16_46, %c0_47] : memref<80x128xf32, #tpu.memory_space<vmem>>, vector<48x128xf32>
    %c1_48 = arith.constant 1 : index
    %c0_49 = arith.constant 0 : index
    %c0_50 = arith.constant 0 : index
    %48 = vector.load %arg4[%c1_48, %c0_49, %c0_50] : memref<3x128x128xf32, #tpu.memory_space<vmem>>, vector<1x128x128xf32>
    %49 = vector.shape_cast %48 : vector<1x128x128xf32> to vector<128x128xf32>
    %cst_51 = arith.constant dense<0.000000e+00> : vector<48x128xf32>
    %50 = tpu.matmul %47, %49, %cst_51 {dimension_numbers = #tpu.dot_dimension_numbers<[1], [0], [0], [1], [0, 0, 1, 1], [], []>} : vector<48x128xf32>, vector<128x128xf32>, vector<48x128xf32> -> vector<48x128xf32>
    %51 = arith.addf %46, %50 : vector<48x128xf32>
    %c17_52 = arith.constant 17 : index
    %c0_53 = arith.constant 0 : index
    %52 = vector.load %arg9[%c17_52, %c0_53] : memref<80x128xf32, #tpu.memory_space<vmem>>, vector<48x128xf32>
    %c2_54 = arith.constant 2 : index
    %c0_55 = arith.constant 0 : index
    %c0_56 = arith.constant 0 : index
    %53 = vector.load %arg4[%c2_54, %c0_55, %c0_56] : memref<3x128x128xf32, #tpu.memory_space<vmem>>, vector<1x128x128xf32>
    %54 = vector.shape_cast %53 : vector<1x128x128xf32> to vector<128x128xf32>
    %cst_57 = arith.constant dense<0.000000e+00> : vector<48x128xf32>
    %55 = tpu.matmul %52, %54, %cst_57 {dimension_numbers = #tpu.dot_dimension_numbers<[1], [0], [0], [1], [0, 0, 1, 1], [], []>} : vector<48x128xf32>, vector<128x128xf32>, vector<48x128xf32> -> vector<48x128xf32>
    %56 = arith.addf %51, %55 : vector<48x128xf32>
    %c0_58 = arith.constant 0 : index
    %c0_59 = arith.constant 0 : index
    %57 = vector.load %arg5[%c0_58, %c0_59] : memref<1x128xf32, #tpu.memory_space<vmem>>, vector<1x128xf32>
    %58 = vector.broadcast %57 : vector<1x128xf32> to vector<48x128xf32>
    %59 = arith.addf %56, %58 : vector<48x128xf32>
    %cst_60 = arith.constant 0.000000e+00 : f32
    %60 = vector.broadcast %cst_60 : f32 to vector<48x128xf32>
    %61 = arith.maximumf %59, %60 : vector<48x128xf32>
    %62 = vector.extract_strided_slice %61 {offsets = [0, 0], sizes = [16, 128], strides = [1, 1]} : vector<48x128xf32> to vector<16x128xf32>
    %c16_61 = arith.constant 16 : index
    %c0_62 = arith.constant 0 : index
    %63 = vector.load %arg9[%c16_61, %c0_62] : memref<80x128xf32, #tpu.memory_space<vmem>>, vector<16x128xf32>
    tpu.vector_store %arg9[%c16_61, %c0_62], %62 {strides = array<i32>} : memref<80x128xf32, #tpu.memory_space<vmem>>, vector<16x128xf32>,
    %64 = vector.extract_strided_slice %61 {offsets = [32, 0], sizes = [16, 128], strides = [1, 1]} : vector<48x128xf32> to vector<16x128xf32>
    %c48_63 = arith.constant 48 : index
    %c0_64 = arith.constant 0 : index
    %65 = vector.load %arg9[%c48_63, %c0_64] : memref<80x128xf32, #tpu.memory_space<vmem>>, vector<16x128xf32>
    tpu.vector_store %arg9[%c48_63, %c0_64], %64 {strides = array<i32>} : memref<80x128xf32, #tpu.memory_space<vmem>>, vector<16x128xf32>,
    %c16_65 = arith.constant 16 : index
    %c0_66 = arith.constant 0 : index
    %66 = vector.load %arg9[%c16_65, %c0_66] : memref<80x128xf32, #tpu.memory_space<vmem>>, vector<48x128xf32>
    %c0_67 = arith.constant 0 : index
    %c0_68 = arith.constant 0 : index
    %c0_69 = arith.constant 0 : index
    %67 = vector.load %arg6[%c0_67, %c0_68, %c0_69] : memref<1x128x128xf32, #tpu.memory_space<vmem>>, vector<1x128x128xf32>
    %68 = vector.shape_cast %67 : vector<1x128x128xf32> to vector<128x128xf32>
    %cst_70 = arith.constant dense<0.000000e+00> : vector<48x128xf32>
    %69 = tpu.matmul %66, %68, %cst_70 {dimension_numbers = #tpu.dot_dimension_numbers<[1], [0], [0], [1], [0, 0, 1, 1], [], []>} : vector<48x128xf32>, vector<128x128xf32>, vector<48x128xf32> -> vector<48x128xf32>
    %c0_71 = arith.constant 0 : index
    %c0_72 = arith.constant 0 : index
    %70 = vector.load %arg7[%c0_71, %c0_72] : memref<1x128xf32, #tpu.memory_space<vmem>>, vector<1x128xf32>
    %71 = vector.broadcast %70 : vector<1x128xf32> to vector<48x128xf32>
    %72 = arith.addf %69, %71 : vector<48x128xf32>
    %73 = vector.extract_strided_slice %72 {offsets = [0, 0], sizes = [16, 128], strides = [1, 1]} : vector<48x128xf32> to vector<16x128xf32>
    %c0_73 = arith.constant 0 : index
    %c0_74 = arith.constant 0 : index
    %c0_75 = arith.constant 0 : index
    %74 = vector.load %arg8[%c0_73, %c0_74, %c0_75] : memref<2x16x128xf32, #tpu.memory_space<vmem>>, vector<1x16x128xf32>
    %75 = vector.shape_cast %74 : vector<1x16x128xf32> to vector<16x128xf32>
    %76 = vector.shape_cast %73 : vector<16x128xf32> to vector<1x16x128xf32>
    tpu.vector_store %arg8[%c0_73, %c0_74, %c0_75], %76 {strides = array<i32>} : memref<2x16x128xf32, #tpu.memory_space<vmem>>, vector<1x16x128xf32>,
    %77 = vector.extract_strided_slice %72 {offsets = [32, 0], sizes = [16, 128], strides = [1, 1]} : vector<48x128xf32> to vector<16x128xf32>
    %c1_76 = arith.constant 1 : index
    %c0_77 = arith.constant 0 : index
    %c0_78 = arith.constant 0 : index
    %78 = vector.load %arg8[%c1_76, %c0_77, %c0_78] : memref<2x16x128xf32, #tpu.memory_space<vmem>>, vector<1x16x128xf32>
    %79 = vector.shape_cast %78 : vector<1x16x128xf32> to vector<16x128xf32>
    %80 = vector.shape_cast %77 : vector<16x128xf32> to vector<1x16x128xf32>
    tpu.vector_store %arg8[%c1_76, %c0_77, %c0_78], %80 {strides = array<i32>} : memref<2x16x128xf32, #tpu.memory_space<vmem>>, vector<1x16x128xf32>,
    return
  }
  func.func @transform_0(%arg0: i32) -> (i32, i32, i32) {
    %c0_i32 = arith.constant 0 : i32
    %c0_i32_0 = arith.constant 0 : i32
    %c0_i32_1 = arith.constant 0 : i32
    return %arg0, %c0_i32, %c0_i32_0 : i32, i32, i32
  }
  func.func @transform_1(%arg0: i32) -> (i32, i32, i32) {
    %c0_i32 = arith.constant 0 : i32
    %c0_i32_0 = arith.constant 0 : i32
    %c0_i32_1 = arith.constant 0 : i32
    %c0_i32_2 = arith.constant 0 : i32
    return %c0_i32, %c0_i32_0, %c0_i32_1 : i32, i32, i32
  }
  func.func @transform_2(%arg0: i32) -> (i32, i32) {
    %c0_i32 = arith.constant 0 : i32
    %c0_i32_0 = arith.constant 0 : i32
    %c0_i32_1 = arith.constant 0 : i32
    return %c0_i32, %c0_i32_0 : i32, i32
  }
  func.func @transform_3(%arg0: i32) -> (i32, i32, i32) {
    %c0_i32 = arith.constant 0 : i32
    %c0_i32_0 = arith.constant 0 : i32
    %c0_i32_1 = arith.constant 0 : i32
    %c0_i32_2 = arith.constant 0 : i32
    return %c0_i32, %c0_i32_0, %c0_i32_1 : i32, i32, i32
  }
  func.func @transform_4(%arg0: i32) -> (i32, i32) {
    %c0_i32 = arith.constant 0 : i32
    %c0_i32_0 = arith.constant 0 : i32
    %c0_i32_1 = arith.constant 0 : i32
    return %c0_i32, %c0_i32_0 : i32, i32
  }
  func.func @transform_5(%arg0: i32) -> (i32, i32, i32) {
    %c0_i32 = arith.constant 0 : i32
    %c0_i32_0 = arith.constant 0 : i32
    %c0_i32_1 = arith.constant 0 : i32
    %c0_i32_2 = arith.constant 0 : i32
    return %c0_i32, %c0_i32_0, %c0_i32_1 : i32, i32, i32
  }
  func.func @transform_6(%arg0: i32) -> (i32, i32) {
    %c0_i32 = arith.constant 0 : i32
    %c0_i32_0 = arith.constant 0 : i32
    %c0_i32_1 = arith.constant 0 : i32
    return %c0_i32, %c0_i32_0 : i32, i32
  }
  func.func @transform_7(%arg0: i32) -> (i32, i32, i32) {
    %c0_i32 = arith.constant 0 : i32
    %c0_i32_0 = arith.constant 0 : i32
    %c0_i32_1 = arith.constant 0 : i32
    return %arg0, %c0_i32, %c0_i32_0 : i32, i32, i32
  }
}

</mosaic_0001>

<llo_original>
// kernel: tpu_custom_call.1
$region0: #{tpu_custom_call.1}
  #allocation0 [shape = 'u32[]', space=smem, size = 0x4, offset = 0x4, fixed_abs, tag = 'smem constant byte address 0x4 - core index']
  #allocation1 [shape = 'u32[144,128]{1,0:T(1,128)}', space=vmem, size = 0x12000, scoped, tag = 'internal scratch']
  #allocation2 [shape = 'f32[80,128]{1,0:T(8,128)}', space=vmem, size = 0xa000, scoped, tag = 'scratch operand']
  %s0 = inlined_call_operand.hbm [shape: f32[4,16,128], index: 0, kind: input, shape index: {}]
  %s1 = inlined_call_operand.hbm [shape: f32[5,128,128], index: 1, kind: input, shape index: {}]
  %s2 = inlined_call_operand.vmem [shape: f32[1,128], index: 2, kind: input, shape index: {}]
  %s3 = inlined_call_operand.hbm [shape: f32[3,128,128], index: 3, kind: input, shape index: {}]
  %s4 = inlined_call_operand.vmem [shape: f32[1,128], index: 4, kind: input, shape index: {}]
  %s5 = inlined_call_operand.hbm [shape: f32[1,128,128], index: 5, kind: input, shape index: {}]
  %s6 = inlined_call_operand.vmem [shape: f32[1,128], index: 6, kind: input, shape index: {}]
  %s7 = inlined_call_operand.hbm [shape: f32[4,16,128], index: 7, kind: output, shape index: {}]
  %s8 = sld [smem:[#allocation0]]
  $region77: #{tpu_custom_call.1} parent=0
    _
  %s10 = ssub.s32 1, %s8
  %s11 = scalar_select 0, %s10, %s8
  $region1: #{tpu_custom_call.1} parent=0
    #allocation3 [shape = 'u8[32768]{0}', space=vmem, size = 0x8000, scoped, tag = 'input window, operand 0']
    #allocation4 [shape = 's32[2]{0}', space=sflag, size = 0x8, scoped, tag = 'scoped memory for tpu_custom_call.1']
    #allocation5 [shape = 's32[2]{0}', space=sflag, size = 0x8, scoped, tag = 'scoped memory for tpu_custom_call.1']
    #allocation6 [shape = 'u8[327680]{0}', space=vmem, size = 0x50000, scoped, tag = 'input window, operand 1, single buffered']
    #allocation7 [shape = 's32[1]{0}', space=sflag, size = 0x4, scoped, tag = 'scoped memory for tpu_custom_call.1']
    #allocation8 [shape = 'u8[196608]{0}', space=vmem, size = 0x30000, scoped, tag = 'input window, operand 3, single buffered']
    #allocation9 [shape = 'u8[65536]{0}', space=vmem, size = 0x10000, scoped, tag = 'input window, operand 5, single buffered']
    #allocation10 [shape = 's32[1]{0}', space=sflag, size = 0x4, scoped, tag = 'scoped memory for tpu_custom_call.1']
    #allocation11 [shape = 'u8[32768]{0}', space=vmem, size = 0x8000, scoped, tag = 'output window, operand 0']
    %12 = vsyncpa [#allocation4], 0
    %s13 = scalar_lea.sflag [#allocation4], 1
    %14 = vsyncpa %s13, 0
    %15 = vsyncpa [#allocation7], 0
    %16 = vsyncpa [#allocation10], 0
    %17 = vsyncpa [#allocation5], 0
    %s18 = scalar_lea.sflag [#allocation5], 1
    %19 = vsyncpa %s18, 0
    loop: start=0, step=1, limit=4
    $region2: #{tpu_custom_call.1} parent=1 // loop_pre_header
      _
    $region3: #{tpu_custom_call.1} parent=1 // loop_header
      %s21 = sphi 0, %s25
      %p22 = scmp.ge.s32.totalorder %s21, 4
      %s31 = sphi 0, %s33
      %s34 = sphi 0, %s31
      %s35 = sphi 0, %s34
      %s51 = sphi 0, %s35
      %s55 = sphi 0, %s55
      %s57 = sphi 0, %s55
      %s58 = sphi 0, %s57
      %s72 = sphi 0, %s58
      %s76 = sphi 0, %s76
      %s78 = sphi 0, %s76
      %s79 = sphi 0, %s78
      %s93 = sphi 0, %s79
      %s97 = sphi 0, %s97
      %s99 = sphi 0, %s97
      %s100 = sphi 0, %s99
      %s114 = sphi 0, %s100
      %s118 = sphi 0, %s118
      %s120 = sphi 0, %s118
      %s121 = sphi 0, %s120
      %s135 = sphi 0, %s121
      %s139 = sphi 0, %s139
      %s141 = sphi 0, %s139
      %s142 = sphi 0, %s141
      %s156 = sphi 0, %s142
      %s160 = sphi 0, %s160
      %s162 = sphi 0, %s160
      %s163 = sphi 0, %s162
      %s177 = sphi 0, %s163
      %s183 = sphi 0, %s185
      %s186 = sphi 0, %s183
      %s187 = sphi 0, %s186
      %s203 = sphi 0, %s187
    $region4: #{tpu_custom_call.1} parent=1 // loop_header_branch
      %24 = sbr.rel (%p22) target = $region8
    $region5: #{tpu_custom_call.1} parent=1 // loop_body
      %s26 = ssub.s32 %s21, 1
      %s27 = ssub.s32 %s21, 2
      %s28 = sadd.s32 %s21, 1
      %s29 = ssub.s32 %s21, %s28
      %p30 = scmp.eq.s32.totalorder %s29, 0
      %s32 = sadd.s32 %s31, 1
      %s33 = scalar_select %p30, %s31, %s32
      %p36 = pneg %p30
      %p37 = scmp.eq.s32.totalorder %s21, 1
      %p38 = por %p36, %p37
      %p39 = scmp.ne.s32.totalorder %s31, %s34
      %p40 = scmp.eq.s32.totalorder %s21, 0
      %p41 = por %p39, %p40
      %p42 = scmp.ne.s32.totalorder %s31, %s34
      %p43 = scmp.eq.s32.totalorder %s26, 1
      %p44 = por %p42, %p43
      %p45 = scmp.ne.s32.totalorder %s34, %s35
      %p46 = scmp.eq.s32.totalorder %s26, 0
      %p47 = por %p45, %p46
      %p48 = scmp.ne.s32.totalorder %s34, %s35
      %p49 = scmp.eq.s32.totalorder %s27, 1
      %p50 = por %p48, %p49
      %p52 = scmp.ne.s32.totalorder %s35, %s51
      %p53 = scmp.eq.s32.totalorder %s27, 0
      %p54 = por %p52, %p53
      %s56 = sadd.s32 %s55, 1
      %p59 = scmp.eq.s32.totalorder %s21, 1
      %p60 = scmp.ne.s32.totalorder %s55, %s57
      %p61 = scmp.eq.s32.totalorder %s21, 0
      %p62 = por %p60, %p61
      %p63 = scmp.ne.s32.totalorder %s55, %s57
      %p64 = scmp.eq.s32.totalorder %s26, 1
      %p65 = por %p63, %p64
      %p66 = scmp.ne.s32.totalorder %s57, %s58
      %p67 = scmp.eq.s32.totalorder %s26, 0
      %p68 = por %p66, %p67
      %p69 = scmp.ne.s32.totalorder %s57, %s58
      %p70 = scmp.eq.s32.totalorder %s27, 1
      %p71 = por %p69, %p70
      %p73 = scmp.ne.s32.totalorder %s58, %s72
      %p74 = scmp.eq.s32.totalorder %s27, 0
      %p75 = por %p73, %p74
      %s77 = sadd.s32 %s76, 1
      %p80 = scmp.eq.s32.totalorder %s21, 1
      %p81 = scmp.ne.s32.totalorder %s76, %s78
      %p82 = scmp.eq.s32.totalorder %s21, 0
      %p83 = por %p81, %p82
      %p84 = scmp.ne.s32.totalorder %s76, %s78
      %p85 = scmp.eq.s32.totalorder %s26, 1
      %p86 = por %p84, %p85
      %p87 = scmp.ne.s32.totalorder %s78, %s79
      %p88 = scmp.eq.s32.totalorder %s26, 0
      %p89 = por %p87, %p88
      %p90 = scmp.ne.s32.totalorder %s78, %s79
      %p91 = scmp.eq.s32.totalorder %s27, 1
      %p92 = por %p90, %p91
      %p94 = scmp.ne.s32.totalorder %s79, %s93
      %p95 = scmp.eq.s32.totalorder %s27, 0
      %p96 = por %p94, %p95
      %s98 = sadd.s32 %s97, 1
      %p101 = scmp.eq.s32.totalorder %s21, 1
      %p102 = scmp.ne.s32.totalorder %s97, %s99
      %p103 = scmp.eq.s32.totalorder %s21, 0
      %p104 = por %p102, %p103
      %p105 = scmp.ne.s32.totalorder %s97, %s99
      %p106 = scmp.eq.s32.totalorder %s26, 1
      %p107 = por %p105, %p106
      %p108 = scmp.ne.s32.totalorder %s99, %s100
      %p109 = scmp.eq.s32.totalorder %s26, 0
      %p110 = por %p108, %p109
      %p111 = scmp.ne.s32.totalorder %s99, %s100
      %p112 = scmp.eq.s32.totalorder %s27, 1
      %p113 = por %p111, %p112
      %p115 = scmp.ne.s32.totalorder %s100, %s114
      %p116 = scmp.eq.s32.totalorder %s27, 0
      %p117 = por %p115, %p116
      %s119 = sadd.s32 %s118, 1
      %p122 = scmp.eq.s32.totalorder %s21, 1
      %p123 = scmp.ne.s32.totalorder %s118, %s120
      %p124 = scmp.eq.s32.totalorder %s21, 0
      %p125 = por %p123, %p124
      %p126 = scmp.ne.s32.totalorder %s118, %s120
      %p127 = scmp.eq.s32.totalorder %s26, 1
      %p128 = por %p126, %p127
      %p129 = scmp.ne.s32.totalorder %s120, %s121
      %p130 = scmp.eq.s32.totalorder %s26, 0
      %p131 = por %p129, %p130
      %p132 = scmp.ne.s32.totalorder %s120, %s121
      %p133 = scmp.eq.s32.totalorder %s27, 1
      %p134 = por %p132, %p133
      %p136 = scmp.ne.s32.totalorder %s121, %s135
      %p137 = scmp.eq.s32.totalorder %s27, 0
      %p138 = por %p136, %p137
      %s140 = sadd.s32 %s139, 1
      %p143 = scmp.eq.s32.totalorder %s21, 1
      %p144 = scmp.ne.s32.totalorder %s139, %s141
      %p145 = scmp.eq.s32.totalorder %s21, 0
      %p146 = por %p144, %p145
      %p147 = scmp.ne.s32.totalorder %s139, %s141
      %p148 = scmp.eq.s32.totalorder %s26, 1
      %p149 = por %p147, %p148
      %p150 = scmp.ne.s32.totalorder %s141, %s142
      %p151 = scmp.eq.s32.totalorder %s26, 0
      %p152 = por %p150, %p151
      %p153 = scmp.ne.s32.totalorder %s141, %s142
      %p154 = scmp.eq.s32.totalorder %s27, 1
      %p155 = por %p153, %p154
      %p157 = scmp.ne.s32.totalorder %s142, %s156
      %p158 = scmp.eq.s32.totalorder %s27, 0
      %p159 = por %p157, %p158
      %s161 = sadd.s32 %s160, 1
      %p164 = scmp.eq.s32.totalorder %s21, 1
      %p165 = scmp.ne.s32.totalorder %s160, %s162
      %p166 = scmp.eq.s32.totalorder %s21, 0
      %p167 = por %p165, %p166
      %p168 = scmp.ne.s32.totalorder %s160, %s162
      %p169 = scmp.eq.s32.totalorder %s26, 1
      %p170 = por %p168, %p169
      %p171 = scmp.ne.s32.totalorder %s162, %s163
      %p172 = scmp.eq.s32.totalorder %s26, 0
      %p173 = por %p171, %p172
      %p174 = scmp.ne.s32.totalorder %s162, %s163
      %p175 = scmp.eq.s32.totalorder %s27, 1
      %p176 = por %p174, %p175
      %p178 = scmp.ne.s32.totalorder %s163, %s177
      %p179 = scmp.eq.s32.totalorder %s27, 0
      %p180 = por %p178, %p179
      %s181 = ssub.s32 %s21, %s28
      %p182 = scmp.eq.s32.totalorder %s181, 0
      %s184 = sadd.s32 %s183, 1
      %s185 = scalar_select %p182, %s183, %s184
      %p188 = pneg %p182
      %p189 = scmp.eq.s32.totalorder %s21, 1
      %p190 = por %p188, %p189
      %p191 = scmp.ne.s32.totalorder %s183, %s186
      %p192 = scmp.eq.s32.totalorder %s21, 0
      %p193 = por %p191, %p192
      %p194 = scmp.ne.s32.totalorder %s183, %s186
      %p195 = scmp.eq.s32.totalorder %s26, 1
      %p196 = por %p194, %p195
      %p197 = scmp.ne.s32.totalorder %s186, %s187
      %p198 = scmp.eq.s32.totalorder %s26, 0
      %p199 = por %p197, %p198
      %p200 = scmp.ne.s32.totalorder %s186, %s187
      %p201 = scmp.eq.s32.totalorder %s27, 1
      %p202 = por %p200, %p201
      %p204 = scmp.ne.s32.totalorder %s187, %s203
      %p205 = scmp.eq.s32.totalorder %s27, 0
      %p206 = por %p204, %p205
      %p207 = scmp.le.s32.totalorder 1, %s21
      %p208 = scmp.lt.s32.totalorder %s21, 3
      %p209 = pnand %p207, %p208
      %p210 = pneg %p209
      // Predicated region
      $region9: #{tpu_custom_call.1} parent=5 // pred_check
        _
      $region10: #{tpu_custom_call.1} parent=5 // pred_check_branch
        %212 = sbr.rel (%p209) target = $region12
      $region11: #{tpu_custom_call.1} parent=5 // pred_region
        %s213 = ssub.s32 %s21, 1
        // Predicated region
        $region13: #{tpu_custom_call.1} parent=11 // pred_check
          %p214 = pneg %p68
        $region14: #{tpu_custom_call.1} parent=11 // pred_check_branch
          %216 = sbr.rel (%p214) target = $region16
        $region15: #{tpu_custom_call.1} parent=11 // pred_region
          %s218 = ssub.s32 10240, 10240
          %219 = vsyncadd [#allocation7], %s218
          %s220 = sshll.u32 [#allocation6], 4
          %s221 = int_to_ptr.vmem [resolvable:$true] %s220
          %226 = dma.hbm_to_vmem [thread:$0]  %s1, 10240, %s221, [#allocation7], 128, 128, 8
        $region16: #{tpu_custom_call.1} parent=11 // pred_fallthru
          _
        // Predicated region
        $region17: #{tpu_custom_call.1} parent=11 // pred_check
          %p227 = pneg %p89
        $region18: #{tpu_custom_call.1} parent=11 // pred_check_branch
          %229 = sbr.rel (%p227) target = $region20
        $region19: #{tpu_custom_call.1} parent=11 // pred_region
          _
        $region20: #{tpu_custom_call.1} parent=11 // pred_fallthru
          _
        // Predicated region
        $region21: #{tpu_custom_call.1} parent=11 // pred_check
          %p230 = pneg %p110
        $region22: #{tpu_custom_call.1} parent=11 // pred_check_branch
          %232 = sbr.rel (%p230) target = $region24
        $region23: #{tpu_custom_call.1} parent=11 // pred_region
          %s234 = ssub.s32 6144, 6144
          %235 = vsyncadd [#allocation7], %s234
          %s236 = sshll.u32 [#allocation8], 4
          %s237 = int_to_ptr.vmem [resolvable:$true] %s236
          %242 = dma.hbm_to_vmem [thread:$0]  %s3, 6144, %s237, [#allocation7], 128, 128, 8
        $region24: #{tpu_custom_call.1} parent=11 // pred_fallthru
          _
        // Predicated region
        $region25: #{tpu_custom_call.1} parent=11 // pred_check
          %p243 = pneg %p131
        $region26: #{tpu_custom_call.1} parent=11 // pred_check_branch
          %245 = sbr.rel (%p243) target = $region28
        $region27: #{tpu_custom_call.1} parent=11 // pred_region
          _
        $region28: #{tpu_custom_call.1} parent=11 // pred_fallthru
          _
        // Predicated region
        $region29: #{tpu_custom_call.1} parent=11 // pred_check
          %p246 = pneg %p152
        $region30: #{tpu_custom_call.1} parent=11 // pred_check_branch
          %248 = sbr.rel (%p246) target = $region32
        $region31: #{tpu_custom_call.1} parent=11 // pred_region
          %s250 = ssub.s32 2048, 2048
          %251 = vsyncadd [#allocation10], %s250
          %s252 = sshll.u32 [#allocation9], 4
          %s253 = int_to_ptr.vmem [resolvable:$true] %s252
          %258 = dma.hbm_to_vmem [thread:$0]  %s5, 2048, %s253, [#allocation10], 128, 128, 8
        $region32: #{tpu_custom_call.1} parent=11 // pred_fallthru
          _
        // Predicated region
        $region33: #{tpu_custom_call.1} parent=11 // pred_check
          %p259 = pneg %p173
        $region34: #{tpu_custom_call.1} parent=11 // pred_check_branch
          %261 = sbr.rel (%p259) target = $region36
        $region35: #{tpu_custom_call.1} parent=11 // pred_region
          _
        $region36: #{tpu_custom_call.1} parent=11 // pred_fallthru
          _
      $region12: #{tpu_custom_call.1} parent=5 // pred_fallthru
        _
      %p262 = scmp.lt.s32.totalorder %s21, 2
      // Predicated region
      $region37: #{tpu_custom_call.1} parent=5 // pred_check
        %p263 = pneg %p262
      $region38: #{tpu_custom_call.1} parent=5 // pred_check_branch
        %265 = sbr.rel (%p263) target = $region40
      $region39: #{tpu_custom_call.1} parent=5 // pred_region
        // Predicated region
        $region41: #{tpu_custom_call.1} parent=39 // pred_check
          %p266 = pneg %p41
        $region42: #{tpu_custom_call.1} parent=39 // pred_check_branch
          %268 = sbr.rel (%p266) target = $region44
        $region43: #{tpu_custom_call.1} parent=39 // pred_region
          %s269 = sand.u32 %s31, 1
          %s270 = scalar_lea.sflag [#allocation4], %s269
          %s271 = sand.u32 %s31, 1
          %s272 = smul.addr %s271, 32
          %s273 = scalar_lea.vmem [#allocation3], %s272
          %s274 = smul.u32 2, %s21
          %s276 = ssub.s32 512, 512
          %277 = vsyncadd %s270, %s276
          %s278 = smul.addr %s274, 2
          %s279 = smul.addr %s278, 128
          %s280 = scalar_lea.hbm %s0, %s279
          %s281 = sshll.u32 %s273, 4
          %s282 = int_to_ptr.vmem [resolvable:$true] %s281
          %287 = dma.hbm_to_vmem [thread:$0]  %s280, 512, %s282, %s270, 128, 128, 8
        $region44: #{tpu_custom_call.1} parent=39 // pred_fallthru
          _
      $region40: #{tpu_custom_call.1} parent=5 // pred_fallthru
        _
      %p288 = scmp.le.s32.totalorder 1, %s21
      %p289 = scmp.lt.s32.totalorder %s21, 3
      %p290 = pnand %p288, %p289
      %p291 = pneg %p290
      // Predicated region
      $region45: #{tpu_custom_call.1} parent=5 // pred_check
        _
      $region46: #{tpu_custom_call.1} parent=5 // pred_check_branch
        %293 = sbr.rel (%p290) target = $region48
      $region47: #{tpu_custom_call.1} parent=5 // pred_region
        %s294 = ssub.s32 %s21, 1
        %s295 = sand.u32 %s34, 1
        %s296 = scalar_lea.sflag [#allocation4], %s295
        %s297 = sand.u32 %s34, 1
        %s298 = smul.addr %s297, 32
        %s299 = scalar_lea.vmem [#allocation3], %s298
        // Predicated region
        $region49: #{tpu_custom_call.1} parent=47 // pred_check
          %p300 = pneg %p47
        $region50: #{tpu_custom_call.1} parent=47 // pred_check_branch
          %302 = sbr.rel (%p300) target = $region52
        $region51: #{tpu_custom_call.1} parent=47 // pred_region
          %303 = dma.done %s296, 512
        $region52: #{tpu_custom_call.1} parent=47 // pred_fallthru
          _
        // Predicated region
        $region53: #{tpu_custom_call.1} parent=47 // pred_check
          %p304 = pneg %p68
        $region54: #{tpu_custom_call.1} parent=47 // pred_check_branch
          %306 = sbr.rel (%p304) target = $region56
        $region55: #{tpu_custom_call.1} parent=47 // pred_region
          %307 = dma.done [#allocation7], 10240
        $region56: #{tpu_custom_call.1} parent=47 // pred_fallthru
          _
        // Predicated region
        $region57: #{tpu_custom_call.1} parent=47 // pred_check
          %p308 = pneg %p110
        $region58: #{tpu_custom_call.1} parent=47 // pred_check_branch
          %310 = sbr.rel (%p308) target = $region60
        $region59: #{tpu_custom_call.1} parent=47 // pred_region
          %311 = dma.done [#allocation7], 6144
        $region60: #{tpu_custom_call.1} parent=47 // pred_fallthru
          _
        // Predicated region
        $region61: #{tpu_custom_call.1} parent=47 // pred_check
          %p312 = pneg %p152
        $region62: #{tpu_custom_call.1} parent=47 // pred_check_branch
          %314 = sbr.rel (%p312) target = $region64
        $region63: #{tpu_custom_call.1} parent=47 // pred_region
          %315 = dma.done [#allocation10], 2048
        $region64: #{tpu_custom_call.1} parent=47 // pred_fallthru
          _
        %s316 = sand.u32 %s34, 1
        %s317 = scalar_lea.sflag [#allocation4], %s316
        %s318 = sand.u32 %s34, 1
        %s319 = smul.addr %s318, 32
        %s320 = scalar_lea.vmem [#allocation3], %s319
        %p321 = pneg %p47
        %p322 = pneg %p44
        %p323 = pneg %p68
        %p324 = pneg %p65
        %p325 = pneg %p89
        %p326 = pneg %p86
        %p327 = pneg %p110
        %p328 = pneg %p107
        %p329 = pneg %p131
        %p330 = pneg %p128
        %p331 = pneg %p152
        %p332 = pneg %p149
        %p333 = pneg %p173
        %p334 = pneg %p170
        %p335 = pneg %p199
        %p336 = pneg %p196
        %s337 = sand.u32 %s186, 1
        %s338 = scalar_lea.sflag [#allocation5], %s337
        %s339 = sand.u32 %s186, 1
        %s340 = smul.addr %s339, 32
        %s341 = scalar_lea.vmem [#allocation11], %s340
        %s342 = smul.u32 2, %s26
        %s343 = smul.u32 2, %s26
        %344 = vst [vmem:[#allocation2] sm:$0xff] 0.0
        %345 = vst [vmem:[#allocation2 + $0x8] sm:$0xff] 0.0
        %346 = vst [vmem:[#allocation2 + $0x20] sm:$0xff] 0.0
        %347 = vst [vmem:[#allocation2 + $0x28] sm:$0xff] 0.0
        %348 = vst [vmem:[#allocation2 + $0x40] sm:$0xff] 0.0
        %349 = vst [vmem:[#allocation2 + $0x48] sm:$0xff] 0.0
        %v350 = vld [vmem:[%s299] sm:$0xff]
        %v351 = vld [vmem:[%s299 + $0x8] sm:$0xff]
        %352 = vst [vmem:[#allocation2 + $0x10] sm:$0xff] %v350
        %353 = vst [vmem:[#allocation2 + $0x18] sm:$0xff] %v351
        %s354 = scalar_lea.vmem %s299, 16 [#allocation3]
        %v355 = vld [vmem:[%s354] sm:$0xff]
        %v356 = vld [vmem:[%s354 + $0x8] sm:$0xff]
        %357 = vst [vmem:[#allocation2 + $0x30] sm:$0xff] %v355
        %358 = vst [vmem:[#allocation2 + $0x38] sm:$0xff] %v356
        %v359 = vld [vmem:[#allocation2 + $0xe] sm:$0xff]
        %v360 = vld [vmem:[#allocation2 + $0x16] sm:$0xff]
        %v361 = vld [vmem:[#allocation2 + $0x1e] sm:$0xff]
        %v362 = vld [vmem:[#allocation2 + $0x26] sm:$0xff]
        %v363 = vld [vmem:[#allocation2 + $0x2e] sm:$0xff]
        %v364 = vld [vmem:[#allocation2 + $0x36] sm:$0xff]
        %v365 = vld [vmem:[#allocation6] sm:$0xff]
        %v366 = vld [vmem:[#allocation6 + $0x8] sm:$0xff]
        %v367 = vld [vmem:[#allocation6 + $0x10] sm:$0xff]
        %v368 = vld [vmem:[#allocation6 + $0x18] sm:$0xff]
        %v369 = vld [vmem:[#allocation6 + $0x20] sm:$0xff]
        %v370 = vld [vmem:[#allocation6 + $0x28] sm:$0xff]
        %v371 = vld [vmem:[#allocation6 + $0x30] sm:$0xff]
        %v372 = vld [vmem:[#allocation6 + $0x38] sm:$0xff]
        %v373 = vld [vmem:[#allocation6 + $0x40] sm:$0xff]
        %v374 = vld [vmem:[#allocation6 + $0x48] sm:$0xff]
        %v375 = vld [vmem:[#allocation6 + $0x50] sm:$0xff]
        %v376 = vld [vmem:[#allocation6 + $0x58] sm:$0xff]
        %v377 = vld [vmem:[#allocation6 + $0x60] sm:$0xff]
        %v378 = vld [vmem:[#allocation6 + $0x68] sm:$0xff]
        %v379 = vld [vmem:[#allocation6 + $0x70] sm:$0xff]
        %v380 = vld [vmem:[#allocation6 + $0x78] sm:$0xff]
        %v381 = vld [vmem:[#allocation2 + $0xf] sm:$0xff]
        %v382 = vld [vmem:[#allocation2 + $0x17] sm:$0xff]
        %v383 = vld [vmem:[#allocation2 + $0x1f] sm:$0xff]
        %v384 = vld [vmem:[#allocation2 + $0x27] sm:$0xff]
        %v385 = vld [vmem:[#allocation2 + $0x2f] sm:$0xff]
        %v386 = vld [vmem:[#allocation2 + $0x37] sm:$0xff]
        %s387 = scalar_lea.vmem [#allocation6], 128
        %v388 = vld [vmem:[%s387] sm:$0xff]
        %v389 = vld [vmem:[%s387 + $0x8] sm:$0xff]
        %v390 = vld [vmem:[%s387 + $0x10] sm:$0xff]
        %v391 = vld [vmem:[%s387 + $0x18] sm:$0xff]
        %v392 = vld [vmem:[%s387 + $0x20] sm:$0xff]
        %v393 = vld [vmem:[%s387 + $0x28] sm:$0xff]
        %v394 = vld [vmem:[%s387 + $0x30] sm:$0xff]
        %v395 = vld [vmem:[%s387 + $0x38] sm:$0xff]
        %v396 = vld [vmem:[%s387 + $0x40] sm:$0xff]
        %v397 = vld [vmem:[%s387 + $0x48] sm:$0xff]
        %v398 = vld [vmem:[%s387 + $0x50] sm:$0xff]
        %v399 = vld [vmem:[%s387 + $0x58] sm:$0xff]
        %v400 = vld [vmem:[%s387 + $0x60] sm:$0xff]
        %v401 = vld [vmem:[%s387 + $0x68] sm:$0xff]
        %v402 = vld [vmem:[%s387 + $0x70] sm:$0xff]
        %v403 = vld [vmem:[%s387 + $0x78] sm:$0xff]
        %404 = vmatprep.subr.mxu0 0.0
        %405 = vmatpush1.msra.mxu0 %v388
        %406 = vmatprep.subr.mxu0 0.0
        %407 = vmatpush1.msra.mxu0 %v389
        %408 = vmatprep.subr.mxu0 0.0
        %409 = vmatpush1.msra.mxu0 %v390
        %410 = vmatprep.subr.mxu0 0.0
        %411 = vmatpush1.msra.mxu0 %v391
        %412 = vmatprep.subr.mxu0 0.0
        %413 = vmatpush1.msra.mxu0 %v392
        %414 = vmatprep.subr.mxu0 0.0
        %415 = vmatpush1.msra.mxu0 %v393
        %416 = vmatprep.subr.mxu0 0.0
        %417 = vmatpush1.msra.mxu0 %v394
        %418 = vmatprep.subr.mxu0 0.0
        %419 = vmatpush1.msra.mxu0 %v395
        %420 = vmatprep.subr.mxu0 0.0
        %421 = vmatpush1.msra.mxu0 %v396
        %422 = vmatprep.subr.mxu0 0.0
        %423 = vmatpush1.msra.mxu0 %v397
        %424 = vmatprep.subr.mxu0 0.0
        %425 = vmatpush1.msra.mxu0 %v398
        %426 = vmatprep.subr.mxu0 0.0
        %427 = vmatpush1.msra.mxu0 %v399
        %428 = vmatprep.subr.mxu0 0.0
        %429 = vmatpush1.msra.mxu0 %v400
        %430 = vmatprep.subr.mxu0 0.0
        %431 = vmatpush1.msra.mxu0 %v401
        %432 = vmatprep.subr.mxu0 0.0
        %433 = vmatpush1.msra.mxu0 %v402
        %434 = vmatprep.subr.mxu0 0.0
        %435 = vmatpush1.msra.mxu0 %v403
        %436 = vmatprep.subr.mxu0 0.0
        %437 = vmatpush1.msra.mxu0 0.0
        %438 = vmatprep.subr.mxu0 0.0
        %439 = vmatpush1.msra.mxu0 0.0
        %440 = vmatprep.subr.mxu0 0.0
        %441 = vmatpush1.msra.mxu0 0.0
        %442 = vmatprep.subr.mxu0 0.0
        %443 = vmatpush1.msra.mxu0 0.0
        %444 = vmatprep.subr.mxu0 0.0
        %445 = vmatpush1.msra.mxu0 0.0
        %446 = vmatprep.subr.mxu0 0.0
        %447 = vmatpush1.msra.mxu0 0.0
        %448 = vmatprep.subr.mxu0 0.0
        %449 = vmatpush1.msra.mxu0 0.0
        %450 = vmatprep.subr.mxu0 0.0
        %451 = vmatpush1.msra.mxu0 0.0
        %452 = vmatprep.subr.mxu0 0.0
        %453 = vmatpush1.msra.mxu0 0.0
        %454 = vmatprep.subr.mxu0 0.0
        %455 = vmatpush1.msra.mxu0 0.0
        %456 = vmatprep.subr.mxu0 0.0
        %457 = vmatpush1.msra.mxu0 0.0
        %458 = vmatprep.subr.mxu0 0.0
        %459 = vmatpush1.msra.mxu0 0.0
        %460 = vmatprep.subr.mxu0 0.0
        %461 = vmatpush1.msra.mxu0 0.0
        %462 = vmatprep.subr.mxu0 0.0
        %463 = vmatpush1.msra.mxu0 0.0
        %464 = vmatprep.subr.mxu0 0.0
        %465 = vmatpush1.msra.mxu0 0.0
        %466 = vmatprep.subr.mxu0 0.0
        %467 = vmatpush1.msra.mxu0 0.0
        %468 = vmatprep.mubr.f32.mxu0 0.0
        %469 = vmatmul.mubr.f32.gmra.mrb[0].mxu0 %v381
        %v470 = vpop.f32.mrb[0].mxu0
        %v471 = vadd.f32 0.0, %v470
        %v472 = vpop.f32.mrb[0].mxu0
        %473 = vmatprep.mubr.f32.mxu0 0.0
        %474 = vmatmul.mubr.f32.gmra.mrb[0].mxu0 %v382
        %v475 = vpop.f32.mrb[0].mxu0
        %v476 = vadd.f32 0.0, %v475
        %v477 = vpop.f32.mrb[0].mxu0
        %478 = vmatprep.mubr.f32.mxu0 0.0
        %479 = vmatmul.mubr.f32.gmra.mrb[0].mxu0 %v383
        %v480 = vpop.f32.mrb[0].mxu0
        %v481 = vpop.f32.mrb[0].mxu0
        %482 = vmatprep.mubr.f32.mxu0 0.0
        %483 = vmatmul.mubr.f32.gmra.mrb[0].mxu0 %v384
        %v484 = vpop.f32.mrb[0].mxu0
        %v485 = vpop.f32.mrb[0].mxu0
        %486 = vmatprep.mubr.f32.mxu0 0.0
        %487 = vmatmul.mubr.f32.gmra.mrb[0].mxu0 %v385
        %v488 = vpop.f32.mrb[0].mxu0
        %v489 = vadd.f32 0.0, %v488
        %v490 = vpop.f32.mrb[0].mxu0
        %491 = vmatprep.mubr.f32.mxu0 0.0
        %492 = vmatmul.mubr.f32.gmra.mrb[0].mxu0 %v386
        %v493 = vpop.f32.mrb[0].mxu0
        %v494 = vadd.f32 0.0, %v493
        %v495 = vpop.f32.mrb[0].mxu0
        %496 = vdwg.mxu0
        %497 = vmatprep.subr.mxu0 0.0
        %498 = vmatpush1.msra.mxu0 %v365
        %499 = vmatprep.subr.mxu0 0.0
        %500 = vmatpush1.msra.mxu0 %v366
        %501 = vmatprep.subr.mxu0 0.0
        %502 = vmatpush1.msra.mxu0 %v367
        %503 = vmatprep.subr.mxu0 0.0
        %504 = vmatpush1.msra.mxu0 %v368
        %505 = vmatprep.subr.mxu0 0.0
        %506 = vmatpush1.msra.mxu0 %v369
        %507 = vmatprep.subr.mxu0 0.0
        %508 = vmatpush1.msra.mxu0 %v370
        %509 = vmatprep.subr.mxu0 0.0
        %510 = vmatpush1.msra.mxu0 %v371
        %511 = vmatprep.subr.mxu0 0.0
        %512 = vmatpush1.msra.mxu0 %v372
        %513 = vmatprep.subr.mxu0 0.0
        %514 = vmatpush1.msra.mxu0 %v373
        %515 = vmatprep.subr.mxu0 0.0
        %516 = vmatpush1.msra.mxu0 %v374
        %517 = vmatprep.subr.mxu0 0.0
        %518 = vmatpush1.msra.mxu0 %v375
        %519 = vmatprep.subr.mxu0 0.0
        %520 = vmatpush1.msra.mxu0 %v376
        %521 = vmatprep.subr.mxu0 0.0
        %522 = vmatpush1.msra.mxu0 %v377
        %523 = vmatprep.subr.mxu0 0.0
        %524 = vmatpush1.msra.mxu0 %v378
        %525 = vmatprep.subr.mxu0 0.0
        %526 = vmatpush1.msra.mxu0 %v379
        %527 = vmatprep.subr.mxu0 0.0
        %528 = vmatpush1.msra.mxu0 %v380
        %529 = vmatprep.subr.mxu0 0.0
        %530 = vmatpush1.msra.mxu0 0.0
        %531 = vmatprep.subr.mxu0 0.0
        %532 = vmatpush1.msra.mxu0 0.0
        %533 = vmatprep.subr.mxu0 0.0
        %534 = vmatpush1.msra.mxu0 0.0
        %535 = vmatprep.subr.mxu0 0.0
        %536 = vmatpush1.msra.mxu0 0.0
        %537 = vmatprep.subr.mxu0 0.0
        %538 = vmatpush1.msra.mxu0 0.0
        %539 = vmatprep.subr.mxu0 0.0
        %540 = vmatpush1.msra.mxu0 0.0
        %541 = vmatprep.subr.mxu0 0.0
        %542 = vmatpush1.msra.mxu0 0.0
        %543 = vmatprep.subr.mxu0 0.0
        %544 = vmatpush1.msra.mxu0 0.0
        %545 = vmatprep.subr.mxu0 0.0
        %546 = vmatpush1.msra.mxu0 0.0
        %547 = vmatprep.subr.mxu0 0.0
        %548 = vmatpush1.msra.mxu0 0.0
        %549 = vmatprep.subr.mxu0 0.0
        %550 = vmatpush1.msra.mxu0 0.0
        %551 = vmatprep.subr.mxu0 0.0
        %552 = vmatpush1.msra.mxu0 0.0
        %553 = vmatprep.subr.mxu0 0.0
        %554 = vmatpush1.msra.mxu0 0.0
        %555 = vmatprep.subr.mxu0 0.0
        %556 = vmatpush1.msra.mxu0 0.0
        %557 = vmatprep.subr.mxu0 0.0
        %558 = vmatpush1.msra.mxu0 0.0
        %559 = vmatprep.subr.mxu0 0.0
        %560 = vmatpush1.msra.mxu0 0.0
        %561 = vmatprep.mubr.f32.mxu0 0.0
        %562 = vmatmul.mubr.f32.gmra.mrb[0].mxu0 %v359
        %v563 = vpop.f32.mrb[0].mxu0
        %v564 = vadd.f32 %v471, %v563
        %v565 = vpop.f32.mrb[0].mxu0
        %566 = vmatprep.mubr.f32.mxu0 0.0
        %567 = vmatmul.mubr.f32.gmra.mrb[0].mxu0 %v360
        %v568 = vpop.f32.mrb[0].mxu0
        %v569 = vadd.f32 %v476, %v568
        %v570 = vpop.f32.mrb[0].mxu0
        %571 = vmatprep.mubr.f32.mxu0 0.0
        %572 = vmatmul.mubr.f32.gmra.mrb[0].mxu0 %v361
        %v573 = vpop.f32.mrb[0].mxu0
        %v574 = vpop.f32.mrb[0].mxu0
        %575 = vmatprep.mubr.f32.mxu0 0.0
        %576 = vmatmul.mubr.f32.gmra.mrb[0].mxu0 %v362
        %v577 = vpop.f32.mrb[0].mxu0
        %v578 = vpop.f32.mrb[0].mxu0
        %579 = vmatprep.mubr.f32.mxu0 0.0
        %580 = vmatmul.mubr.f32.gmra.mrb[0].mxu0 %v363
        %v581 = vpop.f32.mrb[0].mxu0
        %v582 = vadd.f32 %v489, %v581
        %v583 = vpop.f32.mrb[0].mxu0
        %584 = vmatprep.mubr.f32.mxu0 0.0
        %585 = vmatmul.mubr.f32.gmra.mrb[0].mxu0 %v364
        %v586 = vpop.f32.mrb[0].mxu0
        %v587 = vadd.f32 %v494, %v586
        %v588 = vpop.f32.mrb[0].mxu0
        %589 = vdwg.mxu0
        %v590 = vld [vmem:[#allocation2 + $0x10] sm:$0xff]
        %v591 = vld [vmem:[#allocation2 + $0x18] sm:$0xff]
        %v592 = vld [vmem:[#allocation2 + $0x20] sm:$0xff]
        %v593 = vld [vmem:[#allocation2 + $0x28] sm:$0xff]
        %v594 = vld [vmem:[#allocation2 + $0x30] sm:$0xff]
        %v595 = vld [vmem:[#allocation2 + $0x38] sm:$0xff]
        %s596 = scalar_lea.vmem [#allocation6], 256
        %v597 = vld [vmem:[%s596] sm:$0xff]
        %v598 = vld [vmem:[%s596 + $0x8] sm:$0xff]
        %v599 = vld [vmem:[%s596 + $0x10] sm:$0xff]
        %v600 = vld [vmem:[%s596 + $0x18] sm:$0xff]
        %v601 = vld [vmem:[%s596 + $0x20] sm:$0xff]
        %v602 = vld [vmem:[%s596 + $0x28] sm:$0xff]
        %v603 = vld [vmem:[%s596 + $0x30] sm:$0xff]
        %v604 = vld [vmem:[%s596 + $0x38] sm:$0xff]
        %v605 = vld [vmem:[%s596 + $0x40] sm:$0xff]
        %v606 = vld [vmem:[%s596 + $0x48] sm:$0xff]
        %v607 = vld [vmem:[%s596 + $0x50] sm:$0xff]
        %v608 = vld [vmem:[%s596 + $0x58] sm:$0xff]
        %v609 = vld [vmem:[%s596 + $0x60] sm:$0xff]
        %v610 = vld [vmem:[%s596 + $0x68] sm:$0xff]
        %v611 = vld [vmem:[%s596 + $0x70] sm:$0xff]
        %v612 = vld [vmem:[%s596 + $0x78] sm:$0xff]
        %613 = vmatprep.subr.mxu0 0.0
        %614 = vmatpush1.msra.mxu0 %v597
        %615 = vmatprep.subr.mxu0 0.0
        %616 = vmatpush1.msra.mxu0 %v598
        %617 = vmatprep.subr.mxu0 0.0
        %618 = vmatpush1.msra.mxu0 %v599
        %619 = vmatprep.subr.mxu0 0.0
        %620 = vmatpush1.msra.mxu0 %v600
        %621 = vmatprep.subr.mxu0 0.0
        %622 = vmatpush1.msra.mxu0 %v601
        %623 = vmatprep.subr.mxu0 0.0
        %624 = vmatpush1.msra.mxu0 %v602
        %625 = vmatprep.subr.mxu0 0.0
        %626 = vmatpush1.msra.mxu0 %v603
        %627 = vmatprep.subr.mxu0 0.0
        %628 = vmatpush1.msra.mxu0 %v604
        %629 = vmatprep.subr.mxu0 0.0
        %630 = vmatpush1.msra.mxu0 %v605
        %631 = vmatprep.subr.mxu0 0.0
        %632 = vmatpush1.msra.mxu0 %v606
        %633 = vmatprep.subr.mxu0 0.0
        %634 = vmatpush1.msra.mxu0 %v607
        %635 = vmatprep.subr.mxu0 0.0
        %636 = vmatpush1.msra.mxu0 %v608
        %637 = vmatprep.subr.mxu0 0.0
        %638 = vmatpush1.msra.mxu0 %v609
        %639 = vmatprep.subr.mxu0 0.0
        %640 = vmatpush1.msra.mxu0 %v610
        %641 = vmatprep.subr.mxu0 0.0
        %642 = vmatpush1.msra.mxu0 %v611
        %643 = vmatprep.subr.mxu0 0.0
        %644 = vmatpush1.msra.mxu0 %v612
        %645 = vmatprep.subr.mxu0 0.0
        %646 = vmatpush1.msra.mxu0 0.0
        %647 = vmatprep.subr.mxu0 0.0
        %648 = vmatpush1.msra.mxu0 0.0
        %649 = vmatprep.subr.mxu0 0.0
        %650 = vmatpush1.msra.mxu0 0.0
        %651 = vmatprep.subr.mxu0 0.0
        %652 = vmatpush1.msra.mxu0 0.0
        %653 = vmatprep.subr.mxu0 0.0
        %654 = vmatpush1.msra.mxu0 0.0
        %655 = vmatprep.subr.mxu0 0.0
        %656 = vmatpush1.msra.mxu0 0.0
        %657 = vmatprep.subr.mxu0 0.0
        %658 = vmatpush1.msra.mxu0 0.0
        %659 = vmatprep.subr.mxu0 0.0
        %660 = vmatpush1.msra.mxu0 0.0
        %661 = vmatprep.subr.mxu0 0.0
        %662 = vmatpush1.msra.mxu0 0.0
        %663 = vmatprep.subr.mxu0 0.0
        %664 = vmatpush1.msra.mxu0 0.0
        %665 = vmatprep.subr.mxu0 0.0
        %666 = vmatpush1.msra.mxu0 0.0
        %667 = vmatprep.subr.mxu0 0.0
        %668 = vmatpush1.msra.mxu0 0.0
        %669 = vmatprep.subr.mxu0 0.0
        %670 = vmatpush1.msra.mxu0 0.0
        %671 = vmatprep.subr.mxu0 0.0
        %672 = vmatpush1.msra.mxu0 0.0
        %673 = vmatprep.subr.mxu0 0.0
        %674 = vmatpush1.msra.mxu0 0.0
        %675 = vmatprep.subr.mxu0 0.0
        %676 = vmatpush1.msra.mxu0 0.0
        %677 = vmatprep.mubr.f32.mxu0 0.0
        %678 = vmatmul.mubr.f32.gmra.mrb[0].mxu0 %v590
        %v679 = vpop.f32.mrb[0].mxu0
        %v680 = vadd.f32 0.0, %v679
        %v681 = vpop.f32.mrb[0].mxu0
        %682 = vmatprep.mubr.f32.mxu0 0.0
        %683 = vmatmul.mubr.f32.gmra.mrb[0].mxu0 %v591
        %v684 = vpop.f32.mrb[0].mxu0
        %v685 = vadd.f32 0.0, %v684
        %v686 = vpop.f32.mrb[0].mxu0
        %687 = vmatprep.mubr.f32.mxu0 0.0
        %688 = vmatmul.mubr.f32.gmra.mrb[0].mxu0 %v592
        %v689 = vpop.f32.mrb[0].mxu0
        %v690 = vpop.f32.mrb[0].mxu0
        %691 = vmatprep.mubr.f32.mxu0 0.0
        %692 = vmatmul.mubr.f32.gmra.mrb[0].mxu0 %v593
        %v693 = vpop.f32.mrb[0].mxu0
        %v694 = vpop.f32.mrb[0].mxu0
        %695 = vmatprep.mubr.f32.mxu0 0.0
        %696 = vmatmul.mubr.f32.gmra.mrb[0].mxu0 %v594
        %v697 = vpop.f32.mrb[0].mxu0
        %v698 = vadd.f32 0.0, %v697
        %v699 = vpop.f32.mrb[0].mxu0
        %700 = vmatprep.mubr.f32.mxu0 0.0
        %701 = vmatmul.mubr.f32.gmra.mrb[0].mxu0 %v595
        %v702 = vpop.f32.mrb[0].mxu0
        %v703 = vadd.f32 0.0, %v702
        %v704 = vpop.f32.mrb[0].mxu0
        %705 = vdwg.mxu0
        %v706 = vadd.f32 %v564, %v680
        %v707 = vadd.f32 %v569, %v685
        %v708 = vadd.f32 %v582, %v698
        %v709 = vadd.f32 %v587, %v703
        %v710 = vld [vmem:[#allocation2 + $0x11] sm:$0xff]
        %v711 = vld [vmem:[#allocation2 + $0x19] sm:$0xff]
        %v712 = vld [vmem:[#allocation2 + $0x21] sm:$0xff]
        %v713 = vld [vmem:[#allocation2 + $0x29] sm:$0xff]
        %v714 = vld [vmem:[#allocation2 + $0x31] sm:$0xff]
        %v715 = vld [vmem:[#allocation2 + $0x39] sm:$0xff]
        %s716 = scalar_lea.vmem [#allocation6], 384
        %v717 = vld [vmem:[%s716] sm:$0xff]
        %v718 = vld [vmem:[%s716 + $0x8] sm:$0xff]
        %v719 = vld [vmem:[%s716 + $0x10] sm:$0xff]
        %v720 = vld [vmem:[%s716 + $0x18] sm:$0xff]
        %v721 = vld [vmem:[%s716 + $0x20] sm:$0xff]
        %v722 = vld [vmem:[%s716 + $0x28] sm:$0xff]
        %v723 = vld [vmem:[%s716 + $0x30] sm:$0xff]
        %v724 = vld [vmem:[%s716 + $0x38] sm:$0xff]
        %v725 = vld [vmem:[%s716 + $0x40] sm:$0xff]
        %v726 = vld [vmem:[%s716 + $0x48] sm:$0xff]
        %v727 = vld [vmem:[%s716 + $0x50] sm:$0xff]
        %v728 = vld [vmem:[%s716 + $0x58] sm:$0xff]
        %v729 = vld [vmem:[%s716 + $0x60] sm:$0xff]
        %v730 = vld [vmem:[%s716 + $0x68] sm:$0xff]
        %v731 = vld [vmem:[%s716 + $0x70] sm:$0xff]
        %v732 = vld [vmem:[%s716 + $0x78] sm:$0xff]
        %733 = vmatprep.subr.mxu0 0.0
        %734 = vmatpush1.msra.mxu0 %v717
        %735 = vmatprep.subr.mxu0 0.0
        %736 = vmatpush1.msra.mxu0 %v718
        %737 = vmatprep.subr.mxu0 0.0
        %738 = vmatpush1.msra.mxu0 %v719
        %739 = vmatprep.subr.mxu0 0.0
        %740 = vmatpush1.msra.mxu0 %v720
        %741 = vmatprep.subr.mxu0 0.0
        %742 = vmatpush1.msra.mxu0 %v721
        %743 = vmatprep.subr.mxu0 0.0
        %744 = vmatpush1.msra.mxu0 %v722
        %745 = vmatprep.subr.mxu0 0.0
        %746 = vmatpush1.msra.mxu0 %v723
        %747 = vmatprep.subr.mxu0 0.0
        %748 = vmatpush1.msra.mxu0 %v724
        %749 = vmatprep.subr.mxu0 0.0
        %750 = vmatpush1.msra.mxu0 %v725
        %751 = vmatprep.subr.mxu0 0.0
        %752 = vmatpush1.msra.mxu0 %v726
        %753 = vmatprep.subr.mxu0 0.0
        %754 = vmatpush1.msra.mxu0 %v727
        %755 = vmatprep.subr.mxu0 0.0
        %756 = vmatpush1.msra.mxu0 %v728
        %757 = vmatprep.subr.mxu0 0.0
        %758 = vmatpush1.msra.mxu0 %v729
        %759 = vmatprep.subr.mxu0 0.0
        %760 = vmatpush1.msra.mxu0 %v730
        %761 = vmatprep.subr.mxu0 0.0
        %762 = vmatpush1.msra.mxu0 %v731
        %763 = vmatprep.subr.mxu0 0.0
        %764 = vmatpush1.msra.mxu0 %v732
        %765 = vmatprep.subr.mxu0 0.0
        %766 = vmatpush1.msra.mxu0 0.0
        %767 = vmatprep.subr.mxu0 0.0
        %768 = vmatpush1.msra.mxu0 0.0
        %769 = vmatprep.subr.mxu0 0.0
        %770 = vmatpush1.msra.mxu0 0.0
        %771 = vmatprep.subr.mxu0 0.0
        %772 = vmatpush1.msra.mxu0 0.0
        %773 = vmatprep.subr.mxu0 0.0
        %774 = vmatpush1.msra.mxu0 0.0
        %775 = vmatprep.subr.mxu0 0.0
        %776 = vmatpush1.msra.mxu0 0.0
        %777 = vmatprep.subr.mxu0 0.0
        %778 = vmatpush1.msra.mxu0 0.0
        %779 = vmatprep.subr.mxu0 0.0
        %780 = vmatpush1.msra.mxu0 0.0
        %781 = vmatprep.subr.mxu0 0.0
        %782 = vmatpush1.msra.mxu0 0.0
        %783 = vmatprep.subr.mxu0 0.0
        %784 = vmatpush1.msra.mxu0 0.0
        %785 = vmatprep.subr.mxu0 0.0
        %786 = vmatpush1.msra.mxu0 0.0
        %787 = vmatprep.subr.mxu0 0.0
        %788 = vmatpush1.msra.mxu0 0.0
        %789 = vmatprep.subr.mxu0 0.0
        %790 = vmatpush1.msra.mxu0 0.0
        %791 = vmatprep.subr.mxu0 0.0
        %792 = vmatpush1.msra.mxu0 0.0
        %793 = vmatprep.subr.mxu0 0.0
        %794 = vmatpush1.msra.mxu0 0.0
        %795 = vmatprep.subr.mxu0 0.0
        %796 = vmatpush1.msra.mxu0 0.0
        %797 = vmatprep.mubr.f32.mxu0 0.0
        %798 = vmatmul.mubr.f32.gmra.mrb[0].mxu0 %v710
        %v799 = vpop.f32.mrb[0].mxu0
        %v800 = vadd.f32 0.0, %v799
        %v801 = vpop.f32.mrb[0].mxu0
        %802 = vmatprep.mubr.f32.mxu0 0.0
        %803 = vmatmul.mubr.f32.gmra.mrb[0].mxu0 %v711
        %v804 = vpop.f32.mrb[0].mxu0
        %v805 = vadd.f32 0.0, %v804
        %v806 = vpop.f32.mrb[0].mxu0
        %807 = vmatprep.mubr.f32.mxu0 0.0
        %808 = vmatmul.mubr.f32.gmra.mrb[0].mxu0 %v712
        %v809 = vpop.f32.mrb[0].mxu0
        %v810 = vpop.f32.mrb[0].mxu0
        %811 = vmatprep.mubr.f32.mxu0 0.0
        %812 = vmatmul.mubr.f32.gmra.mrb[0].mxu0 %v713
        %v813 = vpop.f32.mrb[0].mxu0
        %v814 = vpop.f32.mrb[0].mxu0
        %815 = vmatprep.mubr.f32.mxu0 0.0
        %816 = vmatmul.mubr.f32.gmra.mrb[0].mxu0 %v714
        %v817 = vpop.f32.mrb[0].mxu0
        %v818 = vadd.f32 0.0, %v817
        %v819 = vpop.f32.mrb[0].mxu0
        %820 = vmatprep.mubr.f32.mxu0 0.0
        %821 = vmatmul.mubr.f32.gmra.mrb[0].mxu0 %v715
        %v822 = vpop.f32.mrb[0].mxu0
        %v823 = vadd.f32 0.0, %v822
        %v824 = vpop.f32.mrb[0].mxu0
        %825 = vdwg.mxu0
        %v826 = vadd.f32 %v706, %v800
        %v827 = vadd.f32 %v707, %v805
        %v828 = vadd.f32 %v708, %v818
        %v829 = vadd.f32 %v709, %v823
        %v830 = vld [vmem:[#allocation2 + $0x12] sm:$0xff]
        %v831 = vld [vmem:[#allocation2 + $0x1a] sm:$0xff]
        %v832 = vld [vmem:[#allocation2 + $0x22] sm:$0xff]
        %v833 = vld [vmem:[#allocation2 + $0x2a] sm:$0xff]
        %v834 = vld [vmem:[#allocation2 + $0x32] sm:$0xff]
        %v835 = vld [vmem:[#allocation2 + $0x3a] sm:$0xff]
        %s836 = scalar_lea.vmem [#allocation6], 512
        %v837 = vld [vmem:[%s836] sm:$0xff]
        %v838 = vld [vmem:[%s836 + $0x8] sm:$0xff]
        %v839 = vld [vmem:[%s836 + $0x10] sm:$0xff]
        %v840 = vld [vmem:[%s836 + $0x18] sm:$0xff]
        %v841 = vld [vmem:[%s836 + $0x20] sm:$0xff]
        %v842 = vld [vmem:[%s836 + $0x28] sm:$0xff]
        %v843 = vld [vmem:[%s836 + $0x30] sm:$0xff]
        %v844 = vld [vmem:[%s836 + $0x38] sm:$0xff]
        %v845 = vld [vmem:[%s836 + $0x40] sm:$0xff]
        %v846 = vld [vmem:[%s836 + $0x48] sm:$0xff]
        %v847 = vld [vmem:[%s836 + $0x50] sm:$0xff]
        %v848 = vld [vmem:[%s836 + $0x58] sm:$0xff]
        %v849 = vld [vmem:[%s836 + $0x60] sm:$0xff]
        %v850 = vld [vmem:[%s836 + $0x68] sm:$0xff]
        %v851 = vld [vmem:[%s836 + $0x70] sm:$0xff]
        %v852 = vld [vmem:[%s836 + $0x78] sm:$0xff]
        %853 = vmatprep.subr.mxu0 0.0
        %854 = vmatpush1.msra.mxu0 %v837
        %855 = vmatprep.subr.mxu0 0.0
        %856 = vmatpush1.msra.mxu0 %v838
        %857 = vmatprep.subr.mxu0 0.0
        %858 = vmatpush1.msra.mxu0 %v839
        %859 = vmatprep.subr.mxu0 0.0
        %860 = vmatpush1.msra.mxu0 %v840
        %861 = vmatprep.subr.mxu0 0.0
        %862 = vmatpush1.msra.mxu0 %v841
        %863 = vmatprep.subr.mxu0 0.0
        %864 = vmatpush1.msra.mxu0 %v842
        %865 = vmatprep.subr.mxu0 0.0
        %866 = vmatpush1.msra.mxu0 %v843
        %867 = vmatprep.subr.mxu0 0.0
        %868 = vmatpush1.msra.mxu0 %v844
        %869 = vmatprep.subr.mxu0 0.0
        %870 = vmatpush1.msra.mxu0 %v845
        %871 = vmatprep.subr.mxu0 0.0
        %872 = vmatpush1.msra.mxu0 %v846
        %873 = vmatprep.subr.mxu0 0.0
        %874 = vmatpush1.msra.mxu0 %v847
        %875 = vmatprep.subr.mxu0 0.0
        %876 = vmatpush1.msra.mxu0 %v848
        %877 = vmatprep.subr.mxu0 0.0
        %878 = vmatpush1.msra.mxu0 %v849
        %879 = vmatprep.subr.mxu0 0.0
        %880 = vmatpush1.msra.mxu0 %v850
        %881 = vmatprep.subr.mxu0 0.0
        %882 = vmatpush1.msra.mxu0 %v851
        %883 = vmatprep.subr.mxu0 0.0
        %884 = vmatpush1.msra.mxu0 %v852
        %885 = vmatprep.subr.mxu0 0.0
        %886 = vmatpush1.msra.mxu0 0.0
        %887 = vmatprep.subr.mxu0 0.0
        %888 = vmatpush1.msra.mxu0 0.0
        %889 = vmatprep.subr.mxu0 0.0
        %890 = vmatpush1.msra.mxu0 0.0
        %891 = vmatprep.subr.mxu0 0.0
        %892 = vmatpush1.msra.mxu0 0.0
        %893 = vmatprep.subr.mxu0 0.0
        %894 = vmatpush1.msra.mxu0 0.0
        %895 = vmatprep.subr.mxu0 0.0
        %896 = vmatpush1.msra.mxu0 0.0
        %897 = vmatprep.subr.mxu0 0.0
        %898 = vmatpush1.msra.mxu0 0.0
        %899 = vmatprep.subr.mxu0 0.0
        %900 = vmatpush1.msra.mxu0 0.0
        %901 = vmatprep.subr.mxu0 0.0
        %902 = vmatpush1.msra.mxu0 0.0
        %903 = vmatprep.subr.mxu0 0.0
        %904 = vmatpush1.msra.mxu0 0.0
        %905 = vmatprep.subr.mxu0 0.0
        %906 = vmatpush1.msra.mxu0 0.0
        %907 = vmatprep.subr.mxu0 0.0
        %908 = vmatpush1.msra.mxu0 0.0
        %909 = vmatprep.subr.mxu0 0.0
        %910 = vmatpush1.msra.mxu0 0.0
        %911 = vmatprep.subr.mxu0 0.0
        %912 = vmatpush1.msra.mxu0 0.0
        %913 = vmatprep.subr.mxu0 0.0
        %914 = vmatpush1.msra.mxu0 0.0
        %915 = vmatprep.subr.mxu0 0.0
        %916 = vmatpush1.msra.mxu0 0.0
        %917 = vmatprep.mubr.f32.mxu0 0.0
        %918 = vmatmul.mubr.f32.gmra.mrb[0].mxu0 %v830
        %v919 = vpop.f32.mrb[0].mxu0
        %v920 = vadd.f32 0.0, %v919
        %v921 = vpop.f32.mrb[0].mxu0
        %922 = vmatprep.mubr.f32.mxu0 0.0
        %923 = vmatmul.mubr.f32.gmra.mrb[0].mxu0 %v831
        %v924 = vpop.f32.mrb[0].mxu0
        %v925 = vadd.f32 0.0, %v924
        %v926 = vpop.f32.mrb[0].mxu0
        %927 = vmatprep.mubr.f32.mxu0 0.0
        %928 = vmatmul.mubr.f32.gmra.mrb[0].mxu0 %v832
        %v929 = vpop.f32.mrb[0].mxu0
        %v930 = vpop.f32.mrb[0].mxu0
        %931 = vmatprep.mubr.f32.mxu0 0.0
        %932 = vmatmul.mubr.f32.gmra.mrb[0].mxu0 %v833
        %v933 = vpop.f32.mrb[0].mxu0
        %v934 = vpop.f32.mrb[0].mxu0
        %935 = vmatprep.mubr.f32.mxu0 0.0
        %936 = vmatmul.mubr.f32.gmra.mrb[0].mxu0 %v834
        %v937 = vpop.f32.mrb[0].mxu0
        %v938 = vadd.f32 0.0, %v937
        %v939 = vpop.f32.mrb[0].mxu0
        %940 = vmatprep.mubr.f32.mxu0 0.0
        %941 = vmatmul.mubr.f32.gmra.mrb[0].mxu0 %v835
        %v942 = vpop.f32.mrb[0].mxu0
        %v943 = vadd.f32 0.0, %v942
        %v944 = vpop.f32.mrb[0].mxu0
        %945 = vdwg.mxu0
        %v946 = vadd.f32 %v826, %v920
        %v947 = vadd.f32 %v827, %v925
        %v948 = vadd.f32 %v828, %v938
        %v949 = vadd.f32 %v829, %v943
        %v950 = vld [vmem:[%s2] sm:$0x1]
        %v952 = vlaneseq
        %v953 = vshrl.u32 %v952, 7
        %v954 = vsub.s32 0, %v953
        %v955 = vrot.slane %v950, %v954
        %v957 = vadd.f32 %v946, %v955
        %v958 = vadd.f32 %v947, %v955
        %v959 = vadd.f32 %v948, %v955
        %v960 = vadd.f32 %v949, %v955
        %v961 = vmax.f32 %v957, 0.0
        %v962 = vmax.f32 %v958, 0.0
        %v963 = vmax.f32 %v959, 0.0
        %v964 = vmax.f32 %v960, 0.0
        %965 = vst [vmem:[#allocation2 + $0x10] sm:$0xff] %v961
        %966 = vst [vmem:[#allocation2 + $0x18] sm:$0xff] %v962
        %967 = vst [vmem:[#allocation2 + $0x30] sm:$0xff] %v963
        %968 = vst [vmem:[#allocation2 + $0x38] sm:$0xff] %v964
        %v969 = vld [vmem:[#allocation2 + $0xf] sm:$0xff]
        %v970 = vld [vmem:[#allocation2 + $0x17] sm:$0xff]
        %v971 = vld [vmem:[#allocation2 + $0x1f] sm:$0xff]
        %v972 = vld [vmem:[#allocation2 + $0x27] sm:$0xff]
        %v973 = vld [vmem:[#allocation2 + $0x2f] sm:$0xff]
        %v974 = vld [vmem:[#allocation2 + $0x37] sm:$0xff]
        %v975 = vld [vmem:[#allocation8] sm:$0xff]
        %v976 = vld [vmem:[#allocation8 + $0x8] sm:$0xff]
        %v977 = vld [vmem:[#allocation8 + $0x10] sm:$0xff]
        %v978 = vld [vmem:[#allocation8 + $0x18] sm:$0xff]
        %v979 = vld [vmem:[#allocation8 + $0x20] sm:$0xff]
        %v980 = vld [vmem:[#allocation8 + $0x28] sm:$0xff]
        %v981 = vld [vmem:[#allocation8 + $0x30] sm:$0xff]
        %v982 = vld [vmem:[#allocation8 + $0x38] sm:$0xff]
        %v983 = vld [vmem:[#allocation8 + $0x40] sm:$0xff]
        %v984 = vld [vmem:[#allocation8 + $0x48] sm:$0xff]
        %v985 = vld [vmem:[#allocation8 + $0x50] sm:$0xff]
        %v986 = vld [vmem:[#allocation8 + $0x58] sm:$0xff]
        %v987 = vld [vmem:[#allocation8 + $0x60] sm:$0xff]
        %v988 = vld [vmem:[#allocation8 + $0x68] sm:$0xff]
        %v989 = vld [vmem:[#allocation8 + $0x70] sm:$0xff]
        %v990 = vld [vmem:[#allocation8 + $0x78] sm:$0xff]
        %v991 = vld [vmem:[#allocation2 + $0x10] sm:$0xff]
        %v992 = vld [vmem:[#allocation2 + $0x18] sm:$0xff]
        %v993 = vld [vmem:[#allocation2 + $0x20] sm:$0xff]
        %v994 = vld [vmem:[#allocation2 + $0x28] sm:$0xff]
        %v995 = vld [vmem:[#allocation2 + $0x30] sm:$0xff]
        %v996 = vld [vmem:[#allocation2 + $0x38] sm:$0xff]
        %s997 = scalar_lea.vmem [#allocation8], 128
        %v998 = vld [vmem:[%s997] sm:$0xff]
        %v999 = vld [vmem:[%s997 + $0x8] sm:$0xff]
        %v1000 = vld [vmem:[%s997 + $0x10] sm:$0xff]
        %v1001 = vld [vmem:[%s997 + $0x18] sm:$0xff]
        %v1002 = vld [vmem:[%s997 + $0x20] sm:$0xff]
        %v1003 = vld [vmem:[%s997 + $0x28] sm:$0xff]
        %v1004 = vld [vmem:[%s997 + $0x30] sm:$0xff]
        %v1005 = vld [vmem:[%s997 + $0x38] sm:$0xff]
        %v1006 = vld [vmem:[%s997 + $0x40] sm:$0xff]
        %v1007 = vld [vmem:[%s997 + $0x48] sm:$0xff]
        %v1008 = vld [vmem:[%s997 + $0x50] sm:$0xff]
        %v1009 = vld [vmem:[%s997 + $0x58] sm:$0xff]
        %v1010 = vld [vmem:[%s997 + $0x60] sm:$0xff]
        %v1011 = vld [vmem:[%s997 + $0x68] sm:$0xff]
        %v1012 = vld [vmem:[%s997 + $0x70] sm:$0xff]
        %v1013 = vld [vmem:[%s997 + $0x78] sm:$0xff]
        %1014 = vmatprep.subr.mxu0 0.0
        %1015 = vmatpush1.msra.mxu0 %v998
        %1016 = vmatprep.subr.mxu0 0.0
        %1017 = vmatpush1.msra.mxu0 %v999
        %1018 = vmatprep.subr.mxu0 0.0
        %1019 = vmatpush1.msra.mxu0 %v1000
        %1020 = vmatprep.subr.mxu0 0.0
        %1021 = vmatpush1.msra.mxu0 %v1001
        %1022 = vmatprep.subr.mxu0 0.0
        %1023 = vmatpush1.msra.mxu0 %v1002
        %1024 = vmatprep.subr.mxu0 0.0
        %1025 = vmatpush1.msra.mxu0 %v1003
        %1026 = vmatprep.subr.mxu0 0.0
        %1027 = vmatpush1.msra.mxu0 %v1004
        %1028 = vmatprep.subr.mxu0 0.0
        %1029 = vmatpush1.msra.mxu0 %v1005
        %1030 = vmatprep.subr.mxu0 0.0
        %1031 = vmatpush1.msra.mxu0 %v1006
        %1032 = vmatprep.subr.mxu0 0.0
        %1033 = vmatpush1.msra.mxu0 %v1007
        %1034 = vmatprep.subr.mxu0 0.0
        %1035 = vmatpush1.msra.mxu0 %v1008
        %1036 = vmatprep.subr.mxu0 0.0
        %1037 = vmatpush1.msra.mxu0 %v1009
        %1038 = vmatprep.subr.mxu0 0.0
        %1039 = vmatpush1.msra.mxu0 %v1010
        %1040 = vmatprep.subr.mxu0 0.0
        %1041 = vmatpush1.msra.mxu0 %v1011
        %1042 = vmatprep.subr.mxu0 0.0
        %1043 = vmatpush1.msra.mxu0 %v1012
        %1044 = vmatprep.subr.mxu0 0.0
        %1045 = vmatpush1.msra.mxu0 %v1013
        %1046 = vmatprep.subr.mxu0 0.0
        %1047 = vmatpush1.msra.mxu0 0.0
        %1048 = vmatprep.subr.mxu0 0.0
        %1049 = vmatpush1.msra.mxu0 0.0
        %1050 = vmatprep.subr.mxu0 0.0
        %1051 = vmatpush1.msra.mxu0 0.0
        %1052 = vmatprep.subr.mxu0 0.0
        %1053 = vmatpush1.msra.mxu0 0.0
        %1054 = vmatprep.subr.mxu0 0.0
        %1055 = vmatpush1.msra.mxu0 0.0
        %1056 = vmatprep.subr.mxu0 0.0
        %1057 = vmatpush1.msra.mxu0 0.0
        %1058 = vmatprep.subr.mxu0 0.0
        %1059 = vmatpush1.msra.mxu0 0.0
        %1060 = vmatprep.subr.mxu0 0.0
        %1061 = vmatpush1.msra.mxu0 0.0
        %1062 = vmatprep.subr.mxu0 0.0
        %1063 = vmatpush1.msra.mxu0 0.0
        %1064 = vmatprep.subr.mxu0 0.0
        %1065 = vmatpush1.msra.mxu0 0.0
        %1066 = vmatprep.subr.mxu0 0.0
        %1067 = vmatpush1.msra.mxu0 0.0
        %1068 = vmatprep.subr.mxu0 0.0
        %1069 = vmatpush1.msra.mxu0 0.0
        %1070 = vmatprep.subr.mxu0 0.0
        %1071 = vmatpush1.msra.mxu0 0.0
        %1072 = vmatprep.subr.mxu0 0.0
        %1073 = vmatpush1.msra.mxu0 0.0
        %1074 = vmatprep.subr.mxu0 0.0
        %1075 = vmatpush1.msra.mxu0 0.0
        %1076 = vmatprep.subr.mxu0 0.0
        %1077 = vmatpush1.msra.mxu0 0.0
        %1078 = vmatprep.mubr.f32.mxu0 0.0
        %1079 = vmatmul.mubr.f32.gmra.mrb[0].mxu0 %v991
        %v1080 = vpop.f32.mrb[0].mxu0
        %v1081 = vadd.f32 0.0, %v1080
        %v1082 = vpop.f32.mrb[0].mxu0
        %1083 = vmatprep.mubr.f32.mxu0 0.0
        %1084 = vmatmul.mubr.f32.gmra.mrb[0].mxu0 %v992
        %v1085 = vpop.f32.mrb[0].mxu0
        %v1086 = vadd.f32 0.0, %v1085
        %v1087 = vpop.f32.mrb[0].mxu0
        %1088 = vmatprep.mubr.f32.mxu0 0.0
        %1089 = vmatmul.mubr.f32.gmra.mrb[0].mxu0 %v993
        %v1090 = vpop.f32.mrb[0].mxu0
        %v1091 = vpop.f32.mrb[0].mxu0
        %1092 = vmatprep.mubr.f32.mxu0 0.0
        %1093 = vmatmul.mubr.f32.gmra.mrb[0].mxu0 %v994
        %v1094 = vpop.f32.mrb[0].mxu0
        %v1095 = vpop.f32.mrb[0].mxu0
        %1096 = vmatprep.mubr.f32.mxu0 0.0
        %1097 = vmatmul.mubr.f32.gmra.mrb[0].mxu0 %v995
        %v1098 = vpop.f32.mrb[0].mxu0
        %v1099 = vadd.f32 0.0, %v1098
        %v1100 = vpop.f32.mrb[0].mxu0
        %1101 = vmatprep.mubr.f32.mxu0 0.0
        %1102 = vmatmul.mubr.f32.gmra.mrb[0].mxu0 %v996
        %v1103 = vpop.f32.mrb[0].mxu0
        %v1104 = vadd.f32 0.0, %v1103
        %v1105 = vpop.f32.mrb[0].mxu0
        %1106 = vdwg.mxu0
        %1107 = vmatprep.subr.mxu0 0.0
        %1108 = vmatpush1.msra.mxu0 %v975
        %1109 = vmatprep.subr.mxu0 0.0
        %1110 = vmatpush1.msra.mxu0 %v976
        %1111 = vmatprep.subr.mxu0 0.0
        %1112 = vmatpush1.msra.mxu0 %v977
        %1113 = vmatprep.subr.mxu0 0.0
        %1114 = vmatpush1.msra.mxu0 %v978
        %1115 = vmatprep.subr.mxu0 0.0
        %1116 = vmatpush1.msra.mxu0 %v979
        %1117 = vmatprep.subr.mxu0 0.0
        %1118 = vmatpush1.msra.mxu0 %v980
        %1119 = vmatprep.subr.mxu0 0.0
        %1120 = vmatpush1.msra.mxu0 %v981
        %1121 = vmatprep.subr.mxu0 0.0
        %1122 = vmatpush1.msra.mxu0 %v982
        %1123 = vmatprep.subr.mxu0 0.0
        %1124 = vmatpush1.msra.mxu0 %v983
        %1125 = vmatprep.subr.mxu0 0.0
        %1126 = vmatpush1.msra.mxu0 %v984
        %1127 = vmatprep.subr.mxu0 0.0
        %1128 = vmatpush1.msra.mxu0 %v985
        %1129 = vmatprep.subr.mxu0 0.0
        %1130 = vmatpush1.msra.mxu0 %v986
        %1131 = vmatprep.subr.mxu0 0.0
        %1132 = vmatpush1.msra.mxu0 %v987
        %1133 = vmatprep.subr.mxu0 0.0
        %1134 = vmatpush1.msra.mxu0 %v988
        %1135 = vmatprep.subr.mxu0 0.0
        %1136 = vmatpush1.msra.mxu0 %v989
        %1137 = vmatprep.subr.mxu0 0.0
        %1138 = vmatpush1.msra.mxu0 %v990
        %1139 = vmatprep.subr.mxu0 0.0
        %1140 = vmatpush1.msra.mxu0 0.0
        %1141 = vmatprep.subr.mxu0 0.0
        %1142 = vmatpush1.msra.mxu0 0.0
        %1143 = vmatprep.subr.mxu0 0.0
        %1144 = vmatpush1.msra.mxu0 0.0
        %1145 = vmatprep.subr.mxu0 0.0
        %1146 = vmatpush1.msra.mxu0 0.0
        %1147 = vmatprep.subr.mxu0 0.0
        %1148 = vmatpush1.msra.mxu0 0.0
        %1149 = vmatprep.subr.mxu0 0.0
        %1150 = vmatpush1.msra.mxu0 0.0
        %1151 = vmatprep.subr.mxu0 0.0
        %1152 = vmatpush1.msra.mxu0 0.0
        %1153 = vmatprep.subr.mxu0 0.0
        %1154 = vmatpush1.msra.mxu0 0.0
        %1155 = vmatprep.subr.mxu0 0.0
        %1156 = vmatpush1.msra.mxu0 0.0
        %1157 = vmatprep.subr.mxu0 0.0
        %1158 = vmatpush1.msra.mxu0 0.0
        %1159 = vmatprep.subr.mxu0 0.0
        %1160 = vmatpush1.msra.mxu0 0.0
        %1161 = vmatprep.subr.mxu0 0.0
        %1162 = vmatpush1.msra.mxu0 0.0
        %1163 = vmatprep.subr.mxu0 0.0
        %1164 = vmatpush1.msra.mxu0 0.0
        %1165 = vmatprep.subr.mxu0 0.0
        %1166 = vmatpush1.msra.mxu0 0.0
        %1167 = vmatprep.subr.mxu0 0.0
        %1168 = vmatpush1.msra.mxu0 0.0
        %1169 = vmatprep.subr.mxu0 0.0
        %1170 = vmatpush1.msra.mxu0 0.0
        %1171 = vmatprep.mubr.f32.mxu0 0.0
        %1172 = vmatmul.mubr.f32.gmra.mrb[0].mxu0 %v969
        %v1173 = vpop.f32.mrb[0].mxu0
        %v1174 = vadd.f32 %v1081, %v1173
        %v1175 = vpop.f32.mrb[0].mxu0
        %1176 = vmatprep.mubr.f32.mxu0 0.0
        %1177 = vmatmul.mubr.f32.gmra.mrb[0].mxu0 %v970
        %v1178 = vpop.f32.mrb[0].mxu0
        %v1179 = vadd.f32 %v1086, %v1178
        %v1180 = vpop.f32.mrb[0].mxu0
        %1181 = vmatprep.mubr.f32.mxu0 0.0
        %1182 = vmatmul.mubr.f32.gmra.mrb[0].mxu0 %v971
        %v1183 = vpop.f32.mrb[0].mxu0
        %v1184 = vpop.f32.mrb[0].mxu0
        %1185 = vmatprep.mubr.f32.mxu0 0.0
        %1186 = vmatmul.mubr.f32.gmra.mrb[0].mxu0 %v972
        %v1187 = vpop.f32.mrb[0].mxu0
        %v1188 = vpop.f32.mrb[0].mxu0
        %1189 = vmatprep.mubr.f32.mxu0 0.0
        %1190 = vmatmul.mubr.f32.gmra.mrb[0].mxu0 %v973
        %v1191 = vpop.f32.mrb[0].mxu0
        %v1192 = vadd.f32 %v1099, %v1191
        %v1193 = vpop.f32.mrb[0].mxu0
        %1194 = vmatprep.mubr.f32.mxu0 0.0
        %1195 = vmatmul.mubr.f32.gmra.mrb[0].mxu0 %v974
        %v1196 = vpop.f32.mrb[0].mxu0
        %v1197 = vadd.f32 %v1104, %v1196
        %v1198 = vpop.f32.mrb[0].mxu0
        %1199 = vdwg.mxu0
        %v1200 = vld [vmem:[#allocation2 + $0x11] sm:$0xff]
        %v1201 = vld [vmem:[#allocation2 + $0x19] sm:$0xff]
        %v1202 = vld [vmem:[#allocation2 + $0x21] sm:$0xff]
        %v1203 = vld [vmem:[#allocation2 + $0x29] sm:$0xff]
        %v1204 = vld [vmem:[#allocation2 + $0x31] sm:$0xff]
        %v1205 = vld [vmem:[#allocation2 + $0x39] sm:$0xff]
        %s1206 = scalar_lea.vmem [#allocation8], 256
        %v1207 = vld [vmem:[%s1206] sm:$0xff]
        %v1208 = vld [vmem:[%s1206 + $0x8] sm:$0xff]
        %v1209 = vld [vmem:[%s1206 + $0x10] sm:$0xff]
        %v1210 = vld [vmem:[%s1206 + $0x18] sm:$0xff]
        %v1211 = vld [vmem:[%s1206 + $0x20] sm:$0xff]
        %v1212 = vld [vmem:[%s1206 + $0x28] sm:$0xff]
        %v1213 = vld [vmem:[%s1206 + $0x30] sm:$0xff]
        %v1214 = vld [vmem:[%s1206 + $0x38] sm:$0xff]
        %v1215 = vld [vmem:[%s1206 + $0x40] sm:$0xff]
        %v1216 = vld [vmem:[%s1206 + $0x48] sm:$0xff]
        %v1217 = vld [vmem:[%s1206 + $0x50] sm:$0xff]
        %v1218 = vld [vmem:[%s1206 + $0x58] sm:$0xff]
        %v1219 = vld [vmem:[%s1206 + $0x60] sm:$0xff]
        %v1220 = vld [vmem:[%s1206 + $0x68] sm:$0xff]
        %v1221 = vld [vmem:[%s1206 + $0x70] sm:$0xff]
        %v1222 = vld [vmem:[%s1206 + $0x78] sm:$0xff]
        %1223 = vmatprep.subr.mxu0 0.0
        %1224 = vmatpush1.msra.mxu0 %v1207
        %1225 = vmatprep.subr.mxu0 0.0
        %1226 = vmatpush1.msra.mxu0 %v1208
        %1227 = vmatprep.subr.mxu0 0.0
        %1228 = vmatpush1.msra.mxu0 %v1209
        %1229 = vmatprep.subr.mxu0 0.0
        %1230 = vmatpush1.msra.mxu0 %v1210
        %1231 = vmatprep.subr.mxu0 0.0
        %1232 = vmatpush1.msra.mxu0 %v1211
        %1233 = vmatprep.subr.mxu0 0.0
        %1234 = vmatpush1.msra.mxu0 %v1212
        %1235 = vmatprep.subr.mxu0 0.0
        %1236 = vmatpush1.msra.mxu0 %v1213
        %1237 = vmatprep.subr.mxu0 0.0
        %1238 = vmatpush1.msra.mxu0 %v1214
        %1239 = vmatprep.subr.mxu0 0.0
        %1240 = vmatpush1.msra.mxu0 %v1215
        %1241 = vmatprep.subr.mxu0 0.0
        %1242 = vmatpush1.msra.mxu0 %v1216
        %1243 = vmatprep.subr.mxu0 0.0
        %1244 = vmatpush1.msra.mxu0 %v1217
        %1245 = vmatprep.subr.mxu0 0.0
        %1246 = vmatpush1.msra.mxu0 %v1218
        %1247 = vmatprep.subr.mxu0 0.0
        %1248 = vmatpush1.msra.mxu0 %v1219
        %1249 = vmatprep.subr.mxu0 0.0
        %1250 = vmatpush1.msra.mxu0 %v1220
        %1251 = vmatprep.subr.mxu0 0.0
        %1252 = vmatpush1.msra.mxu0 %v1221
        %1253 = vmatprep.subr.mxu0 0.0
        %1254 = vmatpush1.msra.mxu0 %v1222
        %1255 = vmatprep.subr.mxu0 0.0
        %1256 = vmatpush1.msra.mxu0 0.0
        %1257 = vmatprep.subr.mxu0 0.0
        %1258 = vmatpush1.msra.mxu0 0.0
        %1259 = vmatprep.subr.mxu0 0.0
        %1260 = vmatpush1.msra.mxu0 0.0
        %1261 = vmatprep.subr.mxu0 0.0
        %1262 = vmatpush1.msra.mxu0 0.0
        %1263 = vmatprep.subr.mxu0 0.0
        %1264 = vmatpush1.msra.mxu0 0.0
        %1265 = vmatprep.subr.mxu0 0.0
        %1266 = vmatpush1.msra.mxu0 0.0
        %1267 = vmatprep.subr.mxu0 0.0
        %1268 = vmatpush1.msra.mxu0 0.0
        %1269 = vmatprep.subr.mxu0 0.0
        %1270 = vmatpush1.msra.mxu0 0.0
        %1271 = vmatprep.subr.mxu0 0.0
        %1272 = vmatpush1.msra.mxu0 0.0
        %1273 = vmatprep.subr.mxu0 0.0
        %1274 = vmatpush1.msra.mxu0 0.0
        %1275 = vmatprep.subr.mxu0 0.0
        %1276 = vmatpush1.msra.mxu0 0.0
        %1277 = vmatprep.subr.mxu0 0.0
        %1278 = vmatpush1.msra.mxu0 0.0
        %1279 = vmatprep.subr.mxu0 0.0
        %1280 = vmatpush1.msra.mxu0 0.0
        %1281 = vmatprep.subr.mxu0 0.0
        %1282 = vmatpush1.msra.mxu0 0.0
        %1283 = vmatprep.subr.mxu0 0.0
        %1284 = vmatpush1.msra.mxu0 0.0
        %1285 = vmatprep.subr.mxu0 0.0
        %1286 = vmatpush1.msra.mxu0 0.0
        %1287 = vmatprep.mubr.f32.mxu0 0.0
        %1288 = vmatmul.mubr.f32.gmra.mrb[0].mxu0 %v1200
        %v1289 = vpop.f32.mrb[0].mxu0
        %v1290 = vadd.f32 0.0, %v1289
        %v1291 = vpop.f32.mrb[0].mxu0
        %1292 = vmatprep.mubr.f32.mxu0 0.0
        %1293 = vmatmul.mubr.f32.gmra.mrb[0].mxu0 %v1201
        %v1294 = vpop.f32.mrb[0].mxu0
        %v1295 = vadd.f32 0.0, %v1294
        %v1296 = vpop.f32.mrb[0].mxu0
        %1297 = vmatprep.mubr.f32.mxu0 0.0
        %1298 = vmatmul.mubr.f32.gmra.mrb[0].mxu0 %v1202
        %v1299 = vpop.f32.mrb[0].mxu0
        %v1300 = vpop.f32.mrb[0].mxu0
        %1301 = vmatprep.mubr.f32.mxu0 0.0
        %1302 = vmatmul.mubr.f32.gmra.mrb[0].mxu0 %v1203
        %v1303 = vpop.f32.mrb[0].mxu0
        %v1304 = vpop.f32.mrb[0].mxu0
        %1305 = vmatprep.mubr.f32.mxu0 0.0
        %1306 = vmatmul.mubr.f32.gmra.mrb[0].mxu0 %v1204
        %v1307 = vpop.f32.mrb[0].mxu0
        %v1308 = vadd.f32 0.0, %v1307
        %v1309 = vpop.f32.mrb[0].mxu0
        %1310 = vmatprep.mubr.f32.mxu0 0.0
        %1311 = vmatmul.mubr.f32.gmra.mrb[0].mxu0 %v1205
        %v1312 = vpop.f32.mrb[0].mxu0
        %v1313 = vadd.f32 0.0, %v1312
        %v1314 = vpop.f32.mrb[0].mxu0
        %1315 = vdwg.mxu0
        %v1316 = vadd.f32 %v1174, %v1290
        %v1317 = vadd.f32 %v1179, %v1295
        %v1318 = vadd.f32 %v1192, %v1308
        %v1319 = vadd.f32 %v1197, %v1313
        %v1320 = vld [vmem:[%s4] sm:$0x1]
        %v1322 = vlaneseq
        %v1323 = vshrl.u32 %v1322, 7
        %v1324 = vsub.s32 0, %v1323
        %v1325 = vrot.slane %v1320, %v1324
        %v1327 = vadd.f32 %v1316, %v1325
        %v1328 = vadd.f32 %v1317, %v1325
        %v1329 = vadd.f32 %v1318, %v1325
        %v1330 = vadd.f32 %v1319, %v1325
        %v1331 = vmax.f32 %v1327, 0.0
        %v1332 = vmax.f32 %v1328, 0.0
        %v1333 = vmax.f32 %v1329, 0.0
        %v1334 = vmax.f32 %v1330, 0.0
        %1335 = vst [vmem:[#allocation2 + $0x10] sm:$0xff] %v1331
        %1336 = vst [vmem:[#allocation2 + $0x18] sm:$0xff] %v1332
        %1337 = vst [vmem:[#allocation2 + $0x30] sm:$0xff] %v1333
        %1338 = vst [vmem:[#allocation2 + $0x38] sm:$0xff] %v1334
        %v1339 = vld [vmem:[#allocation2 + $0x10] sm:$0xff]
        %v1340 = vld [vmem:[#allocation2 + $0x18] sm:$0xff]
        %v1341 = vld [vmem:[#allocation2 + $0x20] sm:$0xff]
        %v1342 = vld [vmem:[#allocation2 + $0x28] sm:$0xff]
        %v1343 = vld [vmem:[#allocation2 + $0x30] sm:$0xff]
        %v1344 = vld [vmem:[#allocation2 + $0x38] sm:$0xff]
        %v1345 = vld [vmem:[#allocation9] sm:$0xff]
        %v1346 = vld [vmem:[#allocation9 + $0x8] sm:$0xff]
        %v1347 = vld [vmem:[#allocation9 + $0x10] sm:$0xff]
        %v1348 = vld [vmem:[#allocation9 + $0x18] sm:$0xff]
        %v1349 = vld [vmem:[#allocation9 + $0x20] sm:$0xff]
        %v1350 = vld [vmem:[#allocation9 + $0x28] sm:$0xff]
        %v1351 = vld [vmem:[#allocation9 + $0x30] sm:$0xff]
        %v1352 = vld [vmem:[#allocation9 + $0x38] sm:$0xff]
        %v1353 = vld [vmem:[#allocation9 + $0x40] sm:$0xff]
        %v1354 = vld [vmem:[#allocation9 + $0x48] sm:$0xff]
        %v1355 = vld [vmem:[#allocation9 + $0x50] sm:$0xff]
        %v1356 = vld [vmem:[#allocation9 + $0x58] sm:$0xff]
        %v1357 = vld [vmem:[#allocation9 + $0x60] sm:$0xff]
        %v1358 = vld [vmem:[#allocation9 + $0x68] sm:$0xff]
        %v1359 = vld [vmem:[#allocation9 + $0x70] sm:$0xff]
        %v1360 = vld [vmem:[#allocation9 + $0x78] sm:$0xff]
        %v1361 = vld [vmem:[%s6] sm:$0x1]
        %v1363 = vlaneseq
        %v1364 = vshrl.u32 %v1363, 7
        %v1365 = vsub.s32 0, %v1364
        %v1366 = vrot.slane %v1361, %v1365
        %1368 = vmatprep.subr.mxu0 0.0
        %1369 = vmatpush1.msra.mxu0 %v1345
        %1370 = vmatprep.subr.mxu0 0.0
        %1371 = vmatpush1.msra.mxu0 %v1346
        %1372 = vmatprep.subr.mxu0 0.0
        %1373 = vmatpush1.msra.mxu0 %v1347
        %1374 = vmatprep.subr.mxu0 0.0
        %1375 = vmatpush1.msra.mxu0 %v1348
        %1376 = vmatprep.subr.mxu0 0.0
        %1377 = vmatpush1.msra.mxu0 %v1349
        %1378 = vmatprep.subr.mxu0 0.0
        %1379 = vmatpush1.msra.mxu0 %v1350
        %1380 = vmatprep.subr.mxu0 0.0
        %1381 = vmatpush1.msra.mxu0 %v1351
        %1382 = vmatprep.subr.mxu0 0.0
        %1383 = vmatpush1.msra.mxu0 %v1352
        %1384 = vmatprep.subr.mxu0 0.0
        %1385 = vmatpush1.msra.mxu0 %v1353
        %1386 = vmatprep.subr.mxu0 0.0
        %1387 = vmatpush1.msra.mxu0 %v1354
        %1388 = vmatprep.subr.mxu0 0.0
        %1389 = vmatpush1.msra.mxu0 %v1355
        %1390 = vmatprep.subr.mxu0 0.0
        %1391 = vmatpush1.msra.mxu0 %v1356
        %1392 = vmatprep.subr.mxu0 0.0
        %1393 = vmatpush1.msra.mxu0 %v1357
        %1394 = vmatprep.subr.mxu0 0.0
        %1395 = vmatpush1.msra.mxu0 %v1358
        %1396 = vmatprep.subr.mxu0 0.0
        %1397 = vmatpush1.msra.mxu0 %v1359
        %1398 = vmatprep.subr.mxu0 0.0
        %1399 = vmatpush1.msra.mxu0 %v1360
        %1400 = vmatprep.subr.mxu0 0.0
        %1401 = vmatpush1.msra.mxu0 0.0
        %1402 = vmatprep.subr.mxu0 0.0
        %1403 = vmatpush1.msra.mxu0 0.0
        %1404 = vmatprep.subr.mxu0 0.0
        %1405 = vmatpush1.msra.mxu0 0.0
        %1406 = vmatprep.subr.mxu0 0.0
        %1407 = vmatpush1.msra.mxu0 0.0
        %1408 = vmatprep.subr.mxu0 0.0
        %1409 = vmatpush1.msra.mxu0 0.0
        %1410 = vmatprep.subr.mxu0 0.0
        %1411 = vmatpush1.msra.mxu0 0.0
        %1412 = vmatprep.subr.mxu0 0.0
        %1413 = vmatpush1.msra.mxu0 0.0
        %1414 = vmatprep.subr.mxu0 0.0
        %1415 = vmatpush1.msra.mxu0 0.0
        %1416 = vmatprep.subr.mxu0 0.0
        %1417 = vmatpush1.msra.mxu0 0.0
        %1418 = vmatprep.subr.mxu0 0.0
        %1419 = vmatpush1.msra.mxu0 0.0
        %1420 = vmatprep.subr.mxu0 0.0
        %1421 = vmatpush1.msra.mxu0 0.0
        %1422 = vmatprep.subr.mxu0 0.0
        %1423 = vmatpush1.msra.mxu0 0.0
        %1424 = vmatprep.subr.mxu0 0.0
        %1425 = vmatpush1.msra.mxu0 0.0
        %1426 = vmatprep.subr.mxu0 0.0
        %1427 = vmatpush1.msra.mxu0 0.0
        %1428 = vmatprep.subr.mxu0 0.0
        %1429 = vmatpush1.msra.mxu0 0.0
        %1430 = vmatprep.subr.mxu0 0.0
        %1431 = vmatpush1.msra.mxu0 0.0
        %1432 = vmatprep.mubr.f32.mxu0 0.0
        %1433 = vmatmul.mubr.f32.gmra.mrb[0].mxu0 %v1339
        %v1434 = vpop.f32.mrb[0].mxu0
        %v1435 = vadd.f32 %v1366, %v1434
        %v1436 = vpop.f32.mrb[0].mxu0
        %1437 = vmatprep.mubr.f32.mxu0 0.0
        %1438 = vmatmul.mubr.f32.gmra.mrb[0].mxu0 %v1340
        %v1439 = vpop.f32.mrb[0].mxu0
        %v1440 = vadd.f32 %v1366, %v1439
        %v1441 = vpop.f32.mrb[0].mxu0
        %1442 = vmatprep.mubr.f32.mxu0 0.0
        %1443 = vmatmul.mubr.f32.gmra.mrb[0].mxu0 %v1341
        %v1444 = vpop.f32.mrb[0].mxu0
        %v1445 = vpop.f32.mrb[0].mxu0
        %1446 = vmatprep.mubr.f32.mxu0 0.0
        %1447 = vmatmul.mubr.f32.gmra.mrb[0].mxu0 %v1342
        %v1448 = vpop.f32.mrb[0].mxu0
        %v1449 = vpop.f32.mrb[0].mxu0
        %1450 = vmatprep.mubr.f32.mxu0 0.0
        %1451 = vmatmul.mubr.f32.gmra.mrb[0].mxu0 %v1343
        %v1452 = vpop.f32.mrb[0].mxu0
        %v1453 = vadd.f32 %v1366, %v1452
        %v1454 = vpop.f32.mrb[0].mxu0
        %1455 = vmatprep.mubr.f32.mxu0 0.0
        %1456 = vmatmul.mubr.f32.gmra.mrb[0].mxu0 %v1344
        %v1457 = vpop.f32.mrb[0].mxu0
        %v1458 = vadd.f32 %v1366, %v1457
        %v1459 = vpop.f32.mrb[0].mxu0
        %1460 = vdwg.mxu0
        %1461 = vst [vmem:[%s341] sm:$0xff] %v1435
        %1462 = vst [vmem:[%s341 + $0x8] sm:$0xff] %v1440
        %s1463 = scalar_lea.vmem %s341, 16 [#allocation11]
        %1464 = vst [vmem:[%s1463] sm:$0xff] %v1453
        %1465 = vst [vmem:[%s1463 + $0x8] sm:$0xff] %v1458
        %s1466 = sand.u32 %s186, 1
        %s1467 = scalar_lea.sflag [#allocation5], %s1466
        %s1468 = sand.u32 %s186, 1
        %s1469 = smul.addr %s1468, 32
        %s1470 = scalar_lea.vmem [#allocation11], %s1469
        // Predicated region
        $region65: #{tpu_custom_call.1} parent=47 // pred_check
          %p1471 = pneg %p196
        $region66: #{tpu_custom_call.1} parent=47 // pred_check_branch
          %1473 = sbr.rel (%p1471) target = $region68
        $region67: #{tpu_custom_call.1} parent=47 // pred_region
          %s1474 = smul.u32 2, %s26
          %s1476 = ssub.s32 512, 512
          %1477 = vsyncadd %s1467, %s1476
          %s1478 = smul.addr %s1474, 2
          %s1479 = smul.addr %s1478, 128
          %s1480 = scalar_lea.hbm %s7, %s1479
          %s1481 = sshll.u32 %s1470, 4
          %s1482 = int_to_ptr.vmem [resolvable:$true] %s1481
          %1487 = dma.vmem_to_hbm [thread:$0]  %s1482, 512, %s1480, %s1467, 128, 128, 8
        $region68: #{tpu_custom_call.1} parent=47 // pred_fallthru
          _
      $region48: #{tpu_custom_call.1} parent=5 // pred_fallthru
        _
      %p1488 = scmp.le.s32.totalorder 2, %s21
      // Predicated region
      $region69: #{tpu_custom_call.1} parent=5 // pred_check
        %p1489 = pneg %p1488
      $region70: #{tpu_custom_call.1} parent=5 // pred_check_branch
        %1491 = sbr.rel (%p1489) target = $region72
      $region71: #{tpu_custom_call.1} parent=5 // pred_region
        %s1492 = ssub.s32 %s21, 2
        // Predicated region
        $region73: #{tpu_custom_call.1} parent=71 // pred_check
          %p1493 = pneg %p202
        $region74: #{tpu_custom_call.1} parent=71 // pred_check_branch
          %1495 = sbr.rel (%p1493) target = $region76
        $region75: #{tpu_custom_call.1} parent=71 // pred_region
          %s1496 = sand.u32 %s187, 1
          %s1497 = scalar_lea.sflag [#allocation5], %s1496
          %s1498 = sand.u32 %s187, 1
          %s1499 = smul.addr %s1498, 32
          %s1500 = scalar_lea.vmem [#allocation11], %s1499
          %1501 = dma.done %s1497, 512
        $region76: #{tpu_custom_call.1} parent=71 // pred_fallthru
          _
      $region72: #{tpu_custom_call.1} parent=5 // pred_fallthru
        _
    $region6: #{tpu_custom_call.1} parent=1 // loop_footer
      %s25 = sadd.s32 1, %s21
    $region7: #{tpu_custom_call.1} parent=1 // loop_footer_branch
      %20 = sbr.rel target = $region3
    $region8: #{tpu_custom_call.1} parent=1 // loop_exit
      _
    %1502 = vsyncpa [#allocation4], 1
    %s1503 = scalar_lea.sflag [#allocation4], 1
    %1504 = vsyncpa %s1503, 1
    %1505 = vsyncpa [#allocation7], 1
    %1506 = vsyncpa [#allocation10], 1
    %1507 = vsyncpa [#allocation5], 1
    %s1508 = scalar_lea.sflag [#allocation5], 1
    %1509 = vsyncpa %s1508, 1

// kernel: tpu_custom_call.1
$region0: #{tpu_custom_call.1}
  #allocation0 [shape = 'u32[]', space=smem, size = 0x4, offset = 0x4, fixed_abs, tag = 'smem constant byte address 0x4 - core index']
  #allocation1 [shape = 'u32[144,128]{1,0:T(1,128)}', space=vmem, size = 0x12000, scoped, tag = 'internal scratch']
  #allocation2 [shape = 'f32[80,128]{1,0:T(8,128)}', space=vmem, size = 0xa000, scoped, tag = 'scratch operand']
  %s0 = inlined_call_operand.hbm [shape: f32[4,16,128], index: 0, kind: input, shape index: {}]
  %s1 = inlined_call_operand.hbm [shape: f32[5,128,128], index: 1, kind: input, shape index: {}]
  %s2 = inlined_call_operand.vmem [shape: f32[1,128], index: 2, kind: input, shape index: {}]
  %s3 = inlined_call_operand.hbm [shape: f32[3,128,128], index: 3, kind: input, shape index: {}]
  %s4 = inlined_call_operand.vmem [shape: f32[1,128], index: 4, kind: input, shape index: {}]
  %s5 = inlined_call_operand.hbm [shape: f32[1,128,128], index: 5, kind: input, shape index: {}]
  %s6 = inlined_call_operand.vmem [shape: f32[1,128], index: 6, kind: input, shape index: {}]
  %s7 = inlined_call_operand.hbm [shape: f32[4,16,128], index: 7, kind: output, shape index: {}]
  %s8 = sld [smem:[#allocation0]]
  $region77: #{tpu_custom_call.1} parent=0
    _
  %s10 = ssub.s32 1, %s8
  %s11 = scalar_select 0, %s10, %s8
  $region1: #{tpu_custom_call.1} parent=0
    #allocation3 [shape = 'u8[32768]{0}', space=vmem, size = 0x8000, scoped, tag = 'input window, operand 0']
    #allocation4 [shape = 's32[2]{0}', space=sflag, size = 0x8, scoped, tag = 'scoped memory for tpu_custom_call.1']
    #allocation5 [shape = 's32[2]{0}', space=sflag, size = 0x8, scoped, tag = 'scoped memory for tpu_custom_call.1']
    #allocation6 [shape = 'u8[327680]{0}', space=vmem, size = 0x50000, scoped, tag = 'input window, operand 1, single buffered']
    #allocation7 [shape = 's32[1]{0}', space=sflag, size = 0x4, scoped, tag = 'scoped memory for tpu_custom_call.1']
    #allocation8 [shape = 'u8[196608]{0}', space=vmem, size = 0x30000, scoped, tag = 'input window, operand 3, single buffered']
    #allocation9 [shape = 'u8[65536]{0}', space=vmem, size = 0x10000, scoped, tag = 'input window, operand 5, single buffered']
    #allocation10 [shape = 's32[1]{0}', space=sflag, size = 0x4, scoped, tag = 'scoped memory for tpu_custom_call.1']
    #allocation11 [shape = 'u8[32768]{0}', space=vmem, size = 0x8000, scoped, tag = 'output window, operand 0']
    %12 = vsyncpa [#allocation4], 0
    %s13 = scalar_lea.sflag [#allocation4], 1
    %14 = vsyncpa %s13, 0
    %15 = vsyncpa [#allocation7], 0
    %16 = vsyncpa [#allocation10], 0
    %17 = vsyncpa [#allocation5], 0
    %s18 = scalar_lea.sflag [#allocation5], 1
    %19 = vsyncpa %s18, 0
    loop: start=0, step=1, limit=4
    $region2: #{tpu_custom_call.1} parent=1 // loop_pre_header
      _
    $region3: #{tpu_custom_call.1} parent=1 // loop_header
      %s21 = sphi 0, %s25
      %p22 = scmp.ge.s32.totalorder %s21, 4
      %s31 = sphi 0, %s33
      %s34 = sphi 0, %s31
      %s35 = sphi 0, %s34
      %s51 = sphi 0, %s35
      %s55 = sphi 0, %s55
      %s57 = sphi 0, %s55
      %s58 = sphi 0, %s57
      %s72 = sphi 0, %s58
      %s76 = sphi 0, %s76
      %s78 = sphi 0, %s76
      %s79 = sphi 0, %s78
      %s93 = sphi 0, %s79
      %s97 = sphi 0, %s97
      %s99 = sphi 0, %s97
      %s100 = sphi 0, %s99
      %s114 = sphi 0, %s100
      %s118 = sphi 0, %s118
      %s120 = sphi 0, %s118
      %s121 = sphi 0, %s120
      %s135 = sphi 0, %s121
      %s139 = sphi 0, %s139
      %s141 = sphi 0, %s139
      %s142 = sphi 0, %s141
      %s156 = sphi 0, %s142
      %s160 = sphi 0, %s160
      %s162 = sphi 0, %s160
      %s163 = sphi 0, %s162
      %s177 = sphi 0, %s163
      %s183 = sphi 0, %s185
      %s186 = sphi 0, %s183
      %s187 = sphi 0, %s186
      %s203 = sphi 0, %s187
    $region4: #{tpu_custom_call.1} parent=1 // loop_header_branch
      %24 = sbr.rel (%p22) target = $region8
    $region5: #{tpu_custom_call.1} parent=1 // loop_body
      %s26 = ssub.s32 %s21, 1
      %s27 = ssub.s32 %s21, 2
      %s28 = sadd.s32 %s21, 1
      %s29 = ssub.s32 %s21, %s28
      %p30 = scmp.eq.s32.totalorder %s29, 0
      %s32 = sadd.s32 %s31, 1
      %s33 = scalar_select %p30, %s31, %s32
      %p36 = pneg %p30
      %p37 = scmp.eq.s32.totalorder %s21, 1
      %p38 = por %p36, %p37
      %p39 = scmp.ne.s32.totalorder %s31, %s34
      %p40 = scmp.eq.s32.totalorder %s21, 0
      %p41 = por %p39, %p40
      %p42 = scmp.ne.s32.totalorder %s31, %s34
      %p43 = scmp.eq.s32.totalorder %s26, 1
      %p44 = por %p42, %p43
      %p45 = scmp.ne.s32.totalorder %s34, %s35
      %p46 = scmp.eq.s32.totalorder %s26, 0
      %p47 = por %p45, %p46
      %p48 = scmp.ne.s32.totalorder %s34, %s35
      %p49 = scmp.eq.s32.totalorder %s27, 1
      %p50 = por %p48, %p49
      %p52 = scmp.ne.s32.totalorder %s35, %s51
      %p53 = scmp.eq.s32.totalorder %s27, 0
      %p54 = por %p52, %p53
      %s56 = sadd.s32 %s55, 1
      %p59 = scmp.eq.s32.totalorder %s21, 1
      %p60 = scmp.ne.s32.totalorder %s55, %s57
      %p61 = scmp.eq.s32.totalorder %s21, 0
      %p62 = por %p60, %p61
      %p63 = scmp.ne.s32.totalorder %s55, %s57
      %p64 = scmp.eq.s32.totalorder %s26, 1
      %p65 = por %p63, %p64
      %p66 = scmp.ne.s32.totalorder %s57, %s58
      %p67 = scmp.eq.s32.totalorder %s26, 0
      %p68 = por %p66, %p67
      %p69 = scmp.ne.s32.totalorder %s57, %s58
      %p70 = scmp.eq.s32.totalorder %s27, 1
      %p71 = por %p69, %p70
      %p73 = scmp.ne.s32.totalorder %s58, %s72
      %p74 = scmp.eq.s32.totalorder %s27, 0
      %p75 = por %p73, %p74
      %s77 = sadd.s32 %s76, 1
      %p80 = scmp.eq.s32.totalorder %s21, 1
      %p81 = scmp.ne.s32.totalorder %s76, %s78
      %p82 = scmp.eq.s32.totalorder %s21, 0
      %p83 = por %p81, %p82
      %p84 = scmp.ne.s32.totalorder %s76, %s78
      %p85 = scmp.eq.s32.totalorder %s26, 1
      %p86 = por %p84, %p85
      %p87 = scmp.ne.s32.totalorder %s78, %s79
      %p88 = scmp.eq.s32.totalorder %s26, 0
      %p89 = por %p87, %p88
      %p90 = scmp.ne.s32.totalorder %s78, %s79
      %p91 = scmp.eq.s32.totalorder %s27, 1
      %p92 = por %p90, %p91
      %p94 = scmp.ne.s32.totalorder %s79, %s93
      %p95 = scmp.eq.s32.totalorder %s27, 0
      %p96 = por %p94, %p95
      %s98 = sadd.s32 %s97, 1
      %p101 = scmp.eq.s32.totalorder %s21, 1
      %p102 = scmp.ne.s32.totalorder %s97, %s99
      %p103 = scmp.eq.s32.totalorder %s21, 0
      %p104 = por %p102, %p103
      %p105 = scmp.ne.s32.totalorder %s97, %s99
      %p106 = scmp.eq.s32.totalorder %s26, 1
      %p107 = por %p105, %p106
      %p108 = scmp.ne.s32.totalorder %s99, %s100
      %p109 = scmp.eq.s32.totalorder %s26, 0
      %p110 = por %p108, %p109
      %p111 = scmp.ne.s32.totalorder %s99, %s100
      %p112 = scmp.eq.s32.totalorder %s27, 1
      %p113 = por %p111, %p112
      %p115 = scmp.ne.s32.totalorder %s100, %s114
      %p116 = scmp.eq.s32.totalorder %s27, 0
      %p117 = por %p115, %p116
      %s119 = sadd.s32 %s118, 1
      %p122 = scmp.eq.s32.totalorder %s21, 1
      %p123 = scmp.ne.s32.totalorder %s118, %s120
      %p124 = scmp.eq.s32.totalorder %s21, 0
      %p125 = por %p123, %p124
      %p126 = scmp.ne.s32.totalorder %s118, %s120
      %p127 = scmp.eq.s32.totalorder %s26, 1
      %p128 = por %p126, %p127
      %p129 = scmp.ne.s32.totalorder %s120, %s121
      %p130 = scmp.eq.s32.totalorder %s26, 0
      %p131 = por %p129, %p130
      %p132 = scmp.ne.s32.totalorder %s120, %s121
      %p133 = scmp.eq.s32.totalorder %s27, 1
      %p134 = por %p132, %p133
      %p136 = scmp.ne.s32.totalorder %s121, %s135
      %p137 = scmp.eq.s32.totalorder %s27, 0
      %p138 = por %p136, %p137
      %s140 = sadd.s32 %s139, 1
      %p143 = scmp.eq.s32.totalorder %s21, 1
      %p144 = scmp.ne.s32.totalorder %s139, %s141
      %p145 = scmp.eq.s32.totalorder %s21, 0
      %p146 = por %p144, %p145
      %p147 = scmp.ne.s32.totalorder %s139, %s141
      %p148 = scmp.eq.s32.totalorder %s26, 1
      %p149 = por %p147, %p148
      %p150 = scmp.ne.s32.totalorder %s141, %s142
      %p151 = scmp.eq.s32.totalorder %s26, 0
      %p152 = por %p150, %p151
      %p153 = scmp.ne.s32.totalorder %s141, %s142
      %p154 = scmp.eq.s32.totalorder %s27, 1
      %p155 = por %p153, %p154
      %p157 = scmp.ne.s32.totalorder %s142, %s156
      %p158 = scmp.eq.s32.totalorder %s27, 0
      %p159 = por %p157, %p158
      %s161 = sadd.s32 %s160, 1
      %p164 = scmp.eq.s32.totalorder %s21, 1
      %p165 = scmp.ne.s32.totalorder %s160, %s162
      %p166 = scmp.eq.s32.totalorder %s21, 0
      %p167 = por %p165, %p166
      %p168 = scmp.ne.s32.totalorder %s160, %s162
      %p169 = scmp.eq.s32.totalorder %s26, 1
      %p170 = por %p168, %p169
      %p171 = scmp.ne.s32.totalorder %s162, %s163
      %p172 = scmp.eq.s32.totalorder %s26, 0
      %p173 = por %p171, %p172
      %p174 = scmp.ne.s32.totalorder %s162, %s163
      %p175 = scmp.eq.s32.totalorder %s27, 1
      %p176 = por %p174, %p175
      %p178 = scmp.ne.s32.totalorder %s163, %s177
      %p179 = scmp.eq.s32.totalorder %s27, 0
      %p180 = por %p178, %p179
      %s181 = ssub.s32 %s21, %s28
      %p182 = scmp.eq.s32.totalorder %s181, 0
      %s184 = sadd.s32 %s183, 1
      %s185 = scalar_select %p182, %s183, %s184
      %p188 = pneg %p182
      %p189 = scmp.eq.s32.totalorder %s21, 1
      %p190 = por %p188, %p189
      %p191 = scmp.ne.s32.totalorder %s183, %s186
      %p192 = scmp.eq.s32.totalorder %s21, 0
      %p193 = por %p191, %p192
      %p194 = scmp.ne.s32.totalorder %s183, %s186
      %p195 = scmp.eq.s32.totalorder %s26, 1
      %p196 = por %p194, %p195
      %p197 = scmp.ne.s32.totalorder %s186, %s187
      %p198 = scmp.eq.s32.totalorder %s26, 0
      %p199 = por %p197, %p198
      %p200 = scmp.ne.s32.totalorder %s186, %s187
      %p201 = scmp.eq.s32.totalorder %s27, 1
      %p202 = por %p200, %p201
      %p204 = scmp.ne.s32.totalorder %s187, %s203
      %p205 = scmp.eq.s32.totalorder %s27, 0
      %p206 = por %p204, %p205
      %p207 = scmp.le.s32.totalorder 1, %s21
      %p208 = scmp.lt.s32.totalorder %s21, 3
      %p209 = pnand %p207, %p208
      %p210 = pneg %p209
      // Predicated region
      $region9: #{tpu_custom_call.1} parent=5 // pred_check
        _
      $region10: #{tpu_custom_call.1} parent=5 // pred_check_branch
        %212 = sbr.rel (%p209) target = $region12
      $region11: #{tpu_custom_call.1} parent=5 // pred_region
        %s213 = ssub.s32 %s21, 1
        // Predicated region
        $region13: #{tpu_custom_call.1} parent=11 // pred_check
          %p214 = pneg %p68
        $region14: #{tpu_custom_call.1} parent=11 // pred_check_branch
          %216 = sbr.rel (%p214) target = $region16
        $region15: #{tpu_custom_call.1} parent=11 // pred_region
          %s218 = ssub.s32 10240, 10240
          %219 = vsyncadd [#allocation7], %s218
          %s220 = sshll.u32 [#allocation6], 4
          %s221 = int_to_ptr.vmem [resolvable:$true] %s220
          %226 = dma.hbm_to_vmem [thread:$0]  %s1, 10240, %s221, [#allocation7], 128, 128, 8
        $region16: #{tpu_custom_call.1} parent=11 // pred_fallthru
          _
        // Predicated region
        $region17: #{tpu_custom_call.1} parent=11 // pred_check
          %p227 = pneg %p89
        $region18: #{tpu_custom_call.1} parent=11 // pred_check_branch
          %229 = sbr.rel (%p227) target = $region20
        $region19: #{tpu_custom_call.1} parent=11 // pred_region
          _
        $region20: #{tpu_custom_call.1} parent=11 // pred_fallthru
          _
        // Predicated region
        $region21: #{tpu_custom_call.1} parent=11 // pred_check
          %p230 = pneg %p110
        $region22: #{tpu_custom_call.1} parent=11 // pred_check_branch
          %232 = sbr.rel (%p230) target = $region24
        $region23: #{tpu_custom_call.1} parent=11 // pred_region
          %s234 = ssub.s32 6144, 6144
          %235 = vsyncadd [#allocation7], %s234
          %s236 = sshll.u32 [#allocation8], 4
          %s237 = int_to_ptr.vmem [resolvable:$true] %s236
          %242 = dma.hbm_to_vmem [thread:$0]  %s3, 6144, %s237, [#allocation7], 128, 128, 8
        $region24: #{tpu_custom_call.1} parent=11 // pred_fallthru
          _
        // Predicated region
        $region25: #{tpu_custom_call.1} parent=11 // pred_check
          %p243 = pneg %p131
        $region26: #{tpu_custom_call.1} parent=11 // pred_check_branch
          %245 = sbr.rel (%p243) target = $region28
        $region27: #{tpu_custom_call.1} parent=11 // pred_region
          _
        $region28: #{tpu_custom_call.1} parent=11 // pred_fallthru
          _
        // Predicated region
        $region29: #{tpu_custom_call.1} parent=11 // pred_check
          %p246 = pneg %p152
        $region30: #{tpu_custom_call.1} parent=11 // pred_check_branch
          %248 = sbr.rel (%p246) target = $region32
        $region31: #{tpu_custom_call.1} parent=11 // pred_region
          %s250 = ssub.s32 2048, 2048
          %251 = vsyncadd [#allocation10], %s250
          %s252 = sshll.u32 [#allocation9], 4
          %s253 = int_to_ptr.vmem [resolvable:$true] %s252
          %258 = dma.hbm_to_vmem [thread:$0]  %s5, 2048, %s253, [#allocation10], 128, 128, 8
        $region32: #{tpu_custom_call.1} parent=11 // pred_fallthru
          _
        // Predicated region
        $region33: #{tpu_custom_call.1} parent=11 // pred_check
          %p259 = pneg %p173
        $region34: #{tpu_custom_call.1} parent=11 // pred_check_branch
          %261 = sbr.rel (%p259) target = $region36
        $region35: #{tpu_custom_call.1} parent=11 // pred_region
          _
        $region36: #{tpu_custom_call.1} parent=11 // pred_fallthru
          _
      $region12: #{tpu_custom_call.1} parent=5 // pred_fallthru
        _
      %p262 = scmp.lt.s32.totalorder %s21, 2
      // Predicated region
      $region37: #{tpu_custom_call.1} parent=5 // pred_check
        %p263 = pneg %p262
      $region38: #{tpu_custom_call.1} parent=5 // pred_check_branch
        %265 = sbr.rel (%p263) target = $region40
      $region39: #{tpu_custom_call.1} parent=5 // pred_region
        // Predicated region
        $region41: #{tpu_custom_call.1} parent=39 // pred_check
          %p266 = pneg %p41
        $region42: #{tpu_custom_call.1} parent=39 // pred_check_branch
          %268 = sbr.rel (%p266) target = $region44
        $region43: #{tpu_custom_call.1} parent=39 // pred_region
          %s269 = sand.u32 %s31, 1
          %s270 = scalar_lea.sflag [#allocation4], %s269
          %s271 = sand.u32 %s31, 1
          %s272 = smul.addr %s271, 32
          %s273 = scalar_lea.vmem [#allocation3], %s272
          %s274 = smul.u32 2, %s21
          %s276 = ssub.s32 512, 512
          %277 = vsyncadd %s270, %s276
          %s278 = smul.addr %s274, 2
          %s279 = smul.addr %s278, 128
          %s280 = scalar_lea.hbm %s0, %s279
          %s281 = sshll.u32 %s273, 4
          %s282 = int_to_ptr.vmem [resolvable:$true] %s281
          %287 = dma.hbm_to_vmem [thread:$0]  %s280, 512, %s282, %s270, 128, 128, 8
        $region44: #{tpu_custom_call.1} parent=39 // pred_fallthru
          _
      $region40: #{tpu_custom_call.1} parent=5 // pred_fallthru
        _
      %p288 = scmp.le.s32.totalorder 1, %s21
      %p289 = scmp.lt.s32.totalorder %s21, 3
      %p290 = pnand %p288, %p289
      %p291 = pneg %p290
      // Predicated region
      $region45: #{tpu_custom_call.1} parent=5 // pred_check
        _
      $region46: #{tpu_custom_call.1} parent=5 // pred_check_branch
        %293 = sbr.rel (%p290) target = $region48
      $region47: #{tpu_custom_call.1} parent=5 // pred_region
        %s294 = ssub.s32 %s21, 1
        %s295 = sand.u32 %s34, 1
        %s296 = scalar_lea.sflag [#allocation4], %s295
        %s297 = sand.u32 %s34, 1
        %s298 = smul.addr %s297, 32
        %s299 = scalar_lea.vmem [#allocation3], %s298
        // Predicated region
        $region49: #{tpu_custom_call.1} parent=47 // pred_check
          %p300 = pneg %p47
        $region50: #{tpu_custom_call.1} parent=47 // pred_check_branch
          %302 = sbr.rel (%p300) target = $region52
        $region51: #{tpu_custom_call.1} parent=47 // pred_region
          %303 = dma.done %s296, 512
        $region52: #{tpu_custom_call.1} parent=47 // pred_fallthru
          _
        // Predicated region
        $region53: #{tpu_custom_call.1} parent=47 // pred_check
          %p304 = pneg %p68
        $region54: #{tpu_custom_call.1} parent=47 // pred_check_branch
          %306 = sbr.rel (%p304) target = $region56
        $region55: #{tpu_custom_call.1} parent=47 // pred_region
          %307 = dma.done [#allocation7], 10240
        $region56: #{tpu_custom_call.1} parent=47 // pred_fallthru
          _
        // Predicated region
        $region57: #{tpu_custom_call.1} parent=47 // pred_check
          %p308 = pneg %p110
        $region58: #{tpu_custom_call.1} parent=47 // pred_check_branch
          %310 = sbr.rel (%p308) target = $region60
        $region59: #{tpu_custom_call.1} parent=47 // pred_region
          %311 = dma.done [#allocation7], 6144
        $region60: #{tpu_custom_call.1} parent=47 // pred_fallthru
          _
        // Predicated region
        $region61: #{tpu_custom_call.1} parent=47 // pred_check
          %p312 = pneg %p152
        $region62: #{tpu_custom_call.1} parent=47 // pred_check_branch
          %314 = sbr.rel (%p312) target = $region64
        $region63: #{tpu_custom_call.1} parent=47 // pred_region
          %315 = dma.done [#allocation10], 2048
        $region64: #{tpu_custom_call.1} parent=47 // pred_fallthru
          _
        %s316 = sand.u32 %s34, 1
        %s317 = scalar_lea.sflag [#allocation4], %s316
        %s318 = sand.u32 %s34, 1
        %s319 = smul.addr %s318, 32
        %s320 = scalar_lea.vmem [#allocation3], %s319
        %p321 = pneg %p47
        %p322 = pneg %p44
        %p323 = pneg %p68
        %p324 = pneg %p65
        %p325 = pneg %p89
        %p326 = pneg %p86
        %p327 = pneg %p110
        %p328 = pneg %p107
        %p329 = pneg %p131
        %p330 = pneg %p128
        %p331 = pneg %p152
        %p332 = pneg %p149
        %p333 = pneg %p173
        %p334 = pneg %p170
        %p335 = pneg %p199
        %p336 = pneg %p196
        %s337 = sand.u32 %s186, 1
        %s338 = scalar_lea.sflag [#allocation5], %s337
        %s339 = sand.u32 %s186, 1
        %s340 = smul.addr %s339, 32
        %s341 = scalar_lea.vmem [#allocation11], %s340
        %s342 = smul.u32 2, %s26
        %s343 = smul.u32 2, %s26
        %344 = vst [vmem:[#allocation2] sm:$0xff] 0.0
        %345 = vst [vmem:[#allocation2 + $0x8] sm:$0xff] 0.0
        %346 = vst [vmem:[#allocation2 + $0x20] sm:$0xff] 0.0
        %347 = vst [vmem:[#allocation2 + $0x28] sm:$0xff] 0.0
        %348 = vst [vmem:[#allocation2 + $0x40] sm:$0xff] 0.0
        %349 = vst [vmem:[#allocation2 + $0x48] sm:$0xff] 0.0
        %v350 = vld [vmem:[%s299] sm:$0xff]
        %v351 = vld [vmem:[%s299 + $0x8] sm:$0xff]
        %352 = vst [vmem:[#allocation2 + $0x10] sm:$0xff] %v350
        %353 = vst [vmem:[#allocation2 + $0x18] sm:$0xff] %v351
        %s354 = scalar_lea.vmem %s299, 16 [#allocation3]
        %v355 = vld [vmem:[%s354] sm:$0xff]
        %v356 = vld [vmem:[%s354 + $0x8] sm:$0xff]
        %357 = vst [vmem:[#allocation2 + $0x30] sm:$0xff] %v355
        %358 = vst [vmem:[#allocation2 + $0x38] sm:$0xff] %v356
        %v359 = vld [vmem:[#allocation2 + $0xe] sm:$0xff]
        %v360 = vld [vmem:[#allocation2 + $0x16] sm:$0xff]
        %v361 = vld [vmem:[#allocation2 + $0x1e] sm:$0xff]
        %v362 = vld [vmem:[#allocation2 + $0x26] sm:$0xff]
        %v363 = vld [vmem:[#allocation2 + $0x2e] sm:$0xff]
        %v364 = vld [vmem:[#allocation2 + $0x36] sm:$0xff]
        %v365 = vld [vmem:[#allocation6] sm:$0xff]
        %v366 = vld [vmem:[#allocation6 + $0x8] sm:$0xff]
        %v367 = vld [vmem:[#allocation6 + $0x10] sm:$0xff]
        %v368 = vld [vmem:[#allocation6 + $0x18] sm:$0xff]
        %v369 = vld [vmem:[#allocation6 + $0x20] sm:$0xff]
        %v370 = vld [vmem:[#allocation6 + $0x28] sm:$0xff]
        %v371 = vld [vmem:[#allocation6 + $0x30] sm:$0xff]
        %v372 = vld [vmem:[#allocation6 + $0x38] sm:$0xff]
        %v373 = vld [vmem:[#allocation6 + $0x40] sm:$0xff]
        %v374 = vld [vmem:[#allocation6 + $0x48] sm:$0xff]
        %v375 = vld [vmem:[#allocation6 + $0x50] sm:$0xff]
        %v376 = vld [vmem:[#allocation6 + $0x58] sm:$0xff]
        %v377 = vld [vmem:[#allocation6 + $0x60] sm:$0xff]
        %v378 = vld [vmem:[#allocation6 + $0x68] sm:$0xff]
        %v379 = vld [vmem:[#allocation6 + $0x70] sm:$0xff]
        %v380 = vld [vmem:[#allocation6 + $0x78] sm:$0xff]
        %v381 = vld [vmem:[#allocation2 + $0xf] sm:$0xff]
        %v382 = vld [vmem:[#allocation2 + $0x17] sm:$0xff]
        %v383 = vld [vmem:[#allocation2 + $0x1f] sm:$0xff]
        %v384 = vld [vmem:[#allocation2 + $0x27] sm:$0xff]
        %v385 = vld [vmem:[#allocation2 + $0x2f] sm:$0xff]
        %v386 = vld [vmem:[#allocation2 + $0x37] sm:$0xff]
        %s387 = scalar_lea.vmem [#allocation6], 128
        %v388 = vld [vmem:[%s387] sm:$0xff]
        %v389 = vld [vmem:[%s387 + $0x8] sm:$0xff]
        %v390 = vld [vmem:[%s387 + $0x10] sm:$0xff]
        %v391 = vld [vmem:[%s387 + $0x18] sm:$0xff]
        %v392 = vld [vmem:[%s387 + $0x20] sm:$0xff]
        %v393 = vld [vmem:[%s387 + $0x28] sm:$0xff]
        %v394 = vld [vmem:[%s387 + $0x30] sm:$0xff]
        %v395 = vld [vmem:[%s387 + $0x38] sm:$0xff]
        %v396 = vld [vmem:[%s387 + $0x40] sm:$0xff]
        %v397 = vld [vmem:[%s387 + $0x48] sm:$0xff]
        %v398 = vld [vmem:[%s387 + $0x50] sm:$0xff]
        %v399 = vld [vmem:[%s387 + $0x58] sm:$0xff]
        %v400 = vld [vmem:[%s387 + $0x60] sm:$0xff]
        %v401 = vld [vmem:[%s387 + $0x68] sm:$0xff]
        %v402 = vld [vmem:[%s387 + $0x70] sm:$0xff]
        %v403 = vld [vmem:[%s387 + $0x78] sm:$0xff]
        %404 = vmatprep.subr.mxu0 0.0
        %405 = vmatpush1.msra.mxu0 %v388
        %406 = vmatprep.subr.mxu0 0.0
        %407 = vmatpush1.msra.mxu0 %v389
        %408 = vmatprep.subr.mxu0 0.0
        %409 = vmatpush1.msra.mxu0 %v390
        %410 = vmatprep.subr.mxu0 0.0
        %411 = vmatpush1.msra.mxu0 %v391
        %412 = vmatprep.subr.mxu0 0.0
        %413 = vmatpush1.msra.mxu0 %v392
        %414 = vmatprep.subr.mxu0 0.0
        %415 = vmatpush1.msra.mxu0 %v393
        %416 = vmatprep.subr.mxu0 0.0
        %417 = vmatpush1.msra.mxu0 %v394
        %418 = vmatprep.subr.mxu0 0.0
        %419 = vmatpush1.msra.mxu0 %v395
        %420 = vmatprep.subr.mxu0 0.0
        %421 = vmatpush1.msra.mxu0 %v396
        %422 = vmatprep.subr.mxu0 0.0
        %423 = vmatpush1.msra.mxu0 %v397
        %424 = vmatprep.subr.mxu0 0.0
        %425 = vmatpush1.msra.mxu0 %v398
        %426 = vmatprep.subr.mxu0 0.0
        %427 = vmatpush1.msra.mxu0 %v399
        %428 = vmatprep.subr.mxu0 0.0
        %429 = vmatpush1.msra.mxu0 %v400
        %430 = vmatprep.subr.mxu0 0.0
        %431 = vmatpush1.msra.mxu0 %v401
        %432 = vmatprep.subr.mxu0 0.0
        %433 = vmatpush1.msra.mxu0 %v402
        %434 = vmatprep.subr.mxu0 0.0
        %435 = vmatpush1.msra.mxu0 %v403
        %436 = vmatprep.subr.mxu0 0.0
        %437 = vmatpush1.msra.mxu0 0.0
        %438 = vmatprep.subr.mxu0 0.0
        %439 = vmatpush1.msra.mxu0 0.0
        %440 = vmatprep.subr.mxu0 0.0
        %441 = vmatpush1.msra.mxu0 0.0
        %442 = vmatprep.subr.mxu0 0.0
        %443 = vmatpush1.msra.mxu0 0.0
        %444 = vmatprep.subr.mxu0 0.0
        %445 = vmatpush1.msra.mxu0 0.0
        %446 = vmatprep.subr.mxu0 0.0
        %447 = vmatpush1.msra.mxu0 0.0
        %448 = vmatprep.subr.mxu0 0.0
        %449 = vmatpush1.msra.mxu0 0.0
        %450 = vmatprep.subr.mxu0 0.0
        %451 = vmatpush1.msra.mxu0 0.0
        %452 = vmatprep.subr.mxu0 0.0
        %453 = vmatpush1.msra.mxu0 0.0
        %454 = vmatprep.subr.mxu0 0.0
        %455 = vmatpush1.msra.mxu0 0.0
        %456 = vmatprep.subr.mxu0 0.0
        %457 = vmatpush1.msra.mxu0 0.0
        %458 = vmatprep.subr.mxu0 0.0
        %459 = vmatpush1.msra.mxu0 0.0
        %460 = vmatprep.subr.mxu0 0.0
        %461 = vmatpush1.msra.mxu0 0.0
        %462 = vmatprep.subr.mxu0 0.0
        %463 = vmatpush1.msra.mxu0 0.0
        %464 = vmatprep.subr.mxu0 0.0
        %465 = vmatpush1.msra.mxu0 0.0
        %466 = vmatprep.subr.mxu0 0.0
        %467 = vmatpush1.msra.mxu0 0.0
        %468 = vmatprep.mubr.f32.mxu0 0.0
        %469 = vmatmul.mubr.f32.gmra.mrb[0].mxu0 %v381
        %v470 = vpop.f32.mrb[0].mxu0
        %v471 = vadd.f32 0.0, %v470
        %v472 = vpop.f32.mrb[0].mxu0
        %473 = vmatprep.mubr.f32.mxu0 0.0
        %474 = vmatmul.mubr.f32.gmra.mrb[0].mxu0 %v382
        %v475 = vpop.f32.mrb[0].mxu0
        %v476 = vadd.f32 0.0, %v475
        %v477 = vpop.f32.mrb[0].mxu0
        %478 = vmatprep.mubr.f32.mxu0 0.0
        %479 = vmatmul.mubr.f32.gmra.mrb[0].mxu0 %v383
        %v480 = vpop.f32.mrb[0].mxu0
        %v481 = vpop.f32.mrb[0].mxu0
        %482 = vmatprep.mubr.f32.mxu0 0.0
        %483 = vmatmul.mubr.f32.gmra.mrb[0].mxu0 %v384
        %v484 = vpop.f32.mrb[0].mxu0
        %v485 = vpop.f32.mrb[0].mxu0
        %486 = vmatprep.mubr.f32.mxu0 0.0
        %487 = vmatmul.mubr.f32.gmra.mrb[0].mxu0 %v385
        %v488 = vpop.f32.mrb[0].mxu0
        %v489 = vadd.f32 0.0, %v488
        %v490 = vpop.f32.mrb[0].mxu0
        %491 = vmatprep.mubr.f32.mxu0 0.0
        %492 = vmatmul.mubr.f32.gmra.mrb[0].mxu0 %v386
        %v493 = vpop.f32.mrb[0].mxu0
        %v494 = vadd.f32 0.0, %v493
        %v495 = vpop.f32.mrb[0].mxu0
        %496 = vdwg.mxu0
        %497 = vmatprep.subr.mxu0 0.0
        %498 = vmatpush1.msra.mxu0 %v365
        %499 = vmatprep.subr.mxu0 0.0
        %500 = vmatpush1.msra.mxu0 %v366
        %501 = vmatprep.subr.mxu0 0.0
        %502 = vmatpush1.msra.mxu0 %v367
        %503 = vmatprep.subr.mxu0 0.0
        %504 = vmatpush1.msra.mxu0 %v368
        %505 = vmatprep.subr.mxu0 0.0
        %506 = vmatpush1.msra.mxu0 %v369
        %507 = vmatprep.subr.mxu0 0.0
        %508 = vmatpush1.msra.mxu0 %v370
        %509 = vmatprep.subr.mxu0 0.0
        %510 = vmatpush1.msra.mxu0 %v371
        %511 = vmatprep.subr.mxu0 0.0
        %512 = vmatpush1.msra.mxu0 %v372
        %513 = vmatprep.subr.mxu0 0.0
        %514 = vmatpush1.msra.mxu0 %v373
        %515 = vmatprep.subr.mxu0 0.0
        %516 = vmatpush1.msra.mxu0 %v374
        %517 = vmatprep.subr.mxu0 0.0
        %518 = vmatpush1.msra.mxu0 %v375
        %519 = vmatprep.subr.mxu0 0.0
        %520 = vmatpush1.msra.mxu0 %v376
        %521 = vmatprep.subr.mxu0 0.0
        %522 = vmatpush1.msra.mxu0 %v377
        %523 = vmatprep.subr.mxu0 0.0
        %524 = vmatpush1.msra.mxu0 %v378
        %525 = vmatprep.subr.mxu0 0.0
        %526 = vmatpush1.msra.mxu0 %v379
        %527 = vmatprep.subr.mxu0 0.0
        %528 = vmatpush1.msra.mxu0 %v380
        %529 = vmatprep.subr.mxu0 0.0
        %530 = vmatpush1.msra.mxu0 0.0
        %531 = vmatprep.subr.mxu0 0.0
        %532 = vmatpush1.msra.mxu0 0.0
        %533 = vmatprep.subr.mxu0 0.0
        %534 = vmatpush1.msra.mxu0 0.0
        %535 = vmatprep.subr.mxu0 0.0
        %536 = vmatpush1.msra.mxu0 0.0
        %537 = vmatprep.subr.mxu0 0.0
        %538 = vmatpush1.msra.mxu0 0.0
        %539 = vmatprep.subr.mxu0 0.0
        %540 = vmatpush1.msra.mxu0 0.0
        %541 = vmatprep.subr.mxu0 0.0
        %542 = vmatpush1.msra.mxu0 0.0
        %543 = vmatprep.subr.mxu0 0.0
        %544 = vmatpush1.msra.mxu0 0.0
        %545 = vmatprep.subr.mxu0 0.0
        %546 = vmatpush1.msra.mxu0 0.0
        %547 = vmatprep.subr.mxu0 0.0
        %548 = vmatpush1.msra.mxu0 0.0
        %549 = vmatprep.subr.mxu0 0.0
        %550 = vmatpush1.msra.mxu0 0.0
        %551 = vmatprep.subr.mxu0 0.0
        %552 = vmatpush1.msra.mxu0 0.0
        %553 = vmatprep.subr.mxu0 0.0
        %554 = vmatpush1.msra.mxu0 0.0
        %555 = vmatprep.subr.mxu0 0.0
        %556 = vmatpush1.msra.mxu0 0.0
        %557 = vmatprep.subr.mxu0 0.0
        %558 = vmatpush1.msra.mxu0 0.0
        %559 = vmatprep.subr.mxu0 0.0
        %560 = vmatpush1.msra.mxu0 0.0
        %561 = vmatprep.mubr.f32.mxu0 0.0
        %562 = vmatmul.mubr.f32.gmra.mrb[0].mxu0 %v359
        %v563 = vpop.f32.mrb[0].mxu0
        %v564 = vadd.f32 %v471, %v563
        %v565 = vpop.f32.mrb[0].mxu0
        %566 = vmatprep.mubr.f32.mxu0 0.0
        %567 = vmatmul.mubr.f32.gmra.mrb[0].mxu0 %v360
        %v568 = vpop.f32.mrb[0].mxu0
        %v569 = vadd.f32 %v476, %v568
        %v570 = vpop.f32.mrb[0].mxu0
        %571 = vmatprep.mubr.f32.mxu0 0.0
        %572 = vmatmul.mubr.f32.gmra.mrb[0].mxu0 %v361
        %v573 = vpop.f32.mrb[0].mxu0
        %v574 = vpop.f32.mrb[0].mxu0
        %575 = vmatprep.mubr.f32.mxu0 0.0
        %576 = vmatmul.mubr.f32.gmra.mrb[0].mxu0 %v362
        %v577 = vpop.f32.mrb[0].mxu0
        %v578 = vpop.f32.mrb[0].mxu0
        %579 = vmatprep.mubr.f32.mxu0 0.0
        %580 = vmatmul.mubr.f32.gmra.mrb[0].mxu0 %v363
        %v581 = vpop.f32.mrb[0].mxu0
        %v582 = vadd.f32 %v489, %v581
        %v583 = vpop.f32.mrb[0].mxu0
        %584 = vmatprep.mubr.f32.mxu0 0.0
        %585 = vmatmul.mubr.f32.gmra.mrb[0].mxu0 %v364
        %v586 = vpop.f32.mrb[0].mxu0
        %v587 = vadd.f32 %v494, %v586
        %v588 = vpop.f32.mrb[0].mxu0
        %589 = vdwg.mxu0
        %v590 = vld [vmem:[#allocation2 + $0x10] sm:$0xff]
        %v591 = vld [vmem:[#allocation2 + $0x18] sm:$0xff]
        %v592 = vld [vmem:[#allocation2 + $0x20] sm:$0xff]
        %v593 = vld [vmem:[#allocation2 + $0x28] sm:$0xff]
        %v594 = vld [vmem:[#allocation2 + $0x30] sm:$0xff]
        %v595 = vld [vmem:[#allocation2 + $0x38] sm:$0xff]
        %s596 = scalar_lea.vmem [#allocation6], 256
        %v597 = vld [vmem:[%s596] sm:$0xff]
        %v598 = vld [vmem:[%s596 + $0x8] sm:$0xff]
        %v599 = vld [vmem:[%s596 + $0x10] sm:$0xff]
        %v600 = vld [vmem:[%s596 + $0x18] sm:$0xff]
        %v601 = vld [vmem:[%s596 + $0x20] sm:$0xff]
        %v602 = vld [vmem:[%s596 + $0x28] sm:$0xff]
        %v603 = vld [vmem:[%s596 + $0x30] sm:$0xff]
        %v604 = vld [vmem:[%s596 + $0x38] sm:$0xff]
        %v605 = vld [vmem:[%s596 + $0x40] sm:$0xff]
        %v606 = vld [vmem:[%s596 + $0x48] sm:$0xff]
        %v607 = vld [vmem:[%s596 + $0x50] sm:$0xff]
        %v608 = vld [vmem:[%s596 + $0x58] sm:$0xff]
        %v609 = vld [vmem:[%s596 + $0x60] sm:$0xff]
        %v610 = vld [vmem:[%s596 + $0x68] sm:$0xff]
        %v611 = vld [vmem:[%s596 + $0x70] sm:$0xff]
        %v612 = vld [vmem:[%s596 + $0x78] sm:$0xff]
        %613 = vmatprep.subr.mxu0 0.0
        %614 = vmatpush1.msra.mxu0 %v597
        %615 = vmatprep.subr.mxu0 0.0
        %616 = vmatpush1.msra.mxu0 %v598
        %617 = vmatprep.subr.mxu0 0.0
        %618 = vmatpush1.msra.mxu0 %v599
        %619 = vmatprep.subr.mxu0 0.0
        %620 = vmatpush1.msra.mxu0 %v600
        %621 = vmatprep.subr.mxu0 0.0
        %622 = vmatpush1.msra.mxu0 %v601
        %623 = vmatprep.subr.mxu0 0.0
        %624 = vmatpush1.msra.mxu0 %v602
        %625 = vmatprep.subr.mxu0 0.0
        %626 = vmatpush1.msra.mxu0 %v603
        %627 = vmatprep.subr.mxu0 0.0
        %628 = vmatpush1.msra.mxu0 %v604
        %629 = vmatprep.subr.mxu0 0.0
        %630 = vmatpush1.msra.mxu0 %v605
        %631 = vmatprep.subr.mxu0 0.0
        %632 = vmatpush1.msra.mxu0 %v606
        %633 = vmatprep.subr.mxu0 0.0
        %634 = vmatpush1.msra.mxu0 %v607
        %635 = vmatprep.subr.mxu0 0.0
        %636 = vmatpush1.msra.mxu0 %v608
        %637 = vmatprep.subr.mxu0 0.0
        %638 = vmatpush1.msra.mxu0 %v609
        %639 = vmatprep.subr.mxu0 0.0
        %640 = vmatpush1.msra.mxu0 %v610
        %641 = vmatprep.subr.mxu0 0.0
        %642 = vmatpush1.msra.mxu0 %v611
        %643 = vmatprep.subr.mxu0 0.0
        %644 = vmatpush1.msra.mxu0 %v612
        %645 = vmatprep.subr.mxu0 0.0
        %646 = vmatpush1.msra.mxu0 0.0
        %647 = vmatprep.subr.mxu0 0.0
        %648 = vmatpush1.msra.mxu0 0.0
        %649 = vmatprep.subr.mxu0 0.0
        %650 = vmatpush1.msra.mxu0 0.0
        %651 = vmatprep.subr.mxu0 0.0
        %652 = vmatpush1.msra.mxu0 0.0
        %653 = vmatprep.subr.mxu0 0.0
        %654 = vmatpush1.msra.mxu0 0.0
        %655 = vmatprep.subr.mxu0 0.0
        %656 = vmatpush1.msra.mxu0 0.0
        %657 = vmatprep.subr.mxu0 0.0
        %658 = vmatpush1.msra.mxu0 0.0
        %659 = vmatprep.subr.mxu0 0.0
        %660 = vmatpush1.msra.mxu0 0.0
        %661 = vmatprep.subr.mxu0 0.0
        %662 = vmatpush1.msra.mxu0 0.0
        %663 = vmatprep.subr.mxu0 0.0
        %664 = vmatpush1.msra.mxu0 0.0
        %665 = vmatprep.subr.mxu0 0.0
        %666 = vmatpush1.msra.mxu0 0.0
        %667 = vmatprep.subr.mxu0 0.0
        %668 = vmatpush1.msra.mxu0 0.0
        %669 = vmatprep.subr.mxu0 0.0
        %670 = vmatpush1.msra.mxu0 0.0
        %671 = vmatprep.subr.mxu0 0.0
        %672 = vmatpush1.msra.mxu0 0.0
        %673 = vmatprep.subr.mxu0 0.0
        %674 = vmatpush1.msra.mxu0 0.0
        %675 = vmatprep.subr.mxu0 0.0
        %676 = vmatpush1.msra.mxu0 0.0
        %677 = vmatprep.mubr.f32.mxu0 0.0
        %678 = vmatmul.mubr.f32.gmra.mrb[0].mxu0 %v590
        %v679 = vpop.f32.mrb[0].mxu0
        %v680 = vadd.f32 0.0, %v679
        %v681 = vpop.f32.mrb[0].mxu0
        %682 = vmatprep.mubr.f32.mxu0 0.0
        %683 = vmatmul.mubr.f32.gmra.mrb[0].mxu0 %v591
        %v684 = vpop.f32.mrb[0].mxu0
        %v685 = vadd.f32 0.0, %v684
        %v686 = vpop.f32.mrb[0].mxu0
        %687 = vmatprep.mubr.f32.mxu0 0.0
        %688 = vmatmul.mubr.f32.gmra.mrb[0].mxu0 %v592
        %v689 = vpop.f32.mrb[0].mxu0
        %v690 = vpop.f32.mrb[0].mxu0
        %691 = vmatprep.mubr.f32.mxu0 0.0
        %692 = vmatmul.mubr.f32.gmra.mrb[0].mxu0 %v593
        %v693 = vpop.f32.mrb[0].mxu0
        %v694 = vpop.f32.mrb[0].mxu0
        %695 = vmatprep.mubr.f32.mxu0 0.0
        %696 = vmatmul.mubr.f32.gmra.mrb[0].mxu0 %v594
        %v697 = vpop.f32.mrb[0].mxu0
        %v698 = vadd.f32 0.0, %v697
        %v699 = vpop.f32.mrb[0].mxu0
        %700 = vmatprep.mubr.f32.mxu0 0.0
        %701 = vmatmul.mubr.f32.gmra.mrb[0].mxu0 %v595
        %v702 = vpop.f32.mrb[0].mxu0
        %v703 = vadd.f32 0.0, %v702
        %v704 = vpop.f32.mrb[0].mxu0
        %705 = vdwg.mxu0
        %v706 = vadd.f32 %v564, %v680
        %v707 = vadd.f32 %v569, %v685
        %v708 = vadd.f32 %v582, %v698
        %v709 = vadd.f32 %v587, %v703
        %v710 = vld [vmem:[#allocation2 + $0x11] sm:$0xff]
        %v711 = vld [vmem:[#allocation2 + $0x19] sm:$0xff]
        %v712 = vld [vmem:[#allocation2 + $0x21] sm:$0xff]
        %v713 = vld [vmem:[#allocation2 + $0x29] sm:$0xff]
        %v714 = vld [vmem:[#allocation2 + $0x31] sm:$0xff]
        %v715 = vld [vmem:[#allocation2 + $0x39] sm:$0xff]
        %s716 = scalar_lea.vmem [#allocation6], 384
        %v717 = vld [vmem:[%s716] sm:$0xff]
        %v718 = vld [vmem:[%s716 + $0x8] sm:$0xff]
        %v719 = vld [vmem:[%s716 + $0x10] sm:$0xff]
        %v720 = vld [vmem:[%s716 + $0x18] sm:$0xff]
        %v721 = vld [vmem:[%s716 + $0x20] sm:$0xff]
        %v722 = vld [vmem:[%s716 + $0x28] sm:$0xff]
        %v723 = vld [vmem:[%s716 + $0x30] sm:$0xff]
        %v724 = vld [vmem:[%s716 + $0x38] sm:$0xff]
        %v725 = vld [vmem:[%s716 + $0x40] sm:$0xff]
        %v726 = vld [vmem:[%s716 + $0x48] sm:$0xff]
        %v727 = vld [vmem:[%s716 + $0x50] sm:$0xff]
        %v728 = vld [vmem:[%s716 + $0x58] sm:$0xff]
        %v729 = vld [vmem:[%s716 + $0x60] sm:$0xff]
        %v730 = vld [vmem:[%s716 + $0x68] sm:$0xff]
        %v731 = vld [vmem:[%s716 + $0x70] sm:$0xff]
        %v732 = vld [vmem:[%s716 + $0x78] sm:$0xff]
        %733 = vmatprep.subr.mxu0 0.0
        %734 = vmatpush1.msra.mxu0 %v717
        %735 = vmatprep.subr.mxu0 0.0
        %736 = vmatpush1.msra.mxu0 %v718
        %737 = vmatprep.subr.mxu0 0.0
        %738 = vmatpush1.msra.mxu0 %v719
        %739 = vmatprep.subr.mxu0 0.0
        %740 = vmatpush1.msra.mxu0 %v720
        %741 = vmatprep.subr.mxu0 0.0
        %742 = vmatpush1.msra.mxu0 %v721
        %743 = vmatprep.subr.mxu0 0.0
        %744 = vmatpush1.msra.mxu0 %v722
        %745 = vmatprep.subr.mxu0 0.0
        %746 = vmatpush1.msra.mxu0 %v723
        %747 = vmatprep.subr.mxu0 0.0
        %748 = vmatpush1.msra.mxu0 %v724
        %749 = vmatprep.subr.mxu0 0.0
        %750 = vmatpush1.msra.mxu0 %v725
        %751 = vmatprep.subr.mxu0 0.0
        %752 = vmatpush1.msra.mxu0 %v726
        %753 = vmatprep.subr.mxu0 0.0
        %754 = vmatpush1.msra.mxu0 %v727
        %755 = vmatprep.subr.mxu0 0.0
        %756 = vmatpush1.msra.mxu0 %v728
        %757 = vmatprep.subr.mxu0 0.0
        %758 = vmatpush1.msra.mxu0 %v729
        %759 = vmatprep.subr.mxu0 0.0
        %760 = vmatpush1.msra.mxu0 %v730
        %761 = vmatprep.subr.mxu0 0.0
        %762 = vmatpush1.msra.mxu0 %v731
        %763 = vmatprep.subr.mxu0 0.0
        %764 = vmatpush1.msra.mxu0 %v732
        %765 = vmatprep.subr.mxu0 0.0
        %766 = vmatpush1.msra.mxu0 0.0
        %767 = vmatprep.subr.mxu0 0.0
        %768 = vmatpush1.msra.mxu0 0.0
        %769 = vmatprep.subr.mxu0 0.0
        %770 = vmatpush1.msra.mxu0 0.0
        %771 = vmatprep.subr.mxu0 0.0
        %772 = vmatpush1.msra.mxu0 0.0
        %773 = vmatprep.subr.mxu0 0.0
        %774 = vmatpush1.msra.mxu0 0.0
        %775 = vmatprep.subr.mxu0 0.0
        %776 = vmatpush1.msra.mxu0 0.0
        %777 = vmatprep.subr.mxu0 0.0
        %778 = vmatpush1.msra.mxu0 0.0
        %779 = vmatprep.subr.mxu0 0.0
        %780 = vmatpush1.msra.mxu0 0.0
        %781 = vmatprep.subr.mxu0 0.0
        %782 = vmatpush1.msra.mxu0 0.0
        %783 = vmatprep.subr.mxu0 0.0
        %784 = vmatpush1.msra.mxu0 0.0
        %785 = vmatprep.subr.mxu0 0.0
        %786 = vmatpush1.msra.mxu0 0.0
        %787 = vmatprep.subr.mxu0 0.0
        %788 = vmatpush1.msra.mxu0 0.0
        %789 = vmatprep.subr.mxu0 0.0
        %790 = vmatpush1.msra.mxu0 0.0
        %791 = vmatprep.subr.mxu0 0.0
        %792 = vmatpush1.msra.mxu0 0.0
        %793 = vmatprep.subr.mxu0 0.0
        %794 = vmatpush1.msra.mxu0 0.0
        %795 = vmatprep.subr.mxu0 0.0
        %796 = vmatpush1.msra.mxu0 0.0
        %797 = vmatprep.mubr.f32.mxu0 0.0
        %798 = vmatmul.mubr.f32.gmra.mrb[0].mxu0 %v710
        %v799 = vpop.f32.mrb[0].mxu0
        %v800 = vadd.f32 0.0, %v799
        %v801 = vpop.f32.mrb[0].mxu0
        %802 = vmatprep.mubr.f32.mxu0 0.0
        %803 = vmatmul.mubr.f32.gmra.mrb[0].mxu0 %v711
        %v804 = vpop.f32.mrb[0].mxu0
        %v805 = vadd.f32 0.0, %v804
        %v806 = vpop.f32.mrb[0].mxu0
        %807 = vmatprep.mubr.f32.mxu0 0.0
        %808 = vmatmul.mubr.f32.gmra.mrb[0].mxu0 %v712
        %v809 = vpop.f32.mrb[0].mxu0
        %v810 = vpop.f32.mrb[0].mxu0
        %811 = vmatprep.mubr.f32.mxu0 0.0
        %812 = vmatmul.mubr.f32.gmra.mrb[0].mxu0 %v713
        %v813 = vpop.f32.mrb[0].mxu0
        %v814 = vpop.f32.mrb[0].mxu0
        %815 = vmatprep.mubr.f32.mxu0 0.0
        %816 = vmatmul.mubr.f32.gmra.mrb[0].mxu0 %v714
        %v817 = vpop.f32.mrb[0].mxu0
        %v818 = vadd.f32 0.0, %v817
        %v819 = vpop.f32.mrb[0].mxu0
        %820 = vmatprep.mubr.f32.mxu0 0.0
        %821 = vmatmul.mubr.f32.gmra.mrb[0].mxu0 %v715
        %v822 = vpop.f32.mrb[0].mxu0
        %v823 = vadd.f32 0.0, %v822
        %v824 = vpop.f32.mrb[0].mxu0
        %825 = vdwg.mxu0
        %v826 = vadd.f32 %v706, %v800
        %v827 = vadd.f32 %v707, %v805
        %v828 = vadd.f32 %v708, %v818
        %v829 = vadd.f32 %v709, %v823
        %v830 = vld [vmem:[#allocation2 + $0x12] sm:$0xff]
        %v831 = vld [vmem:[#allocation2 + $0x1a] sm:$0xff]
        %v832 = vld [vmem:[#allocation2 + $0x22] sm:$0xff]
        %v833 = vld [vmem:[#allocation2 + $0x2a] sm:$0xff]
        %v834 = vld [vmem:[#allocation2 + $0x32] sm:$0xff]
        %v835 = vld [vmem:[#allocation2 + $0x3a] sm:$0xff]
        %s836 = scalar_lea.vmem [#allocation6], 512
        %v837 = vld [vmem:[%s836] sm:$0xff]
        %v838 = vld [vmem:[%s836 + $0x8] sm:$0xff]
        %v839 = vld [vmem:[%s836 + $0x10] sm:$0xff]
        %v840 = vld [vmem:[%s836 + $0x18] sm:$0xff]
        %v841 = vld [vmem:[%s836 + $0x20] sm:$0xff]
        %v842 = vld [vmem:[%s836 + $0x28] sm:$0xff]
        %v843 = vld [vmem:[%s836 + $0x30] sm:$0xff]
        %v844 = vld [vmem:[%s836 + $0x38] sm:$0xff]
        %v845 = vld [vmem:[%s836 + $0x40] sm:$0xff]
        %v846 = vld [vmem:[%s836 + $0x48] sm:$0xff]
        %v847 = vld [vmem:[%s836 + $0x50] sm:$0xff]
        %v848 = vld [vmem:[%s836 + $0x58] sm:$0xff]
        %v849 = vld [vmem:[%s836 + $0x60] sm:$0xff]
        %v850 = vld [vmem:[%s836 + $0x68] sm:$0xff]
        %v851 = vld [vmem:[%s836 + $0x70] sm:$0xff]
        %v852 = vld [vmem:[%s836 + $0x78] sm:$0xff]
        %853 = vmatprep.subr.mxu0 0.0
        %854 = vmatpush1.msra.mxu0 %v837
        %855 = vmatprep.subr.mxu0 0.0
        %856 = vmatpush1.msra.mxu0 %v838
        %857 = vmatprep.subr.mxu0 0.0
        %858 = vmatpush1.msra.mxu0 %v839
        %859 = vmatprep.subr.mxu0 0.0
        %860 = vmatpush1.msra.mxu0 %v840
        %861 = vmatprep.subr.mxu0 0.0
        %862 = vmatpush1.msra.mxu0 %v841
        %863 = vmatprep.subr.mxu0 0.0
        %864 = vmatpush1.msra.mxu0 %v842
        %865 = vmatprep.subr.mxu0 0.0
        %866 = vmatpush1.msra.mxu0 %v843
        %867 = vmatprep.subr.mxu0 0.0
        %868 = vmatpush1.msra.mxu0 %v844
        %869 = vmatprep.subr.mxu0 0.0
        %870 = vmatpush1.msra.mxu0 %v845
        %871 = vmatprep.subr.mxu0 0.0
        %872 = vmatpush1.msra.mxu0 %v846
        %873 = vmatprep.subr.mxu0 0.0
        %874 = vmatpush1.msra.mxu0 %v847
        %875 = vmatprep.subr.mxu0 0.0
        %876 = vmatpush1.msra.mxu0 %v848
        %877 = vmatprep.subr.mxu0 0.0
        %878 = vmatpush1.msra.mxu0 %v849
        %879 = vmatprep.subr.mxu0 0.0
        %880 = vmatpush1.msra.mxu0 %v850
        %881 = vmatprep.subr.mxu0 0.0
        %882 = vmatpush1.msra.mxu0 %v851
        %883 = vmatprep.subr.mxu0 0.0
        %884 = vmatpush1.msra.mxu0 %v852
        %885 = vmatprep.subr.mxu0 0.0
        %886 = vmatpush1.msra.mxu0 0.0
        %887 = vmatprep.subr.mxu0 0.0
        %888 = vmatpush1.msra.mxu0 0.0
        %889 = vmatprep.subr.mxu0 0.0
        %890 = vmatpush1.msra.mxu0 0.0
        %891 = vmatprep.subr.mxu0 0.0
        %892 = vmatpush1.msra.mxu0 0.0
        %893 = vmatprep.subr.mxu0 0.0
        %894 = vmatpush1.msra.mxu0 0.0
        %895 = vmatprep.subr.mxu0 0.0
        %896 = vmatpush1.msra.mxu0 0.0
        %897 = vmatprep.subr.mxu0 0.0
        %898 = vmatpush1.msra.mxu0 0.0
        %899 = vmatprep.subr.mxu0 0.0
        %900 = vmatpush1.msra.mxu0 0.0
        %901 = vmatprep.subr.mxu0 0.0
        %902 = vmatpush1.msra.mxu0 0.0
        %903 = vmatprep.subr.mxu0 0.0
        %904 = vmatpush1.msra.mxu0 0.0
        %905 = vmatprep.subr.mxu0 0.0
        %906 = vmatpush1.msra.mxu0 0.0
        %907 = vmatprep.subr.mxu0 0.0
        %908 = vmatpush1.msra.mxu0 0.0
        %909 = vmatprep.subr.mxu0 0.0
        %910 = vmatpush1.msra.mxu0 0.0
        %911 = vmatprep.subr.mxu0 0.0
        %912 = vmatpush1.msra.mxu0 0.0
        %913 = vmatprep.subr.mxu0 0.0
        %914 = vmatpush1.msra.mxu0 0.0
        %915 = vmatprep.subr.mxu0 0.0
        %916 = vmatpush1.msra.mxu0 0.0
        %917 = vmatprep.mubr.f32.mxu0 0.0
        %918 = vmatmul.mubr.f32.gmra.mrb[0].mxu0 %v830
        %v919 = vpop.f32.mrb[0].mxu0
        %v920 = vadd.f32 0.0, %v919
        %v921 = vpop.f32.mrb[0].mxu0
        %922 = vmatprep.mubr.f32.mxu0 0.0
        %923 = vmatmul.mubr.f32.gmra.mrb[0].mxu0 %v831
        %v924 = vpop.f32.mrb[0].mxu0
        %v925 = vadd.f32 0.0, %v924
        %v926 = vpop.f32.mrb[0].mxu0
        %927 = vmatprep.mubr.f32.mxu0 0.0
        %928 = vmatmul.mubr.f32.gmra.mrb[0].mxu0 %v832
        %v929 = vpop.f32.mrb[0].mxu0
        %v930 = vpop.f32.mrb[0].mxu0
        %931 = vmatprep.mubr.f32.mxu0 0.0
        %932 = vmatmul.mubr.f32.gmra.mrb[0].mxu0 %v833
        %v933 = vpop.f32.mrb[0].mxu0
        %v934 = vpop.f32.mrb[0].mxu0
        %935 = vmatprep.mubr.f32.mxu0 0.0
        %936 = vmatmul.mubr.f32.gmra.mrb[0].mxu0 %v834
        %v937 = vpop.f32.mrb[0].mxu0
        %v938 = vadd.f32 0.0, %v937
        %v939 = vpop.f32.mrb[0].mxu0
        %940 = vmatprep.mubr.f32.mxu0 0.0
        %941 = vmatmul.mubr.f32.gmra.mrb[0].mxu0 %v835
        %v942 = vpop.f32.mrb[0].mxu0
        %v943 = vadd.f32 0.0, %v942
        %v944 = vpop.f32.mrb[0].mxu0
        %945 = vdwg.mxu0
        %v946 = vadd.f32 %v826, %v920
        %v947 = vadd.f32 %v827, %v925
        %v948 = vadd.f32 %v828, %v938
        %v949 = vadd.f32 %v829, %v943
        %v950 = vld [vmem:[%s2] sm:$0x1]
        %v952 = vlaneseq
        %v953 = vshrl.u32 %v952, 7
        %v954 = vsub.s32 0, %v953
        %v955 = vrot.slane %v950, %v954
        %v957 = vadd.f32 %v946, %v955
        %v958 = vadd.f32 %v947, %v955
        %v959 = vadd.f32 %v948, %v955
        %v960 = vadd.f32 %v949, %v955
        %v961 = vmax.f32 %v957, 0.0
        %v962 = vmax.f32 %v958, 0.0
        %v963 = vmax.f32 %v959, 0.0
        %v964 = vmax.f32 %v960, 0.0
        %965 = vst [vmem:[#allocation2 + $0x10] sm:$0xff] %v961
        %966 = vst [vmem:[#allocation2 + $0x18] sm:$0xff] %v962
        %967 = vst [vmem:[#allocation2 + $0x30] sm:$0xff] %v963
        %968 = vst [vmem:[#allocation2 + $0x38] sm:$0xff] %v964
        %v969 = vld [vmem:[#allocation2 + $0xf] sm:$0xff]
        %v970 = vld [vmem:[#allocation2 + $0x17] sm:$0xff]
        %v971 = vld [vmem:[#allocation2 + $0x1f] sm:$0xff]
        %v972 = vld [vmem:[#allocation2 + $0x27] sm:$0xff]
        %v973 = vld [vmem:[#allocation2 + $0x2f] sm:$0xff]
        %v974 = vld [vmem:[#allocation2 + $0x37] sm:$0xff]
        %v975 = vld [vmem:[#allocation8] sm:$0xff]
        %v976 = vld [vmem:[#allocation8 + $0x8] sm:$0xff]
        %v977 = vld [vmem:[#allocation8 + $0x10] sm:$0xff]
        %v978 = vld [vmem:[#allocation8 + $0x18] sm:$0xff]
        %v979 = vld [vmem:[#allocation8 + $0x20] sm:$0xff]
        %v980 = vld [vmem:[#allocation8 + $0x28] sm:$0xff]
        %v981 = vld [vmem:[#allocation8 + $0x30] sm:$0xff]
        %v982 = vld [vmem:[#allocation8 + $0x38] sm:$0xff]
        %v983 = vld [vmem:[#allocation8 + $0x40] sm:$0xff]
        %v984 = vld [vmem:[#allocation8 + $0x48] sm:$0xff]
        %v985 = vld [vmem:[#allocation8 + $0x50] sm:$0xff]
        %v986 = vld [vmem:[#allocation8 + $0x58] sm:$0xff]
        %v987 = vld [vmem:[#allocation8 + $0x60] sm:$0xff]
        %v988 = vld [vmem:[#allocation8 + $0x68] sm:$0xff]
        %v989 = vld [vmem:[#allocation8 + $0x70] sm:$0xff]
        %v990 = vld [vmem:[#allocation8 + $0x78] sm:$0xff]
        %v991 = vld [vmem:[#allocation2 + $0x10] sm:$0xff]
        %v992 = vld [vmem:[#allocation2 + $0x18] sm:$0xff]
        %v993 = vld [vmem:[#allocation2 + $0x20] sm:$0xff]
        %v994 = vld [vmem:[#allocation2 + $0x28] sm:$0xff]
        %v995 = vld [vmem:[#allocation2 + $0x30] sm:$0xff]
        %v996 = vld [vmem:[#allocation2 + $0x38] sm:$0xff]
        %s997 = scalar_lea.vmem [#allocation8], 128
        %v998 = vld [vmem:[%s997] sm:$0xff]
        %v999 = vld [vmem:[%s997 + $0x8] sm:$0xff]
        %v1000 = vld [vmem:[%s997 + $0x10] sm:$0xff]
        %v1001 = vld [vmem:[%s997 + $0x18] sm:$0xff]
        %v1002 = vld [vmem:[%s997 + $0x20] sm:$0xff]
        %v1003 = vld [vmem:[%s997 + $0x28] sm:$0xff]
        %v1004 = vld [vmem:[%s997 + $0x30] sm:$0xff]
        %v1005 = vld [vmem:[%s997 + $0x38] sm:$0xff]
        %v1006 = vld [vmem:[%s997 + $0x40] sm:$0xff]
        %v1007 = vld [vmem:[%s997 + $0x48] sm:$0xff]
        %v1008 = vld [vmem:[%s997 + $0x50] sm:$0xff]
        %v1009 = vld [vmem:[%s997 + $0x58] sm:$0xff]
        %v1010 = vld [vmem:[%s997 + $0x60] sm:$0xff]
        %v1011 = vld [vmem:[%s997 + $0x68] sm:$0xff]
        %v1012 = vld [vmem:[%s997 + $0x70] sm:$0xff]
        %v1013 = vld [vmem:[%s997 + $0x78] sm:$0xff]
        %1014 = vmatprep.subr.mxu0 0.0
        %1015 = vmatpush1.msra.mxu0 %v998
        %1016 = vmatprep.subr.mxu0 0.0
        %1017 = vmatpush1.msra.mxu0 %v999
        %1018 = vmatprep.subr.mxu0 0.0
        %1019 = vmatpush1.msra.mxu0 %v1000
        %1020 = vmatprep.subr.mxu0 0.0
        %1021 = vmatpush1.msra.mxu0 %v1001
        %1022 = vmatprep.subr.mxu0 0.0
        %1023 = vmatpush1.msra.mxu0 %v1002
        %1024 = vmatprep.subr.mxu0 0.0
        %1025 = vmatpush1.msra.mxu0 %v1003
        %1026 = vmatprep.subr.mxu0 0.0
        %1027 = vmatpush1.msra.mxu0 %v1004
        %1028 = vmatprep.subr.mxu0 0.0
        %1029 = vmatpush1.msra.mxu0 %v1005
        %1030 = vmatprep.subr.mxu0 0.0
        %1031 = vmatpush1.msra.mxu0 %v1006
        %1032 = vmatprep.subr.mxu0 0.0
        %1033 = vmatpush1.msra.mxu0 %v1007
        %1034 = vmatprep.subr.mxu0 0.0
        %1035 = vmatpush1.msra.mxu0 %v1008
        %1036 = vmatprep.subr.mxu0 0.0
        %1037 = vmatpush1.msra.mxu0 %v1009
        %1038 = vmatprep.subr.mxu0 0.0
        %1039 = vmatpush1.msra.mxu0 %v1010
        %1040 = vmatprep.subr.mxu0 0.0
        %1041 = vmatpush1.msra.mxu0 %v1011
        %1042 = vmatprep.subr.mxu0 0.0
        %1043 = vmatpush1.msra.mxu0 %v1012
        %1044 = vmatprep.subr.mxu0 0.0
        %1045 = vmatpush1.msra.mxu0 %v1013
        %1046 = vmatprep.subr.mxu0 0.0
        %1047 = vmatpush1.msra.mxu0 0.0
        %1048 = vmatprep.subr.mxu0 0.0
        %1049 = vmatpush1.msra.mxu0 0.0
        %1050 = vmatprep.subr.mxu0 0.0
        %1051 = vmatpush1.msra.mxu0 0.0
        %1052 = vmatprep.subr.mxu0 0.0
        %1053 = vmatpush1.msra.mxu0 0.0
        %1054 = vmatprep.subr.mxu0 0.0
        %1055 = vmatpush1.msra.mxu0 0.0
        %1056 = vmatprep.subr.mxu0 0.0
        %1057 = vmatpush1.msra.mxu0 0.0
        %1058 = vmatprep.subr.mxu0 0.0
        %1059 = vmatpush1.msra.mxu0 0.0
        %1060 = vmatprep.subr.mxu0 0.0
        %1061 = vmatpush1.msra.mxu0 0.0
        %1062 = vmatprep.subr.mxu0 0.0
        %1063 = vmatpush1.msra.mxu0 0.0
        %1064 = vmatprep.subr.mxu0 0.0
        %1065 = vmatpush1.msra.mxu0 0.0
        %1066 = vmatprep.subr.mxu0 0.0
        %1067 = vmatpush1.msra.mxu0 0.0
        %1068 = vmatprep.subr.mxu0 0.0
        %1069 = vmatpush1.msra.mxu0 0.0
        %1070 = vmatprep.subr.mxu0 0.0
        %1071 = vmatpush1.msra.mxu0 0.0
        %1072 = vmatprep.subr.mxu0 0.0
        %1073 = vmatpush1.msra.mxu0 0.0
        %1074 = vmatprep.subr.mxu0 0.0
        %1075 = vmatpush1.msra.mxu0 0.0
        %1076 = vmatprep.subr.mxu0 0.0
        %1077 = vmatpush1.msra.mxu0 0.0
        %1078 = vmatprep.mubr.f32.mxu0 0.0
        %1079 = vmatmul.mubr.f32.gmra.mrb[0].mxu0 %v991
        %v1080 = vpop.f32.mrb[0].mxu0
        %v1081 = vadd.f32 0.0, %v1080
        %v1082 = vpop.f32.mrb[0].mxu0
        %1083 = vmatprep.mubr.f32.mxu0 0.0
        %1084 = vmatmul.mubr.f32.gmra.mrb[0].mxu0 %v992
        %v1085 = vpop.f32.mrb[0].mxu0
        %v1086 = vadd.f32 0.0, %v1085
        %v1087 = vpop.f32.mrb[0].mxu0
        %1088 = vmatprep.mubr.f32.mxu0 0.0
        %1089 = vmatmul.mubr.f32.gmra.mrb[0].mxu0 %v993
        %v1090 = vpop.f32.mrb[0].mxu0
        %v1091 = vpop.f32.mrb[0].mxu0
        %1092 = vmatprep.mubr.f32.mxu0 0.0
        %1093 = vmatmul.mubr.f32.gmra.mrb[0].mxu0 %v994
        %v1094 = vpop.f32.mrb[0].mxu0
        %v1095 = vpop.f32.mrb[0].mxu0
        %1096 = vmatprep.mubr.f32.mxu0 0.0
        %1097 = vmatmul.mubr.f32.gmra.mrb[0].mxu0 %v995
        %v1098 = vpop.f32.mrb[0].mxu0
        %v1099 = vadd.f32 0.0, %v1098
        %v1100 = vpop.f32.mrb[0].mxu0
        %1101 = vmatprep.mubr.f32.mxu0 0.0
        %1102 = vmatmul.mubr.f32.gmra.mrb[0].mxu0 %v996
        %v1103 = vpop.f32.mrb[0].mxu0
        %v1104 = vadd.f32 0.0, %v1103
        %v1105 = vpop.f32.mrb[0].mxu0
        %1106 = vdwg.mxu0
        %1107 = vmatprep.subr.mxu0 0.0
        %1108 = vmatpush1.msra.mxu0 %v975
        %1109 = vmatprep.subr.mxu0 0.0
        %1110 = vmatpush1.msra.mxu0 %v976
        %1111 = vmatprep.subr.mxu0 0.0
        %1112 = vmatpush1.msra.mxu0 %v977
        %1113 = vmatprep.subr.mxu0 0.0
        %1114 = vmatpush1.msra.mxu0 %v978
        %1115 = vmatprep.subr.mxu0 0.0
        %1116 = vmatpush1.msra.mxu0 %v979
        %1117 = vmatprep.subr.mxu0 0.0
        %1118 = vmatpush1.msra.mxu0 %v980
        %1119 = vmatprep.subr.mxu0 0.0
        %1120 = vmatpush1.msra.mxu0 %v981
        %1121 = vmatprep.subr.mxu0 0.0
        %1122 = vmatpush1.msra.mxu0 %v982
        %1123 = vmatprep.subr.mxu0 0.0
        %1124 = vmatpush1.msra.mxu0 %v983
        %1125 = vmatprep.subr.mxu0 0.0
        %1126 = vmatpush1.msra.mxu0 %v984
        %1127 = vmatprep.subr.mxu0 0.0
        %1128 = vmatpush1.msra.mxu0 %v985
        %1129 = vmatprep.subr.mxu0 0.0
        %1130 = vmatpush1.msra.mxu0 %v986
        %1131 = vmatprep.subr.mxu0 0.0
        %1132 = vmatpush1.msra.mxu0 %v987
        %1133 = vmatprep.subr.mxu0 0.0
        %1134 = vmatpush1.msra.mxu0 %v988
        %1135 = vmatprep.subr.mxu0 0.0
        %1136 = vmatpush1.msra.mxu0 %v989
        %1137 = vmatprep.subr.mxu0 0.0
        %1138 = vmatpush1.msra.mxu0 %v990
        %1139 = vmatprep.subr.mxu0 0.0
        %1140 = vmatpush1.msra.mxu0 0.0
        %1141 = vmatprep.subr.mxu0 0.0
        %1142 = vmatpush1.msra.mxu0 0.0
        %1143 = vmatprep.subr.mxu0 0.0
        %1144 = vmatpush1.msra.mxu0 0.0
        %1145 = vmatprep.subr.mxu0 0.0
        %1146 = vmatpush1.msra.mxu0 0.0
        %1147 = vmatprep.subr.mxu0 0.0
        %1148 = vmatpush1.msra.mxu0 0.0
        %1149 = vmatprep.subr.mxu0 0.0
        %1150 = vmatpush1.msra.mxu0 0.0
        %1151 = vmatprep.subr.mxu0 0.0
        %1152 = vmatpush1.msra.mxu0 0.0
        %1153 = vmatprep.subr.mxu0 0.0
        %1154 = vmatpush1.msra.mxu0 0.0
        %1155 = vmatprep.subr.mxu0 0.0
        %1156 = vmatpush1.msra.mxu0 0.0
        %1157 = vmatprep.subr.mxu0 0.0
        %1158 = vmatpush1.msra.mxu0 0.0
        %1159 = vmatprep.subr.mxu0 0.0
        %1160 = vmatpush1.msra.mxu0 0.0
        %1161 = vmatprep.subr.mxu0 0.0
        %1162 = vmatpush1.msra.mxu0 0.0
        %1163 = vmatprep.subr.mxu0 0.0
        %1164 = vmatpush1.msra.mxu0 0.0
        %1165 = vmatprep.subr.mxu0 0.0
        %1166 = vmatpush1.msra.mxu0 0.0
        %1167 = vmatprep.subr.mxu0 0.0
        %1168 = vmatpush1.msra.mxu0 0.0
        %1169 = vmatprep.subr.mxu0 0.0
        %1170 = vmatpush1.msra.mxu0 0.0
        %1171 = vmatprep.mubr.f32.mxu0 0.0
        %1172 = vmatmul.mubr.f32.gmra.mrb[0].mxu0 %v969
        %v1173 = vpop.f32.mrb[0].mxu0
        %v1174 = vadd.f32 %v1081, %v1173
        %v1175 = vpop.f32.mrb[0].mxu0
        %1176 = vmatprep.mubr.f32.mxu0 0.0
        %1177 = vmatmul.mubr.f32.gmra.mrb[0].mxu0 %v970
        %v1178 = vpop.f32.mrb[0].mxu0
        %v1179 = vadd.f32 %v1086, %v1178
        %v1180 = vpop.f32.mrb[0].mxu0
        %1181 = vmatprep.mubr.f32.mxu0 0.0
        %1182 = vmatmul.mubr.f32.gmra.mrb[0].mxu0 %v971
        %v1183 = vpop.f32.mrb[0].mxu0
        %v1184 = vpop.f32.mrb[0].mxu0
        %1185 = vmatprep.mubr.f32.mxu0 0.0
        %1186 = vmatmul.mubr.f32.gmra.mrb[0].mxu0 %v972
        %v1187 = vpop.f32.mrb[0].mxu0
        %v1188 = vpop.f32.mrb[0].mxu0
        %1189 = vmatprep.mubr.f32.mxu0 0.0
        %1190 = vmatmul.mubr.f32.gmra.mrb[0].mxu0 %v973
        %v1191 = vpop.f32.mrb[0].mxu0
        %v1192 = vadd.f32 %v1099, %v1191
        %v1193 = vpop.f32.mrb[0].mxu0
        %1194 = vmatprep.mubr.f32.mxu0 0.0
        %1195 = vmatmul.mubr.f32.gmra.mrb[0].mxu0 %v974
        %v1196 = vpop.f32.mrb[0].mxu0
        %v1197 = vadd.f32 %v1104, %v1196
        %v1198 = vpop.f32.mrb[0].mxu0
        %1199 = vdwg.mxu0
        %v1200 = vld [vmem:[#allocation2 + $0x11] sm:$0xff]
        %v1201 = vld [vmem:[#allocation2 + $0x19] sm:$0xff]
        %v1202 = vld [vmem:[#allocation2 + $0x21] sm:$0xff]
        %v1203 = vld [vmem:[#allocation2 + $0x29] sm:$0xff]
        %v1204 = vld [vmem:[#allocation2 + $0x31] sm:$0xff]
        %v1205 = vld [vmem:[#allocation2 + $0x39] sm:$0xff]
        %s1206 = scalar_lea.vmem [#allocation8], 256
        %v1207 = vld [vmem:[%s1206] sm:$0xff]
        %v1208 = vld [vmem:[%s1206 + $0x8] sm:$0xff]
        %v1209 = vld [vmem:[%s1206 + $0x10] sm:$0xff]
        %v1210 = vld [vmem:[%s1206 + $0x18] sm:$0xff]
        %v1211 = vld [vmem:[%s1206 + $0x20] sm:$0xff]
        %v1212 = vld [vmem:[%s1206 + $0x28] sm:$0xff]
        %v1213 = vld [vmem:[%s1206 + $0x30] sm:$0xff]
        %v1214 = vld [vmem:[%s1206 + $0x38] sm:$0xff]
        %v1215 = vld [vmem:[%s1206 + $0x40] sm:$0xff]
        %v1216 = vld [vmem:[%s1206 + $0x48] sm:$0xff]
        %v1217 = vld [vmem:[%s1206 + $0x50] sm:$0xff]
        %v1218 = vld [vmem:[%s1206 + $0x58] sm:$0xff]
        %v1219 = vld [vmem:[%s1206 + $0x60] sm:$0xff]
        %v1220 = vld [vmem:[%s1206 + $0x68] sm:$0xff]
        %v1221 = vld [vmem:[%s1206 + $0x70] sm:$0xff]
        %v1222 = vld [vmem:[%s1206 + $0x78] sm:$0xff]
        %1223 = vmatprep.subr.mxu0 0.0
        %1224 = vmatpush1.msra.mxu0 %v1207
        %1225 = vmatprep.subr.mxu0 0.0
        %1226 = vmatpush1.msra.mxu0 %v1208
        %1227 = vmatprep.subr.mxu0 0.0
        %1228 = vmatpush1.msra.mxu0 %v1209
        %1229 = vmatprep.subr.mxu0 0.0
        %1230 = vmatpush1.msra.mxu0 %v1210
        %1231 = vmatprep.subr.mxu0 0.0
        %1232 = vmatpush1.msra.mxu0 %v1211
        %1233 = vmatprep.subr.mxu0 0.0
        %1234 = vmatpush1.msra.mxu0 %v1212
        %1235 = vmatprep.subr.mxu0 0.0
        %1236 = vmatpush1.msra.mxu0 %v1213
        %1237 = vmatprep.subr.mxu0 0.0
        %1238 = vmatpush1.msra.mxu0 %v1214
        %1239 = vmatprep.subr.mxu0 0.0
        %1240 = vmatpush1.msra.mxu0 %v1215
        %1241 = vmatprep.subr.mxu0 0.0
        %1242 = vmatpush1.msra.mxu0 %v1216
        %1243 = vmatprep.subr.mxu0 0.0
        %1244 = vmatpush1.msra.mxu0 %v1217
        %1245 = vmatprep.subr.mxu0 0.0
        %1246 = vmatpush1.msra.mxu0 %v1218
        %1247 = vmatprep.subr.mxu0 0.0
        %1248 = vmatpush1.msra.mxu0 %v1219
        %1249 = vmatprep.subr.mxu0 0.0
        %1250 = vmatpush1.msra.mxu0 %v1220
        %1251 = vmatprep.subr.mxu0 0.0
        %1252 = vmatpush1.msra.mxu0 %v1221
        %1253 = vmatprep.subr.mxu0 0.0
        %1254 = vmatpush1.msra.mxu0 %v1222
        %1255 = vmatprep.subr.mxu0 0.0
        %1256 = vmatpush1.msra.mxu0 0.0
        %1257 = vmatprep.subr.mxu0 0.0
        %1258 = vmatpush1.msra.mxu0 0.0
        %1259 = vmatprep.subr.mxu0 0.0
        %1260 = vmatpush1.msra.mxu0 0.0
        %1261 = vmatprep.subr.mxu0 0.0
        %1262 = vmatpush1.msra.mxu0 0.0
        %1263 = vmatprep.subr.mxu0 0.0
        %1264 = vmatpush1.msra.mxu0 0.0
        %1265 = vmatprep.subr.mxu0 0.0
        %1266 = vmatpush1.msra.mxu0 0.0
        %1267 = vmatprep.subr.mxu0 0.0
        %1268 = vmatpush1.msra.mxu0 0.0
        %1269 = vmatprep.subr.mxu0 0.0
        %1270 = vmatpush1.msra.mxu0 0.0
        %1271 = vmatprep.subr.mxu0 0.0
        %1272 = vmatpush1.msra.mxu0 0.0
        %1273 = vmatprep.subr.mxu0 0.0
        %1274 = vmatpush1.msra.mxu0 0.0
        %1275 = vmatprep.subr.mxu0 0.0
        %1276 = vmatpush1.msra.mxu0 0.0
        %1277 = vmatprep.subr.mxu0 0.0
        %1278 = vmatpush1.msra.mxu0 0.0
        %1279 = vmatprep.subr.mxu0 0.0
        %1280 = vmatpush1.msra.mxu0 0.0
        %1281 = vmatprep.subr.mxu0 0.0
        %1282 = vmatpush1.msra.mxu0 0.0
        %1283 = vmatprep.subr.mxu0 0.0
        %1284 = vmatpush1.msra.mxu0 0.0
        %1285 = vmatprep.subr.mxu0 0.0
        %1286 = vmatpush1.msra.mxu0 0.0
        %1287 = vmatprep.mubr.f32.mxu0 0.0
        %1288 = vmatmul.mubr.f32.gmra.mrb[0].mxu0 %v1200
        %v1289 = vpop.f32.mrb[0].mxu0
        %v1290 = vadd.f32 0.0, %v1289
        %v1291 = vpop.f32.mrb[0].mxu0
        %1292 = vmatprep.mubr.f32.mxu0 0.0
        %1293 = vmatmul.mubr.f32.gmra.mrb[0].mxu0 %v1201
        %v1294 = vpop.f32.mrb[0].mxu0
        %v1295 = vadd.f32 0.0, %v1294
        %v1296 = vpop.f32.mrb[0].mxu0
        %1297 = vmatprep.mubr.f32.mxu0 0.0
        %1298 = vmatmul.mubr.f32.gmra.mrb[0].mxu0 %v1202
        %v1299 = vpop.f32.mrb[0].mxu0
        %v1300 = vpop.f32.mrb[0].mxu0
        %1301 = vmatprep.mubr.f32.mxu0 0.0
        %1302 = vmatmul.mubr.f32.gmra.mrb[0].mxu0 %v1203
        %v1303 = vpop.f32.mrb[0].mxu0
        %v1304 = vpop.f32.mrb[0].mxu0
        %1305 = vmatprep.mubr.f32.mxu0 0.0
        %1306 = vmatmul.mubr.f32.gmra.mrb[0].mxu0 %v1204
        %v1307 = vpop.f32.mrb[0].mxu0
        %v1308 = vadd.f32 0.0, %v1307
        %v1309 = vpop.f32.mrb[0].mxu0
        %1310 = vmatprep.mubr.f32.mxu0 0.0
        %1311 = vmatmul.mubr.f32.gmra.mrb[0].mxu0 %v1205
        %v1312 = vpop.f32.mrb[0].mxu0
        %v1313 = vadd.f32 0.0, %v1312
        %v1314 = vpop.f32.mrb[0].mxu0
        %1315 = vdwg.mxu0
        %v1316 = vadd.f32 %v1174, %v1290
        %v1317 = vadd.f32 %v1179, %v1295
        %v1318 = vadd.f32 %v1192, %v1308
        %v1319 = vadd.f32 %v1197, %v1313
        %v1320 = vld [vmem:[%s4] sm:$0x1]
        %v1322 = vlaneseq
        %v1323 = vshrl.u32 %v1322, 7
        %v1324 = vsub.s32 0, %v1323
        %v1325 = vrot.slane %v1320, %v1324
        %v1327 = vadd.f32 %v1316, %v1325
        %v1328 = vadd.f32 %v1317, %v1325
        %v1329 = vadd.f32 %v1318, %v1325
        %v1330 = vadd.f32 %v1319, %v1325
        %v1331 = vmax.f32 %v1327, 0.0
        %v1332 = vmax.f32 %v1328, 0.0
        %v1333 = vmax.f32 %v1329, 0.0
        %v1334 = vmax.f32 %v1330, 0.0
        %1335 = vst [vmem:[#allocation2 + $0x10] sm:$0xff] %v1331
        %1336 = vst [vmem:[#allocation2 + $0x18] sm:$0xff] %v1332
        %1337 = vst [vmem:[#allocation2 + $0x30] sm:$0xff] %v1333
        %1338 = vst [vmem:[#allocation2 + $0x38] sm:$0xff] %v1334
        %v1339 = vld [vmem:[#allocation2 + $0x10] sm:$0xff]
        %v1340 = vld [vmem:[#allocation2 + $0x18] sm:$0xff]
        %v1341 = vld [vmem:[#allocation2 + $0x20] sm:$0xff]
        %v1342 = vld [vmem:[#allocation2 + $0x28] sm:$0xff]
        %v1343 = vld [vmem:[#allocation2 + $0x30] sm:$0xff]
        %v1344 = vld [vmem:[#allocation2 + $0x38] sm:$0xff]
        %v1345 = vld [vmem:[#allocation9] sm:$0xff]
        %v1346 = vld [vmem:[#allocation9 + $0x8] sm:$0xff]
        %v1347 = vld [vmem:[#allocation9 + $0x10] sm:$0xff]
        %v1348 = vld [vmem:[#allocation9 + $0x18] sm:$0xff]
        %v1349 = vld [vmem:[#allocation9 + $0x20] sm:$0xff]
        %v1350 = vld [vmem:[#allocation9 + $0x28] sm:$0xff]
        %v1351 = vld [vmem:[#allocation9 + $0x30] sm:$0xff]
        %v1352 = vld [vmem:[#allocation9 + $0x38] sm:$0xff]
        %v1353 = vld [vmem:[#allocation9 + $0x40] sm:$0xff]
        %v1354 = vld [vmem:[#allocation9 + $0x48] sm:$0xff]
        %v1355 = vld [vmem:[#allocation9 + $0x50] sm:$0xff]
        %v1356 = vld [vmem:[#allocation9 + $0x58] sm:$0xff]
        %v1357 = vld [vmem:[#allocation9 + $0x60] sm:$0xff]
        %v1358 = vld [vmem:[#allocation9 + $0x68] sm:$0xff]
        %v1359 = vld [vmem:[#allocation9 + $0x70] sm:$0xff]
        %v1360 = vld [vmem:[#allocation9 + $0x78] sm:$0xff]
        %v1361 = vld [vmem:[%s6] sm:$0x1]
        %v1363 = vlaneseq
        %v1364 = vshrl.u32 %v1363, 7
        %v1365 = vsub.s32 0, %v1364
        %v1366 = vrot.slane %v1361, %v1365
        %1368 = vmatprep.subr.mxu0 0.0
        %1369 = vmatpush1.msra.mxu0 %v1345
        %1370 = vmatprep.subr.mxu0 0.0
        %1371 = vmatpush1.msra.mxu0 %v1346
        %1372 = vmatprep.subr.mxu0 0.0
        %1373 = vmatpush1.msra.mxu0 %v1347
        %1374 = vmatprep.subr.mxu0 0.0
        %1375 = vmatpush1.msra.mxu0 %v1348
        %1376 = vmatprep.subr.mxu0 0.0
        %1377 = vmatpush1.msra.mxu0 %v1349
        %1378 = vmatprep.subr.mxu0 0.0
        %1379 = vmatpush1.msra.mxu0 %v1350
        %1380 = vmatprep.subr.mxu0 0.0
        %1381 = vmatpush1.msra.mxu0 %v1351
        %1382 = vmatprep.subr.mxu0 0.0
        %1383 = vmatpush1.msra.mxu0 %v1352
        %1384 = vmatprep.subr.mxu0 0.0
        %1385 = vmatpush1.msra.mxu0 %v1353
        %1386 = vmatprep.subr.mxu0 0.0
        %1387 = vmatpush1.msra.mxu0 %v1354
        %1388 = vmatprep.subr.mxu0 0.0
        %1389 = vmatpush1.msra.mxu0 %v1355
        %1390 = vmatprep.subr.mxu0 0.0
        %1391 = vmatpush1.msra.mxu0 %v1356
        %1392 = vmatprep.subr.mxu0 0.0
        %1393 = vmatpush1.msra.mxu0 %v1357
        %1394 = vmatprep.subr.mxu0 0.0
        %1395 = vmatpush1.msra.mxu0 %v1358
        %1396 = vmatprep.subr.mxu0 0.0
        %1397 = vmatpush1.msra.mxu0 %v1359
        %1398 = vmatprep.subr.mxu0 0.0
        %1399 = vmatpush1.msra.mxu0 %v1360
        %1400 = vmatprep.subr.mxu0 0.0
        %1401 = vmatpush1.msra.mxu0 0.0
        %1402 = vmatprep.subr.mxu0 0.0
        %1403 = vmatpush1.msra.mxu0 0.0
        %1404 = vmatprep.subr.mxu0 0.0
        %1405 = vmatpush1.msra.mxu0 0.0
        %1406 = vmatprep.subr.mxu0 0.0
        %1407 = vmatpush1.msra.mxu0 0.0
        %1408 = vmatprep.subr.mxu0 0.0
        %1409 = vmatpush1.msra.mxu0 0.0
        %1410 = vmatprep.subr.mxu0 0.0
        %1411 = vmatpush1.msra.mxu0 0.0
        %1412 = vmatprep.subr.mxu0 0.0
        %1413 = vmatpush1.msra.mxu0 0.0
        %1414 = vmatprep.subr.mxu0 0.0
        %1415 = vmatpush1.msra.mxu0 0.0
        %1416 = vmatprep.subr.mxu0 0.0
        %1417 = vmatpush1.msra.mxu0 0.0
        %1418 = vmatprep.subr.mxu0 0.0
        %1419 = vmatpush1.msra.mxu0 0.0
        %1420 = vmatprep.subr.mxu0 0.0
        %1421 = vmatpush1.msra.mxu0 0.0
        %1422 = vmatprep.subr.mxu0 0.0
        %1423 = vmatpush1.msra.mxu0 0.0
        %1424 = vmatprep.subr.mxu0 0.0
        %1425 = vmatpush1.msra.mxu0 0.0
        %1426 = vmatprep.subr.mxu0 0.0
        %1427 = vmatpush1.msra.mxu0 0.0
        %1428 = vmatprep.subr.mxu0 0.0
        %1429 = vmatpush1.msra.mxu0 0.0
        %1430 = vmatprep.subr.mxu0 0.0
        %1431 = vmatpush1.msra.mxu0 0.0
        %1432 = vmatprep.mubr.f32.mxu0 0.0
        %1433 = vmatmul.mubr.f32.gmra.mrb[0].mxu0 %v1339
        %v1434 = vpop.f32.mrb[0].mxu0
        %v1435 = vadd.f32 %v1366, %v1434
        %v1436 = vpop.f32.mrb[0].mxu0
        %1437 = vmatprep.mubr.f32.mxu0 0.0
        %1438 = vmatmul.mubr.f32.gmra.mrb[0].mxu0 %v1340
        %v1439 = vpop.f32.mrb[0].mxu0
        %v1440 = vadd.f32 %v1366, %v1439
        %v1441 = vpop.f32.mrb[0].mxu0
        %1442 = vmatprep.mubr.f32.mxu0 0.0
        %1443 = vmatmul.mubr.f32.gmra.mrb[0].mxu0 %v1341
        %v1444 = vpop.f32.mrb[0].mxu0
        %v1445 = vpop.f32.mrb[0].mxu0
        %1446 = vmatprep.mubr.f32.mxu0 0.0
        %1447 = vmatmul.mubr.f32.gmra.mrb[0].mxu0 %v1342
        %v1448 = vpop.f32.mrb[0].mxu0
        %v1449 = vpop.f32.mrb[0].mxu0
        %1450 = vmatprep.mubr.f32.mxu0 0.0
        %1451 = vmatmul.mubr.f32.gmra.mrb[0].mxu0 %v1343
        %v1452 = vpop.f32.mrb[0].mxu0
        %v1453 = vadd.f32 %v1366, %v1452
        %v1454 = vpop.f32.mrb[0].mxu0
        %1455 = vmatprep.mubr.f32.mxu0 0.0
        %1456 = vmatmul.mubr.f32.gmra.mrb[0].mxu0 %v1344
        %v1457 = vpop.f32.mrb[0].mxu0
        %v1458 = vadd.f32 %v1366, %v1457
        %v1459 = vpop.f32.mrb[0].mxu0
        %1460 = vdwg.mxu0
        %1461 = vst [vmem:[%s341] sm:$0xff] %v1435
        %1462 = vst [vmem:[%s341 + $0x8] sm:$0xff] %v1440
        %s1463 = scalar_lea.vmem %s341, 16 [#allocation11]
        %1464 = vst [vmem:[%s1463] sm:$0xff] %v1453
        %1465 = vst [vmem:[%s1463 + $0x8] sm:$0xff] %v1458
        %s1466 = sand.u32 %s186, 1
        %s1467 = scalar_lea.sflag [#allocation5], %s1466
        %s1468 = sand.u32 %s186, 1
        %s1469 = smul.addr %s1468, 32
        %s1470 = scalar_lea.vmem [#allocation11], %s1469
        // Predicated region
        $region65: #{tpu_custom_call.1} parent=47 // pred_check
          %p1471 = pneg %p196
        $region66: #{tpu_custom_call.1} parent=47 // pred_check_branch
          %1473 = sbr.rel (%p1471) target = $region68
        $region67: #{tpu_custom_call.1} parent=47 // pred_region
          %s1474 = smul.u32 2, %s26
          %s1476 = ssub.s32 512, 512
          %1477 = vsyncadd %s1467, %s1476
          %s1478 = smul.addr %s1474, 2
          %s1479 = smul.addr %s1478, 128
          %s1480 = scalar_lea.hbm %s7, %s1479
          %s1481 = sshll.u32 %s1470, 4
          %s1482 = int_to_ptr.vmem [resolvable:$true] %s1481
          %1487 = dma.vmem_to_hbm [thread:$0]  %s1482, 512, %s1480, %s1467, 128, 128, 8
        $region68: #{tpu_custom_call.1} parent=47 // pred_fallthru
          _
      $region48: #{tpu_custom_call.1} parent=5 // pred_fallthru
        _
      %p1488 = scmp.le.s32.totalorder 2, %s21
      // Predicated region
      $region69: #{tpu_custom_call.1} parent=5 // pred_check
        %p1489 = pneg %p1488
      $region70: #{tpu_custom_call.1} parent=5 // pred_check_branch
        %1491 = sbr.rel (%p1489) target = $region72
      $region71: #{tpu_custom_call.1} parent=5 // pred_region
        %s1492 = ssub.s32 %s21, 2
        // Predicated region
        $region73: #{tpu_custom_call.1} parent=71 // pred_check
          %p1493 = pneg %p202
        $region74: #{tpu_custom_call.1} parent=71 // pred_check_branch
          %1495 = sbr.rel (%p1493) target = $region76
        $region75: #{tpu_custom_call.1} parent=71 // pred_region
          %s1496 = sand.u32 %s187, 1
          %s1497 = scalar_lea.sflag [#allocation5], %s1496
          %s1498 = sand.u32 %s187, 1
          %s1499 = smul.addr %s1498, 32
          %s1500 = scalar_lea.vmem [#allocation11], %s1499
          %1501 = dma.done %s1497, 512
        $region76: #{tpu_custom_call.1} parent=71 // pred_fallthru
          _
      $region72: #{tpu_custom_call.1} parent=5 // pred_fallthru
        _
    $region6: #{tpu_custom_call.1} parent=1 // loop_footer
      %s25 = sadd.s32 1, %s21
    $region7: #{tpu_custom_call.1} parent=1 // loop_footer_branch
      %20 = sbr.rel target = $region3
    $region8: #{tpu_custom_call.1} parent=1 // loop_exit
      _
    %1502 = vsyncpa [#allocation4], 1
    %s1503 = scalar_lea.sflag [#allocation4], 1
    %1504 = vsyncpa %s1503, 1
    %1505 = vsyncpa [#allocation7], 1
    %1506 = vsyncpa [#allocation10], 1
    %1507 = vsyncpa [#allocation5], 1
    %s1508 = scalar_lea.sflag [#allocation5], 1
    %1509 = vsyncpa %s1508, 1

</llo_original>
